<compile_context>
chip_gen: v5e
topology: v5e:2x2
jax: 0.10.0
libtpu: 0.0.40
codegen_flags: <defaults>
</compile_context>

<pallas_src>
import functools

import jax
import jax.numpy as jnp
import numpy as np
from jax.experimental import pallas as pl
from jax.experimental.pallas import tpu as pltpu

EPS = 1e-5  # nn.BatchNorm2d default eps


def _pow2_divisor(n, cap):
    """Largest power-of-two divisor of n that is <= cap (>= 1)."""
    t = 1
    while t * 2 <= cap and n % (t * 2) == 0:
        t *= 2
    return t


# --------------------------- conv 3x3 (padding=1, no bias) ------------------


def _conv3x3_kernel(x0_ref, x1_ref, x2_ref, w_ref, o_ref, *, R, W, Cin, Cout):
    # x{dh}_ref: (1, R, W+2, Cin) bf16 -- padded rows (h + dh) for the R output rows.
    rows = (x0_ref[0], x1_ref[0], x2_ref[0])
    taps = [rows[dh][:, dw:dw + W, :] for dh in range(3) for dw in range(3)]
    # 9-tap patch matrix built entirely in VMEM (never written to HBM).
    patches = jnp.concatenate(taps, axis=-1).reshape(R * W, 9 * Cin)
    # bf16 operands on the MXU, f32 accumulation; single K block -> no scratch.
    acc = jnp.dot(patches, w_ref[...], preferred_element_type=jnp.float32)
    o_ref[0] = acc.reshape(R, W, Cout).astype(o_ref.dtype)


def conv3x3(x, w_hwio):
    """x: [N,H,W,Cin] float, w_hwio: [3,3,Cin,Cout]. SAME 3x3 conv -> f32 NHWC."""
    N, H, W, Cin = x.shape
    Cout = w_hwio.shape[-1]
    assert W % 8 == 0 and H % 2 == 0, "expect W % 8 == 0 and H even"

    xb = x.astype(jnp.bfloat16)
    xp = jnp.pad(xb, ((0, 0), (1, 1), (1, 1), (0, 0)))          # [N, H+2, W+2, Cin]
    # Three row-shifted views (thin XLA slices of the padded input) so every
    # (batch, row-block) tile is a plain Blocked window -- no 9xC im2col in HBM.
    x_sh = [xp[:, dh:dh + H, :, :] for dh in range(3)]
    wf = w_hwio.reshape(9 * Cin, Cout).astype(jnp.bfloat16)

    R = _pow2_divisor(H, cap=8)            # rows per tile (M-tile = R*W); tune for VMEM
    grid = (N, H // R)
    kernel = functools.partial(_conv3x3_kernel, R=R, W=W, Cin=Cin, Cout=Cout)
    in_spec_x = pl.BlockSpec((1, R, W + 2, Cin), lambda n, hb: (n, hb, 0, 0))
    return pl.pallas_call(
        kernel,
        out_shape=jax.ShapeDtypeStruct((N, H, W, Cout), jnp.float32),
        grid=grid,
        in_specs=[in_spec_x, in_spec_x, in_spec_x,
                  pl.BlockSpec((9 * Cin, Cout), lambda n, hb: (0, 0))],
        out_specs=pl.BlockSpec((1, R, W, Cout), lambda n, hb: (n, hb, 0, 0)),
        compiler_params=pltpu.CompilerParams(
            dimension_semantics=("parallel", "parallel")),
    )(x_sh[0], x_sh[1], x_sh[2], wf)


# --------------------------- BatchNorm (training stats) + ReLU --------------


def _bn_stats_kernel(x_ref, s_ref):
    @pl.when(pl.program_id(0) == 0)
    def _():
        s_ref[...] = jnp.zeros_like(s_ref)

    x = x_ref[...]
    s_ref[...] += jnp.concatenate(
        [jnp.sum(x, axis=0, keepdims=True),
         jnp.sum(x * x, axis=0, keepdims=True)], axis=0)


def _bn_apply_relu_kernel(x_ref, scale_ref, shift_ref, o_ref):
    y = x_ref[...] * scale_ref[...] + shift_ref[...]
    o_ref[...] = jnp.maximum(y, 0.0).astype(o_ref.dtype)


def bn_relu(x2d, gamma, beta, out_dtype, eps=EPS):
    """Training-mode BatchNorm + ReLU on a [M, C] f32 view; two row-tiled passes."""
    M, C = x2d.shape
    tm = _pow2_divisor(M, cap=256)         # row tile; M % 16 == 0 by construction

    # pass 1: per-channel sum / sum-of-squares, reduction over the M grid axis
    sums = pl.pallas_call(
        _bn_stats_kernel,
        out_shape=jax.ShapeDtypeStruct((2, C), jnp.float32),
        grid=(M // tm,),
        in_specs=[pl.BlockSpec((tm, C), lambda i: (i, 0))],
        out_specs=pl.BlockSpec((2, C), lambda i: (0, 0)),
        compiler_params=pltpu.CompilerParams(dimension_semantics=("arbitrary",)),
    )(x2d)

    mean = sums[0] / M
    var = jnp.maximum(sums[1] / M - mean * mean, 0.0)    # biased (training) variance
    scale = gamma * jax.lax.rsqrt(var + eps)
    shift = beta - mean * scale

    # pass 2: normalise + affine + ReLU; output dtype bf16 when it feeds the next
    # conv, so the cast is fused here.
    return pl.pallas_call(
        _bn_apply_relu_kernel,
        out_shape=jax.ShapeDtypeStruct((M, C), out_dtype),
        grid=(M // tm,),
        in_specs=[pl.BlockSpec((tm, C), lambda i: (i, 0)),
                  pl.BlockSpec((1, C), lambda i: (0, 0)),
                  pl.BlockSpec((1, C), lambda i: (0, 0))],
        out_specs=pl.BlockSpec((tm, C), lambda i: (i, 0)),
        compiler_params=pltpu.CompilerParams(dimension_semantics=("parallel",)),
    )(x2d, scale.reshape(1, C), shift.reshape(1, C))


def conv3x3_bn_relu(x, w, gamma, beta, out_dtype):
    N, H, W, _ = x.shape
    Cout = w.shape[-1]
    y = conv3x3(x, w)                                     # f32 [N,H,W,Cout]
    a = bn_relu(y.reshape(N * H * W, Cout), gamma, beta, out_dtype)
    return a.reshape(N, H, W, Cout)


def maxpool2x2(x):
    # 2x2/stride-2 max pool; pure data shuffle kept as XLA glue.
    # TODO(synk): could be fused into the second BN-apply kernel's epilogue.
    N, H, W, C = x.shape
    return x.reshape(N, H // 2, 2, W // 2, 2, C).max(axis=(2, 4))


# --------------------------- parameters & forward ---------------------------


def init_params(key, in_c, out_c):
    # Conv weights stored in HWIO (PyTorch OIHW -> HWIO is w.permute(2,3,1,0)).
    # Conv biases are omitted on purpose: training-mode BatchNorm subtracts the
    # per-channel batch mean, which cancels a per-channel conv bias exactly.
    k1, k2 = jax.random.split(key)
    s1 = 1.0 / np.sqrt(9 * in_c)
    s2 = 1.0 / np.sqrt(9 * out_c)
    return {
        "w1": jax.random.normal(k1, (3, 3, in_c, out_c), jnp.float32) * s1,
        "g1": jnp.ones((out_c,), jnp.float32),
        "beta1": jnp.zeros((out_c,), jnp.float32),
        "w2": jax.random.normal(k2, (3, 3, out_c, out_c), jnp.float32) * s2,
        "g2": jnp.ones((out_c,), jnp.float32),
        "beta2": jnp.zeros((out_c,), jnp.float32),
    }


def unet_encoder_forward(params, x_nchw):
    """PyTorch UNet_Encoder.forward: returns (x, p); x=[N,C,H,W], p=[N,C,H/2,W/2]."""
    x = jnp.transpose(x_nchw, (0, 2, 3, 1)).astype(jnp.float32)   # NCHW -> NHWC
    # conv1 -> BN1 -> ReLU (bf16 activation feeds conv2's MXU directly)
    h = conv3x3_bn_relu(x, params["w1"], params["g1"], params["beta1"],
                        out_dtype=jnp.bfloat16)
    # conv2 -> BN2 -> ReLU (f32 output to match the PyTorch float return)
    h = conv3x3_bn_relu(h, params["w2"], params["g2"], params["beta2"],
                        out_dtype=jnp.float32)
    p = maxpool2x2(h)
    return (jnp.transpose(h, (0, 3, 1, 2)), jnp.transpose(p, (0, 3, 1, 2)))


# --------------------------- pure-JAX reference (for sanity check) ----------


def _reference_forward(params, x_nchw):
    x = jnp.transpose(x_nchw, (0, 2, 3, 1)).astype(jnp.float32)

    def cbr(h, w, g, b):
        y = jax.lax.conv_general_dilated(
            h, w, window_strides=(1, 1), padding="SAME",
            dimension_numbers=("NHWC", "HWIO", "NHWC"))
        m = jnp.mean(y, axis=(0, 1, 2))
        v = jnp.mean((y - m) ** 2, axis=(0, 1, 2))
        return jnp.maximum((y - m) * jax.lax.rsqrt(v + EPS) * g + b, 0.0)

    h = cbr(x, params["w1"], params["g1"], params["beta1"])
    h = cbr(h, params["w2"], params["g2"], params["beta2"])
    p = maxpool2x2(h)
    return (jnp.transpose(h, (0, 3, 1, 2)), jnp.transpose(p, (0, 3, 1, 2)))


if __name__ == "__main__":
    key = jax.random.PRNGKey(0)
    pkey, xkey = jax.random.split(key)
    in_c, out_c = 4, 64
    N, H, W = 2, 16, 16
    params = init_params(pkey, in_c, out_c)
    x = jax.random.normal(xkey, (N, in_c, H, W), jnp.float32)

    fwd = jax.jit(unet_encoder_forward)
    x_out, p_out = fwd(params, x)
    x_out, p_out = jax.block_until_ready((x_out, p_out))

    assert x_out.shape == (N, out_c, H, W), x_out.shape
    assert p_out.shape == (N, out_c, H // 2, W // 2), p_out.shape
    assert bool(jnp.all(jnp.isfinite(x_out))) and bool(jnp.all(jnp.isfinite(p_out)))
    assert bool(jnp.all(x_out >= 0.0))            # post-ReLU

    # Loose check vs. a pure-JAX f32 reference (kernel runs bf16 on the MXU).
    x_ref, p_ref = _reference_forward(params, x)
    assert float(jnp.max(jnp.abs(x_out - x_ref))) < 0.2
    assert float(jnp.max(jnp.abs(p_out - p_ref))) < 0.2

    print("KERNEL_OK")
</pallas_src>

<mosaic_0001>
module attributes {stable_mosaic.version = 11 : i64} {
  func.func @_conv3x3_kernel(%arg0: i32, %arg1: i32, %arg2: memref<1x8x18x4xbf16, #tpu.memory_space<vmem>>, %arg3: memref<1x8x18x4xbf16, #tpu.memory_space<vmem>>, %arg4: memref<1x8x18x4xbf16, #tpu.memory_space<vmem>>, %arg5: memref<36x64xbf16, #tpu.memory_space<vmem>>, %arg6: memref<1x8x16x64xf32, #tpu.memory_space<vmem>>) attributes {dimension_semantics = [#tpu.dimension_semantics<parallel>, #tpu.dimension_semantics<parallel>], iteration_bounds = array<i64: 2, 2>, scalar_prefetch = 0 : i64, scratch_operands = 0 : i64, tpu.core_type = #tpu.core_type<tc>, window_params = [{transform_indices = @transform_0, window_bounds = array<i64: 1, 8, 18, 4>}, {transform_indices = @transform_1, window_bounds = array<i64: 1, 8, 18, 4>}, {transform_indices = @transform_2, window_bounds = array<i64: 1, 8, 18, 4>}, {pipeline_mode = #tpu.pipeline_mode<synchronous>, transform_indices = @transform_3, window_bounds = array<i64: 36, 64>}, {transform_indices = @transform_4, window_bounds = array<i64: 1, 8, 16, 64>}]} {
    %c0 = arith.constant 0 : index
    %c0_0 = arith.constant 0 : index
    %c0_1 = arith.constant 0 : index
    %c0_2 = arith.constant 0 : index
    %0 = vector.load %arg2[%c0, %c0_0, %c0_1, %c0_2] : memref<1x8x18x4xbf16, #tpu.memory_space<vmem>>, vector<1x8x18x4xbf16>
    %1 = vector.shape_cast %0 : vector<1x8x18x4xbf16> to vector<8x18x4xbf16>
    %c0_3 = arith.constant 0 : index
    %c0_4 = arith.constant 0 : index
    %c0_5 = arith.constant 0 : index
    %c0_6 = arith.constant 0 : index
    %2 = vector.load %arg3[%c0_3, %c0_4, %c0_5, %c0_6] : memref<1x8x18x4xbf16, #tpu.memory_space<vmem>>, vector<1x8x18x4xbf16>
    %3 = vector.shape_cast %2 : vector<1x8x18x4xbf16> to vector<8x18x4xbf16>
    %c0_7 = arith.constant 0 : index
    %c0_8 = arith.constant 0 : index
    %c0_9 = arith.constant 0 : index
    %c0_10 = arith.constant 0 : index
    %4 = vector.load %arg4[%c0_7, %c0_8, %c0_9, %c0_10] : memref<1x8x18x4xbf16, #tpu.memory_space<vmem>>, vector<1x8x18x4xbf16>
    %5 = vector.shape_cast %4 : vector<1x8x18x4xbf16> to vector<8x18x4xbf16>
    %6 = vector.extract_strided_slice %1 {offsets = [0, 0, 0], sizes = [8, 16, 4], strides = [1, 1, 1]} : vector<8x18x4xbf16> to vector<8x16x4xbf16>
    %7 = vector.extract_strided_slice %1 {offsets = [0, 1, 0], sizes = [8, 16, 4], strides = [1, 1, 1]} : vector<8x18x4xbf16> to vector<8x16x4xbf16>
    %8 = vector.extract_strided_slice %1 {offsets = [0, 2, 0], sizes = [8, 16, 4], strides = [1, 1, 1]} : vector<8x18x4xbf16> to vector<8x16x4xbf16>
    %9 = vector.extract_strided_slice %3 {offsets = [0, 0, 0], sizes = [8, 16, 4], strides = [1, 1, 1]} : vector<8x18x4xbf16> to vector<8x16x4xbf16>
    %10 = vector.extract_strided_slice %3 {offsets = [0, 1, 0], sizes = [8, 16, 4], strides = [1, 1, 1]} : vector<8x18x4xbf16> to vector<8x16x4xbf16>
    %11 = vector.extract_strided_slice %3 {offsets = [0, 2, 0], sizes = [8, 16, 4], strides = [1, 1, 1]} : vector<8x18x4xbf16> to vector<8x16x4xbf16>
    %12 = vector.extract_strided_slice %5 {offsets = [0, 0, 0], sizes = [8, 16, 4], strides = [1, 1, 1]} : vector<8x18x4xbf16> to vector<8x16x4xbf16>
    %13 = vector.extract_strided_slice %5 {offsets = [0, 1, 0], sizes = [8, 16, 4], strides = [1, 1, 1]} : vector<8x18x4xbf16> to vector<8x16x4xbf16>
    %14 = vector.extract_strided_slice %5 {offsets = [0, 2, 0], sizes = [8, 16, 4], strides = [1, 1, 1]} : vector<8x18x4xbf16> to vector<8x16x4xbf16>
    %15 = tpu.concatenate %6, %7, %8, %9, %10, %11, %12, %13, %14 in 2 : vector<8x16x4xbf16>, vector<8x16x4xbf16>, vector<8x16x4xbf16>, vector<8x16x4xbf16>, vector<8x16x4xbf16>, vector<8x16x4xbf16>, vector<8x16x4xbf16>, vector<8x16x4xbf16>, vector<8x16x4xbf16> -> vector<8x16x36xbf16>
    %16 = vector.shape_cast %15 : vector<8x16x36xbf16> to vector<128x36xbf16>
    %c0_11 = arith.constant 0 : index
    %c0_12 = arith.constant 0 : index
    %17 = vector.load %arg5[%c0_11, %c0_12] : memref<36x64xbf16, #tpu.memory_space<vmem>>, vector<36x64xbf16>
    %cst = arith.constant dense<0.000000e+00> : vector<128x64xf32>
    %18 = tpu.matmul %16, %17, %cst {dimension_numbers = #tpu.dot_dimension_numbers<[1], [0], [0], [1], [0, 0, 1, 1], [], []>} : vector<128x36xbf16>, vector<36x64xbf16>, vector<128x64xf32> -> vector<128x64xf32>
    %19 = vector.shape_cast %18 : vector<128x64xf32> to vector<8x16x64xf32>
    %c0_13 = arith.constant 0 : index
    %c0_14 = arith.constant 0 : index
    %c0_15 = arith.constant 0 : index
    %c0_16 = arith.constant 0 : index
    %20 = vector.load %arg6[%c0_13, %c0_14, %c0_15, %c0_16] : memref<1x8x16x64xf32, #tpu.memory_space<vmem>>, vector<1x8x16x64xf32>
    %21 = vector.shape_cast %20 : vector<1x8x16x64xf32> to vector<8x16x64xf32>
    %22 = vector.shape_cast %19 : vector<8x16x64xf32> to vector<1x8x16x64xf32>
    tpu.vector_store %arg6[%c0_13, %c0_14, %c0_15, %c0_16], %22 {strides = array<i32>} : memref<1x8x16x64xf32, #tpu.memory_space<vmem>>, vector<1x8x16x64xf32>,
    return
  }
  func.func @transform_0(%arg0: i32, %arg1: i32) -> (i32, i32, i32, i32) {
    %c0_i32 = arith.constant 0 : i32
    %c0_i32_0 = arith.constant 0 : i32
    %c0_i32_1 = arith.constant 0 : i32
    return %arg0, %arg1, %c0_i32, %c0_i32_0 : i32, i32, i32, i32
  }
  func.func @transform_1(%arg0: i32, %arg1: i32) -> (i32, i32, i32, i32) {
    %c0_i32 = arith.constant 0 : i32
    %c0_i32_0 = arith.constant 0 : i32
    %c0_i32_1 = arith.constant 0 : i32
    return %arg0, %arg1, %c0_i32, %c0_i32_0 : i32, i32, i32, i32
  }
  func.func @transform_2(%arg0: i32, %arg1: i32) -> (i32, i32, i32, i32) {
    %c0_i32 = arith.constant 0 : i32
    %c0_i32_0 = arith.constant 0 : i32
    %c0_i32_1 = arith.constant 0 : i32
    return %arg0, %arg1, %c0_i32, %c0_i32_0 : i32, i32, i32, i32
  }
  func.func @transform_3(%arg0: i32, %arg1: i32) -> (i32, i32) {
    %c0_i32 = arith.constant 0 : i32
    %c0_i32_0 = arith.constant 0 : i32
    %c0_i32_1 = arith.constant 0 : i32
    return %c0_i32, %c0_i32_0 : i32, i32
  }
  func.func @transform_4(%arg0: i32, %arg1: i32) -> (i32, i32, i32, i32) {
    %c0_i32 = arith.constant 0 : i32
    %c0_i32_0 = arith.constant 0 : i32
    %c0_i32_1 = arith.constant 0 : i32
    return %arg0, %arg1, %c0_i32, %c0_i32_0 : i32, i32, i32, i32
  }
}

module attributes {stable_mosaic.version = 11 : i64} {
  func.func @_bn_stats_kernel(%arg0: i32, %arg1: memref<256x64xf32, #tpu.memory_space<vmem>>, %arg2: memref<2x64xf32, #tpu.memory_space<vmem>>) attributes {dimension_semantics = [#tpu.dimension_semantics<arbitrary>], iteration_bounds = array<i64: 2>, scalar_prefetch = 0 : i64, scratch_operands = 0 : i64, tpu.core_type = #tpu.core_type<tc>, window_params = [{transform_indices = @transform_0, window_bounds = array<i64: 256, 64>}, {pipeline_mode = #tpu.pipeline_mode<synchronous>, transform_indices = @transform_1, window_bounds = array<i64: 2, 64>}]} {
    %c0_i32 = arith.constant 0 : i32
    %0 = arith.cmpi eq, %arg0, %c0_i32 : i32
    %1 = arith.extui %0 : i1 to i32
    %c0_i32_0 = arith.constant 0 : i32
    %2 = arith.cmpi ne, %1, %c0_i32_0 : i32
    scf.if %2 {
      %cst_7 = arith.constant 0.000000e+00 : f32
      %13 = vector.broadcast %cst_7 : f32 to vector<2x64xf32>
      %c0_8 = arith.constant 0 : index
      %c0_9 = arith.constant 0 : index
      %14 = vector.load %arg2[%c0_8, %c0_9] : memref<2x64xf32, #tpu.memory_space<vmem>>, vector<2x64xf32>
      tpu.vector_store %arg2[%c0_8, %c0_9], %13 {strides = array<i32>} : memref<2x64xf32, #tpu.memory_space<vmem>>, vector<2x64xf32>,
    } else {
    }
    %c0 = arith.constant 0 : index
    %c0_1 = arith.constant 0 : index
    %3 = vector.load %arg1[%c0, %c0_1] : memref<256x64xf32, #tpu.memory_space<vmem>>, vector<256x64xf32>
    %c0_2 = arith.constant 0 : index
    %c0_3 = arith.constant 0 : index
    %4 = vector.load %arg2[%c0_2, %c0_3] : memref<2x64xf32, #tpu.memory_space<vmem>>, vector<2x64xf32>
    %cst = arith.constant dense<0.000000e+00> : vector<64xf32>
    %5 = vector.multi_reduction <add>, %3, %cst [0] : vector<256x64xf32> to vector<64xf32>
    %6 = vector.shape_cast %5 : vector<64xf32> to vector<1x64xf32>
    %7 = arith.mulf %3, %3 : vector<256x64xf32>
    %cst_4 = arith.constant dense<0.000000e+00> : vector<64xf32>
    %8 = vector.multi_reduction <add>, %7, %cst_4 [0] : vector<256x64xf32> to vector<64xf32>
    %9 = vector.shape_cast %8 : vector<64xf32> to vector<1x64xf32>
    %10 = tpu.concatenate %6, %9 in 0 : vector<1x64xf32>, vector<1x64xf32> -> vector<2x64xf32>
    %11 = arith.addf %4, %10 : vector<2x64xf32>
    %c0_5 = arith.constant 0 : index
    %c0_6 = arith.constant 0 : index
    %12 = vector.load %arg2[%c0_5, %c0_6] : memref<2x64xf32, #tpu.memory_space<vmem>>, vector<2x64xf32>
    tpu.vector_store %arg2[%c0_5, %c0_6], %11 {strides = array<i32>} : memref<2x64xf32, #tpu.memory_space<vmem>>, vector<2x64xf32>,
    return
  }
  func.func @transform_0(%arg0: i32) -> (i32, i32) {
    %c0_i32 = arith.constant 0 : i32
    %c0_i32_0 = arith.constant 0 : i32
    return %arg0, %c0_i32 : i32, i32
  }
  func.func @transform_1(%arg0: i32) -> (i32, i32) {
    %c0_i32 = arith.constant 0 : i32
    %c0_i32_0 = arith.constant 0 : i32
    %c0_i32_1 = arith.constant 0 : i32
    return %c0_i32, %c0_i32_0 : i32, i32
  }
}

module attributes {stable_mosaic.version = 11 : i64} {
  func.func @_bn_apply_relu_kernel(%arg0: i32, %arg1: memref<256x64xf32, #tpu.memory_space<vmem>>, %arg2: memref<1x64xf32, #tpu.memory_space<vmem>>, %arg3: memref<1x64xf32, #tpu.memory_space<vmem>>, %arg4: memref<256x64xbf16, #tpu.memory_space<vmem>>) attributes {dimension_semantics = [#tpu.dimension_semantics<parallel>], iteration_bounds = array<i64: 2>, scalar_prefetch = 0 : i64, scratch_operands = 0 : i64, tpu.core_type = #tpu.core_type<tc>, window_params = [{transform_indices = @transform_0, window_bounds = array<i64: 256, 64>}, {pipeline_mode = #tpu.pipeline_mode<synchronous>, transform_indices = @transform_1, window_bounds = array<i64: 1, 64>}, {pipeline_mode = #tpu.pipeline_mode<synchronous>, transform_indices = @transform_2, window_bounds = array<i64: 1, 64>}, {transform_indices = @transform_3, window_bounds = array<i64: 256, 64>}]} {
    %c0 = arith.constant 0 : index
    %c0_0 = arith.constant 0 : index
    %0 = vector.load %arg1[%c0, %c0_0] : memref<256x64xf32, #tpu.memory_space<vmem>>, vector<256x64xf32>
    %c0_1 = arith.constant 0 : index
    %c0_2 = arith.constant 0 : index
    %1 = vector.load %arg2[%c0_1, %c0_2] : memref<1x64xf32, #tpu.memory_space<vmem>>, vector<1x64xf32>
    %2 = vector.broadcast %1 : vector<1x64xf32> to vector<256x64xf32>
    %3 = arith.mulf %0, %2 : vector<256x64xf32>
    %c0_3 = arith.constant 0 : index
    %c0_4 = arith.constant 0 : index
    %4 = vector.load %arg3[%c0_3, %c0_4] : memref<1x64xf32, #tpu.memory_space<vmem>>, vector<1x64xf32>
    %5 = vector.broadcast %4 : vector<1x64xf32> to vector<256x64xf32>
    %6 = arith.addf %3, %5 : vector<256x64xf32>
    %cst = arith.constant 0.000000e+00 : f32
    %7 = vector.broadcast %cst : f32 to vector<256x64xf32>
    %8 = arith.maximumf %6, %7 : vector<256x64xf32>
    %9 = arith.truncf %8 : vector<256x64xf32> to vector<256x64xbf16>
    %c0_5 = arith.constant 0 : index
    %c0_6 = arith.constant 0 : index
    %10 = vector.load %arg4[%c0_5, %c0_6] : memref<256x64xbf16, #tpu.memory_space<vmem>>, vector<256x64xbf16>
    tpu.vector_store %arg4[%c0_5, %c0_6], %9 {strides = array<i32>} : memref<256x64xbf16, #tpu.memory_space<vmem>>, vector<256x64xbf16>,
    return
  }
  func.func @transform_0(%arg0: i32) -> (i32, i32) {
    %c0_i32 = arith.constant 0 : i32
    %c0_i32_0 = arith.constant 0 : i32
    return %arg0, %c0_i32 : i32, i32
  }
  func.func @transform_1(%arg0: i32) -> (i32, i32) {
    %c0_i32 = arith.constant 0 : i32
    %c0_i32_0 = arith.constant 0 : i32
    %c0_i32_1 = arith.constant 0 : i32
    return %c0_i32, %c0_i32_0 : i32, i32
  }
  func.func @transform_2(%arg0: i32) -> (i32, i32) {
    %c0_i32 = arith.constant 0 : i32
    %c0_i32_0 = arith.constant 0 : i32
    %c0_i32_1 = arith.constant 0 : i32
    return %c0_i32, %c0_i32_0 : i32, i32
  }
  func.func @transform_3(%arg0: i32) -> (i32, i32) {
    %c0_i32 = arith.constant 0 : i32
    %c0_i32_0 = arith.constant 0 : i32
    return %arg0, %c0_i32 : i32, i32
  }
}

module attributes {stable_mosaic.version = 11 : i64} {
  func.func @_conv3x3_kernel(%arg0: i32, %arg1: i32, %arg2: memref<1x8x18x64xbf16, #tpu.memory_space<vmem>>, %arg3: memref<1x8x18x64xbf16, #tpu.memory_space<vmem>>, %arg4: memref<1x8x18x64xbf16, #tpu.memory_space<vmem>>, %arg5: memref<576x64xbf16, #tpu.memory_space<vmem>>, %arg6: memref<1x8x16x64xf32, #tpu.memory_space<vmem>>) attributes {dimension_semantics = [#tpu.dimension_semantics<parallel>, #tpu.dimension_semantics<parallel>], iteration_bounds = array<i64: 2, 2>, scalar_prefetch = 0 : i64, scratch_operands = 0 : i64, tpu.core_type = #tpu.core_type<tc>, window_params = [{transform_indices = @transform_0, window_bounds = array<i64: 1, 8, 18, 64>}, {transform_indices = @transform_1, window_bounds = array<i64: 1, 8, 18, 64>}, {transform_indices = @transform_2, window_bounds = array<i64: 1, 8, 18, 64>}, {pipeline_mode = #tpu.pipeline_mode<synchronous>, transform_indices = @transform_3, window_bounds = array<i64: 576, 64>}, {transform_indices = @transform_4, window_bounds = array<i64: 1, 8, 16, 64>}]} {
    %c0 = arith.constant 0 : index
    %c0_0 = arith.constant 0 : index
    %c0_1 = arith.constant 0 : index
    %c0_2 = arith.constant 0 : index
    %0 = vector.load %arg2[%c0, %c0_0, %c0_1, %c0_2] : memref<1x8x18x64xbf16, #tpu.memory_space<vmem>>, vector<1x8x18x64xbf16>
    %1 = vector.shape_cast %0 : vector<1x8x18x64xbf16> to vector<8x18x64xbf16>
    %c0_3 = arith.constant 0 : index
    %c0_4 = arith.constant 0 : index
    %c0_5 = arith.constant 0 : index
    %c0_6 = arith.constant 0 : index
    %2 = vector.load %arg3[%c0_3, %c0_4, %c0_5, %c0_6] : memref<1x8x18x64xbf16, #tpu.memory_space<vmem>>, vector<1x8x18x64xbf16>
    %3 = vector.shape_cast %2 : vector<1x8x18x64xbf16> to vector<8x18x64xbf16>
    %c0_7 = arith.constant 0 : index
    %c0_8 = arith.constant 0 : index
    %c0_9 = arith.constant 0 : index
    %c0_10 = arith.constant 0 : index
    %4 = vector.load %arg4[%c0_7, %c0_8, %c0_9, %c0_10] : memref<1x8x18x64xbf16, #tpu.memory_space<vmem>>, vector<1x8x18x64xbf16>
    %5 = vector.shape_cast %4 : vector<1x8x18x64xbf16> to vector<8x18x64xbf16>
    %6 = vector.extract_strided_slice %1 {offsets = [0, 0, 0], sizes = [8, 16, 64], strides = [1, 1, 1]} : vector<8x18x64xbf16> to vector<8x16x64xbf16>
    %7 = vector.extract_strided_slice %1 {offsets = [0, 1, 0], sizes = [8, 16, 64], strides = [1, 1, 1]} : vector<8x18x64xbf16> to vector<8x16x64xbf16>
    %8 = vector.extract_strided_slice %1 {offsets = [0, 2, 0], sizes = [8, 16, 64], strides = [1, 1, 1]} : vector<8x18x64xbf16> to vector<8x16x64xbf16>
    %9 = vector.extract_strided_slice %3 {offsets = [0, 0, 0], sizes = [8, 16, 64], strides = [1, 1, 1]} : vector<8x18x64xbf16> to vector<8x16x64xbf16>
    %10 = vector.extract_strided_slice %3 {offsets = [0, 1, 0], sizes = [8, 16, 64], strides = [1, 1, 1]} : vector<8x18x64xbf16> to vector<8x16x64xbf16>
    %11 = vector.extract_strided_slice %3 {offsets = [0, 2, 0], sizes = [8, 16, 64], strides = [1, 1, 1]} : vector<8x18x64xbf16> to vector<8x16x64xbf16>
    %12 = vector.extract_strided_slice %5 {offsets = [0, 0, 0], sizes = [8, 16, 64], strides = [1, 1, 1]} : vector<8x18x64xbf16> to vector<8x16x64xbf16>
    %13 = vector.extract_strided_slice %5 {offsets = [0, 1, 0], sizes = [8, 16, 64], strides = [1, 1, 1]} : vector<8x18x64xbf16> to vector<8x16x64xbf16>
    %14 = vector.extract_strided_slice %5 {offsets = [0, 2, 0], sizes = [8, 16, 64], strides = [1, 1, 1]} : vector<8x18x64xbf16> to vector<8x16x64xbf16>
    %15 = tpu.concatenate %6, %7, %8, %9, %10, %11, %12, %13, %14 in 2 : vector<8x16x64xbf16>, vector<8x16x64xbf16>, vector<8x16x64xbf16>, vector<8x16x64xbf16>, vector<8x16x64xbf16>, vector<8x16x64xbf16>, vector<8x16x64xbf16>, vector<8x16x64xbf16>, vector<8x16x64xbf16> -> vector<8x16x576xbf16>
    %16 = vector.shape_cast %15 : vector<8x16x576xbf16> to vector<128x576xbf16>
    %c0_11 = arith.constant 0 : index
    %c0_12 = arith.constant 0 : index
    %17 = vector.load %arg5[%c0_11, %c0_12] : memref<576x64xbf16, #tpu.memory_space<vmem>>, vector<576x64xbf16>
    %cst = arith.constant dense<0.000000e+00> : vector<128x64xf32>
    %18 = tpu.matmul %16, %17, %cst {dimension_numbers = #tpu.dot_dimension_numbers<[1], [0], [0], [1], [0, 0, 1, 1], [], []>} : vector<128x576xbf16>, vector<576x64xbf16>, vector<128x64xf32> -> vector<128x64xf32>
    %19 = vector.shape_cast %18 : vector<128x64xf32> to vector<8x16x64xf32>
    %c0_13 = arith.constant 0 : index
    %c0_14 = arith.constant 0 : index
    %c0_15 = arith.constant 0 : index
    %c0_16 = arith.constant 0 : index
    %20 = vector.load %arg6[%c0_13, %c0_14, %c0_15, %c0_16] : memref<1x8x16x64xf32, #tpu.memory_space<vmem>>, vector<1x8x16x64xf32>
    %21 = vector.shape_cast %20 : vector<1x8x16x64xf32> to vector<8x16x64xf32>
    %22 = vector.shape_cast %19 : vector<8x16x64xf32> to vector<1x8x16x64xf32>
    tpu.vector_store %arg6[%c0_13, %c0_14, %c0_15, %c0_16], %22 {strides = array<i32>} : memref<1x8x16x64xf32, #tpu.memory_space<vmem>>, vector<1x8x16x64xf32>,
    return
  }
  func.func @transform_0(%arg0: i32, %arg1: i32) -> (i32, i32, i32, i32) {
    %c0_i32 = arith.constant 0 : i32
    %c0_i32_0 = arith.constant 0 : i32
    %c0_i32_1 = arith.constant 0 : i32
    return %arg0, %arg1, %c0_i32, %c0_i32_0 : i32, i32, i32, i32
  }
  func.func @transform_1(%arg0: i32, %arg1: i32) -> (i32, i32, i32, i32) {
    %c0_i32 = arith.constant 0 : i32
    %c0_i32_0 = arith.constant 0 : i32
    %c0_i32_1 = arith.constant 0 : i32
    return %arg0, %arg1, %c0_i32, %c0_i32_0 : i32, i32, i32, i32
  }
  func.func @transform_2(%arg0: i32, %arg1: i32) -> (i32, i32, i32, i32) {
    %c0_i32 = arith.constant 0 : i32
    %c0_i32_0 = arith.constant 0 : i32
    %c0_i32_1 = arith.constant 0 : i32
    return %arg0, %arg1, %c0_i32, %c0_i32_0 : i32, i32, i32, i32
  }
  func.func @transform_3(%arg0: i32, %arg1: i32) -> (i32, i32) {
    %c0_i32 = arith.constant 0 : i32
    %c0_i32_0 = arith.constant 0 : i32
    %c0_i32_1 = arith.constant 0 : i32
    return %c0_i32, %c0_i32_0 : i32, i32
  }
  func.func @transform_4(%arg0: i32, %arg1: i32) -> (i32, i32, i32, i32) {
    %c0_i32 = arith.constant 0 : i32
    %c0_i32_0 = arith.constant 0 : i32
    %c0_i32_1 = arith.constant 0 : i32
    return %arg0, %arg1, %c0_i32, %c0_i32_0 : i32, i32, i32, i32
  }
}

module attributes {stable_mosaic.version = 11 : i64} {
  func.func @_bn_apply_relu_kernel(%arg0: i32, %arg1: memref<256x64xf32, #tpu.memory_space<vmem>>, %arg2: memref<1x64xf32, #tpu.memory_space<vmem>>, %arg3: memref<1x64xf32, #tpu.memory_space<vmem>>, %arg4: memref<256x64xf32, #tpu.memory_space<vmem>>) attributes {dimension_semantics = [#tpu.dimension_semantics<parallel>], iteration_bounds = array<i64: 2>, scalar_prefetch = 0 : i64, scratch_operands = 0 : i64, tpu.core_type = #tpu.core_type<tc>, window_params = [{transform_indices = @transform_0, window_bounds = array<i64: 256, 64>}, {pipeline_mode = #tpu.pipeline_mode<synchronous>, transform_indices = @transform_1, window_bounds = array<i64: 1, 64>}, {pipeline_mode = #tpu.pipeline_mode<synchronous>, transform_indices = @transform_2, window_bounds = array<i64: 1, 64>}, {transform_indices = @transform_3, window_bounds = array<i64: 256, 64>}]} {
    %c0 = arith.constant 0 : index
    %c0_0 = arith.constant 0 : index
    %0 = vector.load %arg1[%c0, %c0_0] : memref<256x64xf32, #tpu.memory_space<vmem>>, vector<256x64xf32>
    %c0_1 = arith.constant 0 : index
    %c0_2 = arith.constant 0 : index
    %1 = vector.load %arg2[%c0_1, %c0_2] : memref<1x64xf32, #tpu.memory_space<vmem>>, vector<1x64xf32>
    %2 = vector.broadcast %1 : vector<1x64xf32> to vector<256x64xf32>
    %3 = arith.mulf %0, %2 : vector<256x64xf32>
    %c0_3 = arith.constant 0 : index
    %c0_4 = arith.constant 0 : index
    %4 = vector.load %arg3[%c0_3, %c0_4] : memref<1x64xf32, #tpu.memory_space<vmem>>, vector<1x64xf32>
    %5 = vector.broadcast %4 : vector<1x64xf32> to vector<256x64xf32>
    %6 = arith.addf %3, %5 : vector<256x64xf32>
    %cst = arith.constant 0.000000e+00 : f32
    %7 = vector.broadcast %cst : f32 to vector<256x64xf32>
    %8 = arith.maximumf %6, %7 : vector<256x64xf32>
    %c0_5 = arith.constant 0 : index
    %c0_6 = arith.constant 0 : index
    %9 = vector.load %arg4[%c0_5, %c0_6] : memref<256x64xf32, #tpu.memory_space<vmem>>, vector<256x64xf32>
    tpu.vector_store %arg4[%c0_5, %c0_6], %8 {strides = array<i32>} : memref<256x64xf32, #tpu.memory_space<vmem>>, vector<256x64xf32>,
    return
  }
  func.func @transform_0(%arg0: i32) -> (i32, i32) {
    %c0_i32 = arith.constant 0 : i32
    %c0_i32_0 = arith.constant 0 : i32
    return %arg0, %c0_i32 : i32, i32
  }
  func.func @transform_1(%arg0: i32) -> (i32, i32) {
    %c0_i32 = arith.constant 0 : i32
    %c0_i32_0 = arith.constant 0 : i32
    %c0_i32_1 = arith.constant 0 : i32
    return %c0_i32, %c0_i32_0 : i32, i32
  }
  func.func @transform_2(%arg0: i32) -> (i32, i32) {
    %c0_i32 = arith.constant 0 : i32
    %c0_i32_0 = arith.constant 0 : i32
    %c0_i32_1 = arith.constant 0 : i32
    return %c0_i32, %c0_i32_0 : i32, i32
  }
  func.func @transform_3(%arg0: i32) -> (i32, i32) {
    %c0_i32 = arith.constant 0 : i32
    %c0_i32_0 = arith.constant 0 : i32
    return %arg0, %c0_i32 : i32, i32
  }
}

</mosaic_0001>

<llo_original>
// kernel: unet_encoder_forward.7
$region0: #{unet_encoder_forward.7}
  #allocation0 [shape = 'u32[]', space=smem, size = 0x4, offset = 0x4, fixed_abs, tag = 'smem constant byte address 0x4 - core index']
  #allocation1 [shape = 'u32[72,128]{1,0:T(1,128)}', space=vmem, size = 0x9000, scoped, tag = 'internal scratch']
  %s0 = inlined_call_operand.vmem [shape: f32[512,64], index: 0, kind: input, shape index: {}]
  %s1 = inlined_call_operand.vmem [shape: f32[2,64], index: 1, kind: output, shape index: {}]
  %s2 = sld [smem:[#allocation0]]
  $region41: #{unet_encoder_forward.7} parent=0
    _
  %s4 = ssub.s32 1, %s2
  %s5 = scalar_select 0, %s4, %s2
  loop: start=0, step=1, limit=4
  $region2: #{unet_encoder_forward.7} parent=0 // loop_pre_header
    _
  $region3: #{unet_encoder_forward.7} parent=0 // loop_header
    %s7 = sphi 0, %s11
    %p8 = scmp.ge.s32.totalorder %s7, 4
    %s17 = sphi 0, %s19
    %s20 = sphi 0, %s17
    %s21 = sphi 0, %s20
    %s37 = sphi 0, %s21
    %s41 = sphi 0, %s41
    %s43 = sphi 0, %s41
    %s44 = sphi 0, %s43
    %s58 = sphi 0, %s44
  $region4: #{unet_encoder_forward.7} parent=0 // loop_header_branch
    %10 = sbr.rel (%p8) target = $region8
  $region5: #{unet_encoder_forward.7} parent=0 // loop_body
    %s12 = ssub.s32 %s7, 1
    %s13 = ssub.s32 %s7, 2
    %s14 = sadd.s32 %s7, 1
    %s15 = ssub.s32 %s7, %s14
    %p16 = scmp.eq.s32.totalorder %s15, 0
    %s18 = sadd.s32 %s17, 1
    %s19 = scalar_select %p16, %s17, %s18
    %p22 = pneg %p16
    %p23 = scmp.eq.s32.totalorder %s7, 1
    %p24 = por %p22, %p23
    %p25 = scmp.ne.s32.totalorder %s17, %s20
    %p26 = scmp.eq.s32.totalorder %s7, 0
    %p27 = por %p25, %p26
    %p28 = scmp.ne.s32.totalorder %s17, %s20
    %p29 = scmp.eq.s32.totalorder %s12, 1
    %p30 = por %p28, %p29
    %p31 = scmp.ne.s32.totalorder %s20, %s21
    %p32 = scmp.eq.s32.totalorder %s12, 0
    %p33 = por %p31, %p32
    %p34 = scmp.ne.s32.totalorder %s20, %s21
    %p35 = scmp.eq.s32.totalorder %s13, 1
    %p36 = por %p34, %p35
    %p38 = scmp.ne.s32.totalorder %s21, %s37
    %p39 = scmp.eq.s32.totalorder %s13, 0
    %p40 = por %p38, %p39
    %s42 = sadd.s32 %s41, 1
    %p45 = scmp.eq.s32.totalorder %s7, 1
    %p46 = scmp.ne.s32.totalorder %s41, %s43
    %p47 = scmp.eq.s32.totalorder %s7, 0
    %p48 = por %p46, %p47
    %p49 = scmp.ne.s32.totalorder %s41, %s43
    %p50 = scmp.eq.s32.totalorder %s12, 1
    %p51 = por %p49, %p50
    %p52 = scmp.ne.s32.totalorder %s43, %s44
    %p53 = scmp.eq.s32.totalorder %s12, 0
    %p54 = por %p52, %p53
    %p55 = scmp.ne.s32.totalorder %s43, %s44
    %p56 = scmp.eq.s32.totalorder %s13, 1
    %p57 = por %p55, %p56
    %p59 = scmp.ne.s32.totalorder %s44, %s58
    %p60 = scmp.eq.s32.totalorder %s13, 0
    %p61 = por %p59, %p60
    %p62 = scmp.le.s32.totalorder 1, %s7
    %p63 = scmp.lt.s32.totalorder %s7, 3
    %p64 = pnand %p62, %p63
    %p65 = pneg %p64
    // Predicated region
    $region9: #{unet_encoder_forward.7} parent=5 // pred_check
      _
    $region10: #{unet_encoder_forward.7} parent=5 // pred_check_branch
      %67 = sbr.rel (%p64) target = $region12
    $region11: #{unet_encoder_forward.7} parent=5 // pred_region
      %s68 = ssub.s32 %s7, 1
    $region12: #{unet_encoder_forward.7} parent=5 // pred_fallthru
      _
    %p69 = scmp.lt.s32.totalorder %s7, 2
    // Predicated region
    $region13: #{unet_encoder_forward.7} parent=5 // pred_check
      %p70 = pneg %p69
    $region14: #{unet_encoder_forward.7} parent=5 // pred_check_branch
      %72 = sbr.rel (%p70) target = $region16
    $region15: #{unet_encoder_forward.7} parent=5 // pred_region
      // Predicated region
      $region17: #{unet_encoder_forward.7} parent=15 // pred_check
        %p73 = pneg %p27
      $region18: #{unet_encoder_forward.7} parent=15 // pred_check_branch
        %75 = sbr.rel (%p73) target = $region20
      $region19: #{unet_encoder_forward.7} parent=15 // pred_region
        %s76 = smul.u32 32, %s7
        %p77 = scmp.lt.s32.totalorder %s76, 63
        %s78 = scalar_select %p77, %s76, 63
        %s79 = smul.addr %s78, 8
        %s80 = scalar_lea.vmem %s0, %s79
        %s81 = smul.u32 32, %s7
      $region20: #{unet_encoder_forward.7} parent=15 // pred_fallthru
        _
    $region16: #{unet_encoder_forward.7} parent=5 // pred_fallthru
      _
    %p82 = scmp.le.s32.totalorder 1, %s7
    %p83 = scmp.lt.s32.totalorder %s7, 3
    %p84 = pnand %p82, %p83
    %p85 = pneg %p84
    // Predicated region
    $region21: #{unet_encoder_forward.7} parent=5 // pred_check
      _
    $region22: #{unet_encoder_forward.7} parent=5 // pred_check_branch
      %87 = sbr.rel (%p84) target = $region24
    $region23: #{unet_encoder_forward.7} parent=5 // pred_region
      %s88 = ssub.s32 %s7, 1
      %s89 = smul.u32 32, %s12
      %p90 = scmp.lt.s32.totalorder %s89, 63
      %s91 = scalar_select %p90, %s89, 63
      %s92 = smul.addr %s91, 8
      %s93 = scalar_lea.vmem %s0, %s92
      %p94 = pneg %p33
      %p95 = pneg %p30
      %p96 = pneg %p54
      %p97 = pneg %p51
      %s98 = smul.u32 32, %s12
      %p99 = scmp.lt.s32.totalorder %s98, 63
      %s100 = scalar_select %p99, %s98, 63
      %s101 = smul.addr %s100, 8
      %s102 = scalar_lea.vmem %s0, %s101
      %s103 = smul.u32 32, %s12
      %p104 = scmp.eq.s32.totalorder %s12, 0
      // Predicated region
      $region25: #{unet_encoder_forward.7} parent=23 // pred_check
        %p105 = pneg %p104
      $region26: #{unet_encoder_forward.7} parent=23 // pred_check_branch
        %107 = sbr.rel (%p105) target = $region28
      $region27: #{unet_encoder_forward.7} parent=23 // pred_region
        %vm108 = vcmask 517120
        %109 = vst.msk [vmem:[%s1] sm:$0x3] %vm108, 0.0
      $region28: #{unet_encoder_forward.7} parent=23 // pred_fallthru
        _
      %v110 = vld [vmem:[%s102] sm:$0xff]
      %v111 = vld [vmem:[%s102 + $0x8] sm:$0xff]
      %v112 = vld [vmem:[%s102 + $0x10] sm:$0xff]
      %v113 = vld [vmem:[%s102 + $0x18] sm:$0xff]
      %v114 = vld [vmem:[%s102 + $0x20] sm:$0xff]
      %v115 = vld [vmem:[%s102 + $0x28] sm:$0xff]
      %v116 = vld [vmem:[%s102 + $0x30] sm:$0xff]
      %v117 = vld [vmem:[%s102 + $0x38] sm:$0xff]
      %v118 = vld [vmem:[%s102 + $0x40] sm:$0xff]
      %v119 = vld [vmem:[%s102 + $0x48] sm:$0xff]
      %v120 = vld [vmem:[%s102 + $0x50] sm:$0xff]
      %v121 = vld [vmem:[%s102 + $0x58] sm:$0xff]
      %v122 = vld [vmem:[%s102 + $0x60] sm:$0xff]
      %v123 = vld [vmem:[%s102 + $0x68] sm:$0xff]
      %v124 = vld [vmem:[%s102 + $0x70] sm:$0xff]
      %v125 = vld [vmem:[%s102 + $0x78] sm:$0xff]
      %v126 = vld [vmem:[%s102 + $0x80] sm:$0xff]
      %v127 = vld [vmem:[%s102 + $0x88] sm:$0xff]
      %v128 = vld [vmem:[%s102 + $0x90] sm:$0xff]
      %v129 = vld [vmem:[%s102 + $0x98] sm:$0xff]
      %v130 = vld [vmem:[%s102 + $0xa0] sm:$0xff]
      %v131 = vld [vmem:[%s102 + $0xa8] sm:$0xff]
      %v132 = vld [vmem:[%s102 + $0xb0] sm:$0xff]
      %v133 = vld [vmem:[%s102 + $0xb8] sm:$0xff]
      %v134 = vld [vmem:[%s102 + $0xc0] sm:$0xff]
      %v135 = vld [vmem:[%s102 + $0xc8] sm:$0xff]
      %v136 = vld [vmem:[%s102 + $0xd0] sm:$0xff]
      %v137 = vld [vmem:[%s102 + $0xd8] sm:$0xff]
      %v138 = vld [vmem:[%s102 + $0xe0] sm:$0xff]
      %v139 = vld [vmem:[%s102 + $0xe8] sm:$0xff]
      %v140 = vld [vmem:[%s102 + $0xf0] sm:$0xff]
      %v141 = vld [vmem:[%s102 + $0xf8] sm:$0xff]
      %v142 = vld [vmem:[%s1] sm:$0x3]
      %vm143 = vcmask 523264
      %v144 = vsel %vm143, %v110, 0.0
      %v145 = vsel %vm143, %v111, 0.0
      %v146 = vadd.f32 %v144, %v145
      %v147 = vsel %vm143, %v112, 0.0
      %v148 = vadd.f32 %v146, %v147
      %v149 = vsel %vm143, %v113, 0.0
      %v150 = vadd.f32 %v148, %v149
      %v151 = vsel %vm143, %v114, 0.0
      %v152 = vadd.f32 %v150, %v151
      %v153 = vsel %vm143, %v115, 0.0
      %v154 = vadd.f32 %v152, %v153
      %v155 = vsel %vm143, %v116, 0.0
      %v156 = vadd.f32 %v154, %v155
      %v157 = vsel %vm143, %v117, 0.0
      %v158 = vadd.f32 %v156, %v157
      %v159 = vsel %vm143, %v118, 0.0
      %v160 = vadd.f32 %v158, %v159
      %v161 = vsel %vm143, %v119, 0.0
      %v162 = vadd.f32 %v160, %v161
      %v163 = vsel %vm143, %v120, 0.0
      %v164 = vadd.f32 %v162, %v163
      %v165 = vsel %vm143, %v121, 0.0
      %v166 = vadd.f32 %v164, %v165
      %v167 = vsel %vm143, %v122, 0.0
      %v168 = vadd.f32 %v166, %v167
      %v169 = vsel %vm143, %v123, 0.0
      %v170 = vadd.f32 %v168, %v169
      %v171 = vsel %vm143, %v124, 0.0
      %v172 = vadd.f32 %v170, %v171
      %v173 = vsel %vm143, %v125, 0.0
      %v174 = vadd.f32 %v172, %v173
      %v175 = vsel %vm143, %v126, 0.0
      %v176 = vadd.f32 %v174, %v175
      %v177 = vsel %vm143, %v127, 0.0
      %v178 = vadd.f32 %v176, %v177
      %v179 = vsel %vm143, %v128, 0.0
      %v180 = vadd.f32 %v178, %v179
      %v181 = vsel %vm143, %v129, 0.0
      %v182 = vadd.f32 %v180, %v181
      %v183 = vsel %vm143, %v130, 0.0
      %v184 = vadd.f32 %v182, %v183
      %v185 = vsel %vm143, %v131, 0.0
      %v186 = vadd.f32 %v184, %v185
      %v187 = vsel %vm143, %v132, 0.0
      %v188 = vadd.f32 %v186, %v187
      %v189 = vsel %vm143, %v133, 0.0
      %v190 = vadd.f32 %v188, %v189
      %v191 = vsel %vm143, %v134, 0.0
      %v192 = vadd.f32 %v190, %v191
      %v193 = vsel %vm143, %v135, 0.0
      %v194 = vadd.f32 %v192, %v193
      %v195 = vsel %vm143, %v136, 0.0
      %v196 = vadd.f32 %v194, %v195
      %v197 = vsel %vm143, %v137, 0.0
      %v198 = vadd.f32 %v196, %v197
      %v199 = vsel %vm143, %v138, 0.0
      %v200 = vadd.f32 %v198, %v199
      %v201 = vsel %vm143, %v139, 0.0
      %v202 = vadd.f32 %v200, %v201
      %v203 = vsel %vm143, %v140, 0.0
      %v204 = vadd.f32 %v202, %v203
      %v205 = vsel %vm143, %v141, 0.0
      %v206 = vadd.f32 %v204, %v205
      %v207 = vrot.slane %v206, 4
      %v208 = vadd.f32 %v206, %v207
      %v209 = vrot.slane %v208, 2
      %v210 = vadd.f32 %v208, %v209
      %v211 = vrot.slane %v210, 1
      %v212 = vadd.f32 %v210, %v211
      %v213 = vmul.f32 %v110, %v110
      %v214 = vmul.f32 %v111, %v111
      %v215 = vmul.f32 %v112, %v112
      %v216 = vmul.f32 %v113, %v113
      %v217 = vmul.f32 %v114, %v114
      %v218 = vmul.f32 %v115, %v115
      %v219 = vmul.f32 %v116, %v116
      %v220 = vmul.f32 %v117, %v117
      %v221 = vmul.f32 %v118, %v118
      %v222 = vmul.f32 %v119, %v119
      %v223 = vmul.f32 %v120, %v120
      %v224 = vmul.f32 %v121, %v121
      %v225 = vmul.f32 %v122, %v122
      %v226 = vmul.f32 %v123, %v123
      %v227 = vmul.f32 %v124, %v124
      %v228 = vmul.f32 %v125, %v125
      %v229 = vmul.f32 %v126, %v126
      %v230 = vmul.f32 %v127, %v127
      %v231 = vmul.f32 %v128, %v128
      %v232 = vmul.f32 %v129, %v129
      %v233 = vmul.f32 %v130, %v130
      %v234 = vmul.f32 %v131, %v131
      %v235 = vmul.f32 %v132, %v132
      %v236 = vmul.f32 %v133, %v133
      %v237 = vmul.f32 %v134, %v134
      %v238 = vmul.f32 %v135, %v135
      %v239 = vmul.f32 %v136, %v136
      %v240 = vmul.f32 %v137, %v137
      %v241 = vmul.f32 %v138, %v138
      %v242 = vmul.f32 %v139, %v139
      %v243 = vmul.f32 %v140, %v140
      %v244 = vmul.f32 %v141, %v141
      %v245 = vsel %vm143, %v213, 0.0
      %v246 = vsel %vm143, %v214, 0.0
      %v247 = vadd.f32 %v245, %v246
      %v248 = vsel %vm143, %v215, 0.0
      %v249 = vadd.f32 %v247, %v248
      %v250 = vsel %vm143, %v216, 0.0
      %v251 = vadd.f32 %v249, %v250
      %v252 = vsel %vm143, %v217, 0.0
      %v253 = vadd.f32 %v251, %v252
      %v254 = vsel %vm143, %v218, 0.0
      %v255 = vadd.f32 %v253, %v254
      %v256 = vsel %vm143, %v219, 0.0
      %v257 = vadd.f32 %v255, %v256
      %v258 = vsel %vm143, %v220, 0.0
      %v259 = vadd.f32 %v257, %v258
      %v260 = vsel %vm143, %v221, 0.0
      %v261 = vadd.f32 %v259, %v260
      %v262 = vsel %vm143, %v222, 0.0
      %v263 = vadd.f32 %v261, %v262
      %v264 = vsel %vm143, %v223, 0.0
      %v265 = vadd.f32 %v263, %v264
      %v266 = vsel %vm143, %v224, 0.0
      %v267 = vadd.f32 %v265, %v266
      %v268 = vsel %vm143, %v225, 0.0
      %v269 = vadd.f32 %v267, %v268
      %v270 = vsel %vm143, %v226, 0.0
      %v271 = vadd.f32 %v269, %v270
      %v272 = vsel %vm143, %v227, 0.0
      %v273 = vadd.f32 %v271, %v272
      %v274 = vsel %vm143, %v228, 0.0
      %v275 = vadd.f32 %v273, %v274
      %v276 = vsel %vm143, %v229, 0.0
      %v277 = vadd.f32 %v275, %v276
      %v278 = vsel %vm143, %v230, 0.0
      %v279 = vadd.f32 %v277, %v278
      %v280 = vsel %vm143, %v231, 0.0
      %v281 = vadd.f32 %v279, %v280
      %v282 = vsel %vm143, %v232, 0.0
      %v283 = vadd.f32 %v281, %v282
      %v284 = vsel %vm143, %v233, 0.0
      %v285 = vadd.f32 %v283, %v284
      %v286 = vsel %vm143, %v234, 0.0
      %v287 = vadd.f32 %v285, %v286
      %v288 = vsel %vm143, %v235, 0.0
      %v289 = vadd.f32 %v287, %v288
      %v290 = vsel %vm143, %v236, 0.0
      %v291 = vadd.f32 %v289, %v290
      %v292 = vsel %vm143, %v237, 0.0
      %v293 = vadd.f32 %v291, %v292
      %v294 = vsel %vm143, %v238, 0.0
      %v295 = vadd.f32 %v293, %v294
      %v296 = vsel %vm143, %v239, 0.0
      %v297 = vadd.f32 %v295, %v296
      %v298 = vsel %vm143, %v240, 0.0
      %v299 = vadd.f32 %v297, %v298
      %v300 = vsel %vm143, %v241, 0.0
      %v301 = vadd.f32 %v299, %v300
      %v302 = vsel %vm143, %v242, 0.0
      %v303 = vadd.f32 %v301, %v302
      %v304 = vsel %vm143, %v243, 0.0
      %v305 = vadd.f32 %v303, %v304
      %v306 = vsel %vm143, %v244, 0.0
      %v307 = vadd.f32 %v305, %v306
      %v308 = vrot.slane %v307, 4
      %v309 = vadd.f32 %v307, %v308
      %v310 = vrot.slane %v309, 2
      %v311 = vadd.f32 %v309, %v310
      %v312 = vrot.slane %v311, 1
      %v313 = vadd.f32 %v311, %v312
      %vm314 = vcmask 1040384
      %v315 = vsel %vm314, %v212, %v313
      %v316 = vadd.f32 %v142, %v315
      %vm317 = vcmask 517120
      %318 = vst.msk [vmem:[%s1] sm:$0x3] %vm317, %v316
      // Predicated region
      $region29: #{unet_encoder_forward.7} parent=23 // pred_check
        %p319 = pneg %p51
      $region30: #{unet_encoder_forward.7} parent=23 // pred_check_branch
        %321 = sbr.rel (%p319) target = $region32
      $region31: #{unet_encoder_forward.7} parent=23 // pred_region
        _
      $region32: #{unet_encoder_forward.7} parent=23 // pred_fallthru
        _
      // Predicated region
      $region33: #{unet_encoder_forward.7} parent=23 // pred_check
        %p322 = pneg %p51
      $region34: #{unet_encoder_forward.7} parent=23 // pred_check_branch
        %324 = sbr.rel (%p322) target = $region36
      $region35: #{unet_encoder_forward.7} parent=23 // pred_region
        _
      $region36: #{unet_encoder_forward.7} parent=23 // pred_fallthru
        _
    $region24: #{unet_encoder_forward.7} parent=5 // pred_fallthru
      _
    %p325 = scmp.le.s32.totalorder 2, %s7
    // Predicated region
    $region37: #{unet_encoder_forward.7} parent=5 // pred_check
      %p326 = pneg %p325
    $region38: #{unet_encoder_forward.7} parent=5 // pred_check_branch
      %328 = sbr.rel (%p326) target = $region40
    $region39: #{unet_encoder_forward.7} parent=5 // pred_region
      %s329 = ssub.s32 %s7, 2
    $region40: #{unet_encoder_forward.7} parent=5 // pred_fallthru
      _
  $region6: #{unet_encoder_forward.7} parent=0 // loop_footer
    %s11 = sadd.s32 1, %s7
  $region7: #{unet_encoder_forward.7} parent=0 // loop_footer_branch
    %6 = sbr.rel target = $region3
  $region8: #{unet_encoder_forward.7} parent=0 // loop_exit
    _

// kernel: unet_encoder_forward.8
$region0: #{unet_encoder_forward.8}
  #allocation0 [shape = 'u32[]', space=smem, size = 0x4, offset = 0x4, fixed_abs, tag = 'smem constant byte address 0x4 - core index']
  #allocation1 [shape = 'u32[72,128]{1,0:T(1,128)}', space=vmem, size = 0x9000, scoped, tag = 'internal scratch']
  %s0 = inlined_call_operand.vmem [shape: f32[512,64], index: 0, kind: input, shape index: {}]
  %s1 = inlined_call_operand.vmem [shape: f32[1,64], index: 1, kind: input, shape index: {}]
  %s2 = inlined_call_operand.vmem [shape: f32[1,64], index: 2, kind: input, shape index: {}]
  %s3 = inlined_call_operand.vmem [shape: bf16[512,64], index: 3, kind: output, shape index: {}]
  %s4 = sld [smem:[#allocation0]]
  $region45: #{unet_encoder_forward.8} parent=0
    _
  %s6 = ssub.s32 1, %s4
  %s7 = scalar_select 0, %s6, %s4
  loop: start=0, step=1, limit=4
  $region2: #{unet_encoder_forward.8} parent=0 // loop_pre_header
    _
  $region3: #{unet_encoder_forward.8} parent=0 // loop_header
    %s9 = sphi 0, %s13
    %p10 = scmp.ge.s32.totalorder %s9, 4
    %s19 = sphi 0, %s21
    %s22 = sphi 0, %s19
    %s23 = sphi 0, %s22
    %s39 = sphi 0, %s23
    %s43 = sphi 0, %s43
    %s45 = sphi 0, %s43
    %s46 = sphi 0, %s45
    %s60 = sphi 0, %s46
    %s64 = sphi 0, %s64
    %s66 = sphi 0, %s64
    %s67 = sphi 0, %s66
    %s81 = sphi 0, %s67
    %s87 = sphi 0, %s89
    %s90 = sphi 0, %s87
    %s91 = sphi 0, %s90
    %s107 = sphi 0, %s91
  $region4: #{unet_encoder_forward.8} parent=0 // loop_header_branch
    %12 = sbr.rel (%p10) target = $region8
  $region5: #{unet_encoder_forward.8} parent=0 // loop_body
    %s14 = ssub.s32 %s9, 1
    %s15 = ssub.s32 %s9, 2
    %s16 = sadd.s32 %s9, 1
    %s17 = ssub.s32 %s9, %s16
    %p18 = scmp.eq.s32.totalorder %s17, 0
    %s20 = sadd.s32 %s19, 1
    %s21 = scalar_select %p18, %s19, %s20
    %p24 = pneg %p18
    %p25 = scmp.eq.s32.totalorder %s9, 1
    %p26 = por %p24, %p25
    %p27 = scmp.ne.s32.totalorder %s19, %s22
    %p28 = scmp.eq.s32.totalorder %s9, 0
    %p29 = por %p27, %p28
    %p30 = scmp.ne.s32.totalorder %s19, %s22
    %p31 = scmp.eq.s32.totalorder %s14, 1
    %p32 = por %p30, %p31
    %p33 = scmp.ne.s32.totalorder %s22, %s23
    %p34 = scmp.eq.s32.totalorder %s14, 0
    %p35 = por %p33, %p34
    %p36 = scmp.ne.s32.totalorder %s22, %s23
    %p37 = scmp.eq.s32.totalorder %s15, 1
    %p38 = por %p36, %p37
    %p40 = scmp.ne.s32.totalorder %s23, %s39
    %p41 = scmp.eq.s32.totalorder %s15, 0
    %p42 = por %p40, %p41
    %s44 = sadd.s32 %s43, 1
    %p47 = scmp.eq.s32.totalorder %s9, 1
    %p48 = scmp.ne.s32.totalorder %s43, %s45
    %p49 = scmp.eq.s32.totalorder %s9, 0
    %p50 = por %p48, %p49
    %p51 = scmp.ne.s32.totalorder %s43, %s45
    %p52 = scmp.eq.s32.totalorder %s14, 1
    %p53 = por %p51, %p52
    %p54 = scmp.ne.s32.totalorder %s45, %s46
    %p55 = scmp.eq.s32.totalorder %s14, 0
    %p56 = por %p54, %p55
    %p57 = scmp.ne.s32.totalorder %s45, %s46
    %p58 = scmp.eq.s32.totalorder %s15, 1
    %p59 = por %p57, %p58
    %p61 = scmp.ne.s32.totalorder %s46, %s60
    %p62 = scmp.eq.s32.totalorder %s15, 0
    %p63 = por %p61, %p62
    %s65 = sadd.s32 %s64, 1
    %p68 = scmp.eq.s32.totalorder %s9, 1
    %p69 = scmp.ne.s32.totalorder %s64, %s66
    %p70 = scmp.eq.s32.totalorder %s9, 0
    %p71 = por %p69, %p70
    %p72 = scmp.ne.s32.totalorder %s64, %s66
    %p73 = scmp.eq.s32.totalorder %s14, 1
    %p74 = por %p72, %p73
    %p75 = scmp.ne.s32.totalorder %s66, %s67
    %p76 = scmp.eq.s32.totalorder %s14, 0
    %p77 = por %p75, %p76
    %p78 = scmp.ne.s32.totalorder %s66, %s67
    %p79 = scmp.eq.s32.totalorder %s15, 1
    %p80 = por %p78, %p79
    %p82 = scmp.ne.s32.totalorder %s67, %s81
    %p83 = scmp.eq.s32.totalorder %s15, 0
    %p84 = por %p82, %p83
    %s85 = ssub.s32 %s9, %s16
    %p86 = scmp.eq.s32.totalorder %s85, 0
    %s88 = sadd.s32 %s87, 1
    %s89 = scalar_select %p86, %s87, %s88
    %p92 = pneg %p86
    %p93 = scmp.eq.s32.totalorder %s9, 1
    %p94 = por %p92, %p93
    %p95 = scmp.ne.s32.totalorder %s87, %s90
    %p96 = scmp.eq.s32.totalorder %s9, 0
    %p97 = por %p95, %p96
    %p98 = scmp.ne.s32.totalorder %s87, %s90
    %p99 = scmp.eq.s32.totalorder %s14, 1
    %p100 = por %p98, %p99
    %p101 = scmp.ne.s32.totalorder %s90, %s91
    %p102 = scmp.eq.s32.totalorder %s14, 0
    %p103 = por %p101, %p102
    %p104 = scmp.ne.s32.totalorder %s90, %s91
    %p105 = scmp.eq.s32.totalorder %s15, 1
    %p106 = por %p104, %p105
    %p108 = scmp.ne.s32.totalorder %s91, %s107
    %p109 = scmp.eq.s32.totalorder %s15, 0
    %p110 = por %p108, %p109
    %p111 = scmp.le.s32.totalorder 1, %s9
    %p112 = scmp.lt.s32.totalorder %s9, 3
    %p113 = pnand %p111, %p112
    %p114 = pneg %p113
    // Predicated region
    $region9: #{unet_encoder_forward.8} parent=5 // pred_check
      _
    $region10: #{unet_encoder_forward.8} parent=5 // pred_check_branch
      %116 = sbr.rel (%p113) target = $region12
    $region11: #{unet_encoder_forward.8} parent=5 // pred_region
      %s117 = ssub.s32 %s9, 1
      // Predicated region
      $region13: #{unet_encoder_forward.8} parent=11 // pred_check
        %p118 = pneg %p56
      $region14: #{unet_encoder_forward.8} parent=11 // pred_check_branch
        %120 = sbr.rel (%p118) target = $region16
      $region15: #{unet_encoder_forward.8} parent=11 // pred_region
        _
      $region16: #{unet_encoder_forward.8} parent=11 // pred_fallthru
        _
      // Predicated region
      $region17: #{unet_encoder_forward.8} parent=11 // pred_check
        %p121 = pneg %p77
      $region18: #{unet_encoder_forward.8} parent=11 // pred_check_branch
        %123 = sbr.rel (%p121) target = $region20
      $region19: #{unet_encoder_forward.8} parent=11 // pred_region
        _
      $region20: #{unet_encoder_forward.8} parent=11 // pred_fallthru
        _
    $region12: #{unet_encoder_forward.8} parent=5 // pred_fallthru
      _
    %p124 = scmp.lt.s32.totalorder %s9, 2
    // Predicated region
    $region21: #{unet_encoder_forward.8} parent=5 // pred_check
      %p125 = pneg %p124
    $region22: #{unet_encoder_forward.8} parent=5 // pred_check_branch
      %127 = sbr.rel (%p125) target = $region24
    $region23: #{unet_encoder_forward.8} parent=5 // pred_region
      // Predicated region
      $region25: #{unet_encoder_forward.8} parent=23 // pred_check
        %p128 = pneg %p29
      $region26: #{unet_encoder_forward.8} parent=23 // pred_check_branch
        %130 = sbr.rel (%p128) target = $region28
      $region27: #{unet_encoder_forward.8} parent=23 // pred_region
        %s131 = smul.u32 32, %s9
        %p132 = scmp.lt.s32.totalorder %s131, 63
        %s133 = scalar_select %p132, %s131, 63
        %s134 = smul.addr %s133, 8
        %s135 = scalar_lea.vmem %s0, %s134
        %s136 = smul.u32 32, %s9
      $region28: #{unet_encoder_forward.8} parent=23 // pred_fallthru
        _
    $region24: #{unet_encoder_forward.8} parent=5 // pred_fallthru
      _
    %p137 = scmp.le.s32.totalorder 1, %s9
    %p138 = scmp.lt.s32.totalorder %s9, 3
    %p139 = pnand %p137, %p138
    %p140 = pneg %p139
    // Predicated region
    $region29: #{unet_encoder_forward.8} parent=5 // pred_check
      _
    $region30: #{unet_encoder_forward.8} parent=5 // pred_check_branch
      %142 = sbr.rel (%p139) target = $region32
    $region31: #{unet_encoder_forward.8} parent=5 // pred_region
      %s143 = ssub.s32 %s9, 1
      %s144 = smul.u32 32, %s14
      %p145 = scmp.lt.s32.totalorder %s144, 63
      %s146 = scalar_select %p145, %s144, 63
      %s147 = smul.addr %s146, 8
      %s148 = scalar_lea.vmem %s0, %s147
      %p149 = pneg %p35
      %p150 = pneg %p32
      %p151 = pneg %p56
      %p152 = pneg %p53
      %p153 = pneg %p77
      %p154 = pneg %p74
      %p155 = pneg %p103
      %p156 = pneg %p100
      %s157 = smul.u32 32, %s14
      %p158 = scmp.lt.s32.totalorder %s157, 63
      %s159 = scalar_select %p158, %s157, 63
      %s160 = smul.addr %s159, 4
      %s161 = scalar_lea.vmem %s3, %s160
      %s162 = smul.u32 32, %s14
      %p163 = scmp.lt.s32.totalorder %s162, 63
      %s164 = scalar_select %p163, %s162, 63
      %s165 = smul.addr %s164, 8
      %s166 = scalar_lea.vmem %s0, %s165
      %s167 = smul.u32 32, %s14
      %s168 = smul.u32 32, %s14
      %p169 = scmp.lt.s32.totalorder %s168, 63
      %s170 = scalar_select %p169, %s168, 63
      %s171 = smul.addr %s170, 4
      %s172 = scalar_lea.vmem %s3, %s171
      %s173 = smul.u32 32, %s14
      %v174 = vld [vmem:[%s166] sm:$0xff]
      %v175 = vld [vmem:[%s166 + $0x8] sm:$0xff]
      %v176 = vld [vmem:[%s166 + $0x10] sm:$0xff]
      %v177 = vld [vmem:[%s166 + $0x18] sm:$0xff]
      %v178 = vld [vmem:[%s166 + $0x20] sm:$0xff]
      %v179 = vld [vmem:[%s166 + $0x28] sm:$0xff]
      %v180 = vld [vmem:[%s166 + $0x30] sm:$0xff]
      %v181 = vld [vmem:[%s166 + $0x38] sm:$0xff]
      %v182 = vld [vmem:[%s166 + $0x40] sm:$0xff]
      %v183 = vld [vmem:[%s166 + $0x48] sm:$0xff]
      %v184 = vld [vmem:[%s166 + $0x50] sm:$0xff]
      %v185 = vld [vmem:[%s166 + $0x58] sm:$0xff]
      %v186 = vld [vmem:[%s166 + $0x60] sm:$0xff]
      %v187 = vld [vmem:[%s166 + $0x68] sm:$0xff]
      %v188 = vld [vmem:[%s166 + $0x70] sm:$0xff]
      %v189 = vld [vmem:[%s166 + $0x78] sm:$0xff]
      %v190 = vld [vmem:[%s166 + $0x80] sm:$0xff]
      %v191 = vld [vmem:[%s166 + $0x88] sm:$0xff]
      %v192 = vld [vmem:[%s166 + $0x90] sm:$0xff]
      %v193 = vld [vmem:[%s166 + $0x98] sm:$0xff]
      %v194 = vld [vmem:[%s166 + $0xa0] sm:$0xff]
      %v195 = vld [vmem:[%s166 + $0xa8] sm:$0xff]
      %v196 = vld [vmem:[%s166 + $0xb0] sm:$0xff]
      %v197 = vld [vmem:[%s166 + $0xb8] sm:$0xff]
      %v198 = vld [vmem:[%s166 + $0xc0] sm:$0xff]
      %v199 = vld [vmem:[%s166 + $0xc8] sm:$0xff]
      %v200 = vld [vmem:[%s166 + $0xd0] sm:$0xff]
      %v201 = vld [vmem:[%s166 + $0xd8] sm:$0xff]
      %v202 = vld [vmem:[%s166 + $0xe0] sm:$0xff]
      %v203 = vld [vmem:[%s166 + $0xe8] sm:$0xff]
      %v204 = vld [vmem:[%s166 + $0xf0] sm:$0xff]
      %v205 = vld [vmem:[%s166 + $0xf8] sm:$0xff]
      %v206 = vld [vmem:[%s1] sm:$0x1]
      %v208 = vperm.slane %v206, 0
      %v210 = vmul.f32 %v174, %v208
      %v211 = vmul.f32 %v175, %v208
      %v212 = vmul.f32 %v176, %v208
      %v213 = vmul.f32 %v177, %v208
      %v214 = vmul.f32 %v178, %v208
      %v215 = vmul.f32 %v179, %v208
      %v216 = vmul.f32 %v180, %v208
      %v217 = vmul.f32 %v181, %v208
      %v218 = vmul.f32 %v182, %v208
      %v219 = vmul.f32 %v183, %v208
      %v220 = vmul.f32 %v184, %v208
      %v221 = vmul.f32 %v185, %v208
      %v222 = vmul.f32 %v186, %v208
      %v223 = vmul.f32 %v187, %v208
      %v224 = vmul.f32 %v188, %v208
      %v225 = vmul.f32 %v189, %v208
      %v226 = vmul.f32 %v190, %v208
      %v227 = vmul.f32 %v191, %v208
      %v228 = vmul.f32 %v192, %v208
      %v229 = vmul.f32 %v193, %v208
      %v230 = vmul.f32 %v194, %v208
      %v231 = vmul.f32 %v195, %v208
      %v232 = vmul.f32 %v196, %v208
      %v233 = vmul.f32 %v197, %v208
      %v234 = vmul.f32 %v198, %v208
      %v235 = vmul.f32 %v199, %v208
      %v236 = vmul.f32 %v200, %v208
      %v237 = vmul.f32 %v201, %v208
      %v238 = vmul.f32 %v202, %v208
      %v239 = vmul.f32 %v203, %v208
      %v240 = vmul.f32 %v204, %v208
      %v241 = vmul.f32 %v205, %v208
      %v242 = vld [vmem:[%s2] sm:$0x1]
      %v244 = vperm.slane %v242, 0
      %v246 = vadd.f32 %v210, %v244
      %v247 = vadd.f32 %v211, %v244
      %v248 = vadd.f32 %v212, %v244
      %v249 = vadd.f32 %v213, %v244
      %v250 = vadd.f32 %v214, %v244
      %v251 = vadd.f32 %v215, %v244
      %v252 = vadd.f32 %v216, %v244
      %v253 = vadd.f32 %v217, %v244
      %v254 = vadd.f32 %v218, %v244
      %v255 = vadd.f32 %v219, %v244
      %v256 = vadd.f32 %v220, %v244
      %v257 = vadd.f32 %v221, %v244
      %v258 = vadd.f32 %v222, %v244
      %v259 = vadd.f32 %v223, %v244
      %v260 = vadd.f32 %v224, %v244
      %v261 = vadd.f32 %v225, %v244
      %v262 = vadd.f32 %v226, %v244
      %v263 = vadd.f32 %v227, %v244
      %v264 = vadd.f32 %v228, %v244
      %v265 = vadd.f32 %v229, %v244
      %v266 = vadd.f32 %v230, %v244
      %v267 = vadd.f32 %v231, %v244
      %v268 = vadd.f32 %v232, %v244
      %v269 = vadd.f32 %v233, %v244
      %v270 = vadd.f32 %v234, %v244
      %v271 = vadd.f32 %v235, %v244
      %v272 = vadd.f32 %v236, %v244
      %v273 = vadd.f32 %v237, %v244
      %v274 = vadd.f32 %v238, %v244
      %v275 = vadd.f32 %v239, %v244
      %v276 = vadd.f32 %v240, %v244
      %v277 = vadd.f32 %v241, %v244
      %v278 = vmax.f32 %v246, 0.0
      %v279 = vmax.f32 %v247, 0.0
      %v280 = vmax.f32 %v248, 0.0
      %v281 = vmax.f32 %v249, 0.0
      %v282 = vmax.f32 %v250, 0.0
      %v283 = vmax.f32 %v251, 0.0
      %v284 = vmax.f32 %v252, 0.0
      %v285 = vmax.f32 %v253, 0.0
      %v286 = vmax.f32 %v254, 0.0
      %v287 = vmax.f32 %v255, 0.0
      %v288 = vmax.f32 %v256, 0.0
      %v289 = vmax.f32 %v257, 0.0
      %v290 = vmax.f32 %v258, 0.0
      %v291 = vmax.f32 %v259, 0.0
      %v292 = vmax.f32 %v260, 0.0
      %v293 = vmax.f32 %v261, 0.0
      %v294 = vmax.f32 %v262, 0.0
      %v295 = vmax.f32 %v263, 0.0
      %v296 = vmax.f32 %v264, 0.0
      %v297 = vmax.f32 %v265, 0.0
      %v298 = vmax.f32 %v266, 0.0
      %v299 = vmax.f32 %v267, 0.0
      %v300 = vmax.f32 %v268, 0.0
      %v301 = vmax.f32 %v269, 0.0
      %v302 = vmax.f32 %v270, 0.0
      %v303 = vmax.f32 %v271, 0.0
      %v304 = vmax.f32 %v272, 0.0
      %v305 = vmax.f32 %v273, 0.0
      %v306 = vmax.f32 %v274, 0.0
      %v307 = vmax.f32 %v275, 0.0
      %v308 = vmax.f32 %v276, 0.0
      %v309 = vmax.f32 %v277, 0.0
      %v310 = vpack.c.bf16 %v278, %v278
      %v311 = vpack.c.bf16 %v279, %v279
      %v312 = vpack.c.bf16 %v280, %v280
      %v313 = vpack.c.bf16 %v281, %v281
      %v314 = vpack.c.bf16 %v282, %v282
      %v315 = vpack.c.bf16 %v283, %v283
      %v316 = vpack.c.bf16 %v284, %v284
      %v317 = vpack.c.bf16 %v285, %v285
      %v318 = vpack.c.bf16 %v286, %v286
      %v319 = vpack.c.bf16 %v287, %v287
      %v320 = vpack.c.bf16 %v288, %v288
      %v321 = vpack.c.bf16 %v289, %v289
      %v322 = vpack.c.bf16 %v290, %v290
      %v323 = vpack.c.bf16 %v291, %v291
      %v324 = vpack.c.bf16 %v292, %v292
      %v325 = vpack.c.bf16 %v293, %v293
      %v326 = vpack.c.bf16 %v294, %v294
      %v327 = vpack.c.bf16 %v295, %v295
      %v328 = vpack.c.bf16 %v296, %v296
      %v329 = vpack.c.bf16 %v297, %v297
      %v330 = vpack.c.bf16 %v298, %v298
      %v331 = vpack.c.bf16 %v299, %v299
      %v332 = vpack.c.bf16 %v300, %v300
      %v333 = vpack.c.bf16 %v301, %v301
      %v334 = vpack.c.bf16 %v302, %v302
      %v335 = vpack.c.bf16 %v303, %v303
      %v336 = vpack.c.bf16 %v304, %v304
      %v337 = vpack.c.bf16 %v305, %v305
      %v338 = vpack.c.bf16 %v306, %v306
      %v339 = vpack.c.bf16 %v307, %v307
      %v340 = vpack.c.bf16 %v308, %v308
      %v341 = vpack.c.bf16 %v309, %v309
      %vm342 = vcmask 519168
      %343 = vst.msk [vmem:[%s172] sm:$0xf] %vm342, %v310
      %344 = vst.msk [vmem:[%s172 + $0x4] sm:$0xf] %vm342, %v311
      %345 = vst.msk [vmem:[%s172 + $0x8] sm:$0xf] %vm342, %v312
      %346 = vst.msk [vmem:[%s172 + $0xc] sm:$0xf] %vm342, %v313
      %347 = vst.msk [vmem:[%s172 + $0x10] sm:$0xf] %vm342, %v314
      %348 = vst.msk [vmem:[%s172 + $0x14] sm:$0xf] %vm342, %v315
      %349 = vst.msk [vmem:[%s172 + $0x18] sm:$0xf] %vm342, %v316
      %350 = vst.msk [vmem:[%s172 + $0x1c] sm:$0xf] %vm342, %v317
      %351 = vst.msk [vmem:[%s172 + $0x20] sm:$0xf] %vm342, %v318
      %352 = vst.msk [vmem:[%s172 + $0x24] sm:$0xf] %vm342, %v319
      %353 = vst.msk [vmem:[%s172 + $0x28] sm:$0xf] %vm342, %v320
      %354 = vst.msk [vmem:[%s172 + $0x2c] sm:$0xf] %vm342, %v321
      %355 = vst.msk [vmem:[%s172 + $0x30] sm:$0xf] %vm342, %v322
      %356 = vst.msk [vmem:[%s172 + $0x34] sm:$0xf] %vm342, %v323
      %357 = vst.msk [vmem:[%s172 + $0x38] sm:$0xf] %vm342, %v324
      %358 = vst.msk [vmem:[%s172 + $0x3c] sm:$0xf] %vm342, %v325
      %359 = vst.msk [vmem:[%s172 + $0x40] sm:$0xf] %vm342, %v326
      %360 = vst.msk [vmem:[%s172 + $0x44] sm:$0xf] %vm342, %v327
      %361 = vst.msk [vmem:[%s172 + $0x48] sm:$0xf] %vm342, %v328
      %362 = vst.msk [vmem:[%s172 + $0x4c] sm:$0xf] %vm342, %v329
      %363 = vst.msk [vmem:[%s172 + $0x50] sm:$0xf] %vm342, %v330
      %364 = vst.msk [vmem:[%s172 + $0x54] sm:$0xf] %vm342, %v331
      %365 = vst.msk [vmem:[%s172 + $0x58] sm:$0xf] %vm342, %v332
      %366 = vst.msk [vmem:[%s172 + $0x5c] sm:$0xf] %vm342, %v333
      %367 = vst.msk [vmem:[%s172 + $0x60] sm:$0xf] %vm342, %v334
      %368 = vst.msk [vmem:[%s172 + $0x64] sm:$0xf] %vm342, %v335
      %369 = vst.msk [vmem:[%s172 + $0x68] sm:$0xf] %vm342, %v336
      %370 = vst.msk [vmem:[%s172 + $0x6c] sm:$0xf] %vm342, %v337
      %371 = vst.msk [vmem:[%s172 + $0x70] sm:$0xf] %vm342, %v338
      %372 = vst.msk [vmem:[%s172 + $0x74] sm:$0xf] %vm342, %v339
      %373 = vst.msk [vmem:[%s172 + $0x78] sm:$0xf] %vm342, %v340
      %374 = vst.msk [vmem:[%s172 + $0x7c] sm:$0xf] %vm342, %v341
      %s375 = smul.u32 32, %s14
      %p376 = scmp.lt.s32.totalorder %s375, 63
      %s377 = scalar_select %p376, %s375, 63
      %s378 = smul.addr %s377, 4
      %s379 = scalar_lea.vmem %s3, %s378
      // Predicated region
      $region33: #{unet_encoder_forward.8} parent=31 // pred_check
        %p380 = pneg %p100
      $region34: #{unet_encoder_forward.8} parent=31 // pred_check_branch
        %382 = sbr.rel (%p380) target = $region36
      $region35: #{unet_encoder_forward.8} parent=31 // pred_region
        %s383 = smul.u32 32, %s14
      $region36: #{unet_encoder_forward.8} parent=31 // pred_fallthru
        _
    $region32: #{unet_encoder_forward.8} parent=5 // pred_fallthru
      _
    %p384 = scmp.le.s32.totalorder 2, %s9
    // Predicated region
    $region37: #{unet_encoder_forward.8} parent=5 // pred_check
      %p385 = pneg %p384
    $region38: #{unet_encoder_forward.8} parent=5 // pred_check_branch
      %387 = sbr.rel (%p385) target = $region40
    $region39: #{unet_encoder_forward.8} parent=5 // pred_region
      %s388 = ssub.s32 %s9, 2
      // Predicated region
      $region41: #{unet_encoder_forward.8} parent=39 // pred_check
        %p389 = pneg %p106
      $region42: #{unet_encoder_forward.8} parent=39 // pred_check_branch
        %391 = sbr.rel (%p389) target = $region44
      $region43: #{unet_encoder_forward.8} parent=39 // pred_region
        %s392 = smul.u32 32, %s15
        %p393 = scmp.lt.s32.totalorder %s392, 63
        %s394 = scalar_select %p393, %s392, 63
        %s395 = smul.addr %s394, 4
        %s396 = scalar_lea.vmem %s3, %s395
      $region44: #{unet_encoder_forward.8} parent=39 // pred_fallthru
        _
    $region40: #{unet_encoder_forward.8} parent=5 // pred_fallthru
      _
  $region6: #{unet_encoder_forward.8} parent=0 // loop_footer
    %s13 = sadd.s32 1, %s9
  $region7: #{unet_encoder_forward.8} parent=0 // loop_footer_branch
    %8 = sbr.rel target = $region3
  $region8: #{unet_encoder_forward.8} parent=0 // loop_exit
    _

// kernel: unet_encoder_forward.6
$region0: #{unet_encoder_forward.6}
  #allocation0 [shape = 'u32[]', space=smem, size = 0x4, offset = 0x4, fixed_abs, tag = 'smem constant byte address 0x4 - core index']
  #allocation1 [shape = 'u32[72,128]{1,0:T(1,128)}', space=vmem, size = 0x9000, scoped, tag = 'internal scratch']
  %s0 = inlined_call_operand.vmem [shape: bf16[2,16,18,4], index: 0, kind: input, shape index: {}]
  %s1 = inlined_call_operand.vmem [shape: bf16[2,16,18,4], index: 1, kind: input, shape index: {}]
  %s2 = inlined_call_operand.vmem [shape: bf16[2,16,18,4], index: 2, kind: input, shape index: {}]
  %s3 = inlined_call_operand.vmem [shape: bf16[36,64], index: 3, kind: input, shape index: {}]
  %s4 = inlined_call_operand.vmem [shape: f32[2,16,16,64], index: 4, kind: output, shape index: {}]
  %s5 = sld [smem:[#allocation0]]
  $region49: #{unet_encoder_forward.6} parent=0
    _
  %s7 = ssub.s32 1, %s5
  %s8 = scalar_select 0, %s7, %s5
  loop: start=0, step=1, limit=6
  $region2: #{unet_encoder_forward.6} parent=0 // loop_pre_header
    _
  $region3: #{unet_encoder_forward.6} parent=0 // loop_header
    %s10 = sphi 0, %s14
    %p11 = scmp.ge.s32.totalorder %s10, 6
    %s17 = sphi 0, %s29
    %s18 = sphi 0, %s25
    %s19 = sphi 0, %s17
    %s20 = sphi 0, %s18
    %s21 = sphi 0, %s19
    %s22 = sphi 0, %s20
    %s34 = sphi 0, %s36
    %s37 = sphi 0, %s34
    %s38 = sphi 0, %s37
    %s54 = sphi 0, %s38
    %s62 = sphi 0, %s64
    %s65 = sphi 0, %s62
    %s66 = sphi 0, %s65
    %s82 = sphi 0, %s66
    %s90 = sphi 0, %s92
    %s93 = sphi 0, %s90
    %s94 = sphi 0, %s93
    %s110 = sphi 0, %s94
    %s114 = sphi 0, %s114
    %s116 = sphi 0, %s114
    %s117 = sphi 0, %s116
    %s131 = sphi 0, %s117
    %s139 = sphi 0, %s141
    %s142 = sphi 0, %s139
    %s143 = sphi 0, %s142
    %s159 = sphi 0, %s143
  $region4: #{unet_encoder_forward.6} parent=0 // loop_header_branch
    %13 = sbr.rel (%p11) target = $region8
  $region5: #{unet_encoder_forward.6} parent=0 // loop_body
    %s15 = ssub.s32 %s10, 1
    %s16 = ssub.s32 %s10, 2
    %s23 = sadd.s32 1, %s18
    %p24 = scmp.ge.s32.totalorder %s23, 2
    %s25 = scalar_select %p24, 0, %s23
    %s26 = sadd.s32 1, %s17
    %s27 = scalar_select %p24, %s26, %s17
    %p28 = scmp.ge.s32.totalorder %s27, 2
    %s29 = scalar_select %p28, 0, %s27
    %s30 = ssub.s32 %s17, %s29
    %s31 = ssub.s32 %s18, %s25
    %s32 = sor.u32 %s30, %s31
    %p33 = scmp.eq.s32.totalorder %s32, 0
    %s35 = sadd.s32 %s34, 1
    %s36 = scalar_select %p33, %s34, %s35
    %p39 = pneg %p33
    %p40 = scmp.eq.s32.totalorder %s10, 3
    %p41 = por %p39, %p40
    %p42 = scmp.ne.s32.totalorder %s34, %s37
    %p43 = scmp.eq.s32.totalorder %s10, 0
    %p44 = por %p42, %p43
    %p45 = scmp.ne.s32.totalorder %s34, %s37
    %p46 = scmp.eq.s32.totalorder %s15, 3
    %p47 = por %p45, %p46
    %p48 = scmp.ne.s32.totalorder %s37, %s38
    %p49 = scmp.eq.s32.totalorder %s15, 0
    %p50 = por %p48, %p49
    %p51 = scmp.ne.s32.totalorder %s37, %s38
    %p52 = scmp.eq.s32.totalorder %s16, 3
    %p53 = por %p51, %p52
    %p55 = scmp.ne.s32.totalorder %s38, %s54
    %p56 = scmp.eq.s32.totalorder %s16, 0
    %p57 = por %p55, %p56
    %s58 = ssub.s32 %s17, %s29
    %s59 = ssub.s32 %s18, %s25
    %s60 = sor.u32 %s58, %s59
    %p61 = scmp.eq.s32.totalorder %s60, 0
    %s63 = sadd.s32 %s62, 1
    %s64 = scalar_select %p61, %s62, %s63
    %p67 = pneg %p61
    %p68 = scmp.eq.s32.totalorder %s10, 3
    %p69 = por %p67, %p68
    %p70 = scmp.ne.s32.totalorder %s62, %s65
    %p71 = scmp.eq.s32.totalorder %s10, 0
    %p72 = por %p70, %p71
    %p73 = scmp.ne.s32.totalorder %s62, %s65
    %p74 = scmp.eq.s32.totalorder %s15, 3
    %p75 = por %p73, %p74
    %p76 = scmp.ne.s32.totalorder %s65, %s66
    %p77 = scmp.eq.s32.totalorder %s15, 0
    %p78 = por %p76, %p77
    %p79 = scmp.ne.s32.totalorder %s65, %s66
    %p80 = scmp.eq.s32.totalorder %s16, 3
    %p81 = por %p79, %p80
    %p83 = scmp.ne.s32.totalorder %s66, %s82
    %p84 = scmp.eq.s32.totalorder %s16, 0
    %p85 = por %p83, %p84
    %s86 = ssub.s32 %s17, %s29
    %s87 = ssub.s32 %s18, %s25
    %s88 = sor.u32 %s86, %s87
    %p89 = scmp.eq.s32.totalorder %s88, 0
    %s91 = sadd.s32 %s90, 1
    %s92 = scalar_select %p89, %s90, %s91
    %p95 = pneg %p89
    %p96 = scmp.eq.s32.totalorder %s10, 3
    %p97 = por %p95, %p96
    %p98 = scmp.ne.s32.totalorder %s90, %s93
    %p99 = scmp.eq.s32.totalorder %s10, 0
    %p100 = por %p98, %p99
    %p101 = scmp.ne.s32.totalorder %s90, %s93
    %p102 = scmp.eq.s32.totalorder %s15, 3
    %p103 = por %p101, %p102
    %p104 = scmp.ne.s32.totalorder %s93, %s94
    %p105 = scmp.eq.s32.totalorder %s15, 0
    %p106 = por %p104, %p105
    %p107 = scmp.ne.s32.totalorder %s93, %s94
    %p108 = scmp.eq.s32.totalorder %s16, 3
    %p109 = por %p107, %p108
    %p111 = scmp.ne.s32.totalorder %s94, %s110
    %p112 = scmp.eq.s32.totalorder %s16, 0
    %p113 = por %p111, %p112
    %s115 = sadd.s32 %s114, 1
    %p118 = scmp.eq.s32.totalorder %s10, 3
    %p119 = scmp.ne.s32.totalorder %s114, %s116
    %p120 = scmp.eq.s32.totalorder %s10, 0
    %p121 = por %p119, %p120
    %p122 = scmp.ne.s32.totalorder %s114, %s116
    %p123 = scmp.eq.s32.totalorder %s15, 3
    %p124 = por %p122, %p123
    %p125 = scmp.ne.s32.totalorder %s116, %s117
    %p126 = scmp.eq.s32.totalorder %s15, 0
    %p127 = por %p125, %p126
    %p128 = scmp.ne.s32.totalorder %s116, %s117
    %p129 = scmp.eq.s32.totalorder %s16, 3
    %p130 = por %p128, %p129
    %p132 = scmp.ne.s32.totalorder %s117, %s131
    %p133 = scmp.eq.s32.totalorder %s16, 0
    %p134 = por %p132, %p133
    %s135 = ssub.s32 %s17, %s29
    %s136 = ssub.s32 %s18, %s25
    %s137 = sor.u32 %s135, %s136
    %p138 = scmp.eq.s32.totalorder %s137, 0
    %s140 = sadd.s32 %s139, 1
    %s141 = scalar_select %p138, %s139, %s140
    %p144 = pneg %p138
    %p145 = scmp.eq.s32.totalorder %s10, 3
    %p146 = por %p144, %p145
    %p147 = scmp.ne.s32.totalorder %s139, %s142
    %p148 = scmp.eq.s32.totalorder %s10, 0
    %p149 = por %p147, %p148
    %p150 = scmp.ne.s32.totalorder %s139, %s142
    %p151 = scmp.eq.s32.totalorder %s15, 3
    %p152 = por %p150, %p151
    %p153 = scmp.ne.s32.totalorder %s142, %s143
    %p154 = scmp.eq.s32.totalorder %s15, 0
    %p155 = por %p153, %p154
    %p156 = scmp.ne.s32.totalorder %s142, %s143
    %p157 = scmp.eq.s32.totalorder %s16, 3
    %p158 = por %p156, %p157
    %p160 = scmp.ne.s32.totalorder %s143, %s159
    %p161 = scmp.eq.s32.totalorder %s16, 0
    %p162 = por %p160, %p161
    %p163 = scmp.le.s32.totalorder 1, %s10
    %p164 = scmp.lt.s32.totalorder %s10, 5
    %p165 = pnand %p163, %p164
    %p166 = pneg %p165
    // Predicated region
    $region9: #{unet_encoder_forward.6} parent=5 // pred_check
      _
    $region10: #{unet_encoder_forward.6} parent=5 // pred_check_branch
      %168 = sbr.rel (%p165) target = $region12
    $region11: #{unet_encoder_forward.6} parent=5 // pred_region
      %s169 = ssub.s32 %s10, 1
      // Predicated region
      $region13: #{unet_encoder_forward.6} parent=11 // pred_check
        %p170 = pneg %p127
      $region14: #{unet_encoder_forward.6} parent=11 // pred_check_branch
        %172 = sbr.rel (%p170) target = $region16
      $region15: #{unet_encoder_forward.6} parent=11 // pred_region
        _
      $region16: #{unet_encoder_forward.6} parent=11 // pred_fallthru
        _
    $region12: #{unet_encoder_forward.6} parent=5 // pred_fallthru
      _
    %p173 = scmp.lt.s32.totalorder %s10, 4
    // Predicated region
    $region17: #{unet_encoder_forward.6} parent=5 // pred_check
      %p174 = pneg %p173
    $region18: #{unet_encoder_forward.6} parent=5 // pred_check_branch
      %176 = sbr.rel (%p174) target = $region20
    $region19: #{unet_encoder_forward.6} parent=5 // pred_region
      // Predicated region
      $region21: #{unet_encoder_forward.6} parent=19 // pred_check
        %p177 = pneg %p44
      $region22: #{unet_encoder_forward.6} parent=19 // pred_check_branch
        %179 = sbr.rel (%p177) target = $region24
      $region23: #{unet_encoder_forward.6} parent=19 // pred_region
        %s180 = smul.u32 8, %s18
        %p181 = scmp.lt.s32.totalorder %s17, 1
        %s182 = scalar_select %p181, %s17, 1
        %p183 = scmp.lt.s32.totalorder %s180, 15
        %s184 = scalar_select %p183, %s180, 15
        %s185 = smul.addr %s184, 3
        %s186 = smul.addr %s182, 48
        %s187 = sadd.s32 %s185, %s186
        %s188 = smul.addr %s187, 4
        %s189 = scalar_lea.vmem %s0, %s188
        %s190 = smul.u32 8, %s18
      $region24: #{unet_encoder_forward.6} parent=19 // pred_fallthru
        _
      // Predicated region
      $region25: #{unet_encoder_forward.6} parent=19 // pred_check
        %p191 = pneg %p72
      $region26: #{unet_encoder_forward.6} parent=19 // pred_check_branch
        %193 = sbr.rel (%p191) target = $region28
      $region27: #{unet_encoder_forward.6} parent=19 // pred_region
        %s194 = smul.u32 8, %s18
        %p195 = scmp.lt.s32.totalorder %s17, 1
        %s196 = scalar_select %p195, %s17, 1
        %p197 = scmp.lt.s32.totalorder %s194, 15
        %s198 = scalar_select %p197, %s194, 15
        %s199 = smul.addr %s198, 3
        %s200 = smul.addr %s196, 48
        %s201 = sadd.s32 %s199, %s200
        %s202 = smul.addr %s201, 4
        %s203 = scalar_lea.vmem %s1, %s202
        %s204 = smul.u32 8, %s18
      $region28: #{unet_encoder_forward.6} parent=19 // pred_fallthru
        _
      // Predicated region
      $region29: #{unet_encoder_forward.6} parent=19 // pred_check
        %p205 = pneg %p100
      $region30: #{unet_encoder_forward.6} parent=19 // pred_check_branch
        %207 = sbr.rel (%p205) target = $region32
      $region31: #{unet_encoder_forward.6} parent=19 // pred_region
        %s208 = smul.u32 8, %s18
        %p209 = scmp.lt.s32.totalorder %s17, 1
        %s210 = scalar_select %p209, %s17, 1
        %p211 = scmp.lt.s32.totalorder %s208, 15
        %s212 = scalar_select %p211, %s208, 15
        %s213 = smul.addr %s212, 3
        %s214 = smul.addr %s210, 48
        %s215 = sadd.s32 %s213, %s214
        %s216 = smul.addr %s215, 4
        %s217 = scalar_lea.vmem %s2, %s216
        %s218 = smul.u32 8, %s18
      $region32: #{unet_encoder_forward.6} parent=19 // pred_fallthru
        _
    $region20: #{unet_encoder_forward.6} parent=5 // pred_fallthru
      _
    %p219 = scmp.le.s32.totalorder 1, %s10
    %p220 = scmp.lt.s32.totalorder %s10, 5
    %p221 = pnand %p219, %p220
    %p222 = pneg %p221
    // Predicated region
    $region33: #{unet_encoder_forward.6} parent=5 // pred_check
      _
    $region34: #{unet_encoder_forward.6} parent=5 // pred_check_branch
      %224 = sbr.rel (%p221) target = $region36
    $region35: #{unet_encoder_forward.6} parent=5 // pred_region
      %s225 = ssub.s32 %s10, 1
      %s226 = smul.u32 8, %s20
      %p227 = scmp.lt.s32.totalorder %s19, 1
      %s228 = scalar_select %p227, %s19, 1
      %p229 = scmp.lt.s32.totalorder %s226, 15
      %s230 = scalar_select %p229, %s226, 15
      %s231 = smul.addr %s230, 3
      %s232 = smul.addr %s228, 48
      %s233 = sadd.s32 %s231, %s232
      %s234 = smul.addr %s233, 4
      %s235 = scalar_lea.vmem %s0, %s234
      %p236 = pneg %p50
      %p237 = pneg %p47
      %s238 = smul.u32 8, %s20
      %p239 = scmp.lt.s32.totalorder %s19, 1
      %s240 = scalar_select %p239, %s19, 1
      %p241 = scmp.lt.s32.totalorder %s238, 15
      %s242 = scalar_select %p241, %s238, 15
      %s243 = smul.addr %s242, 3
      %s244 = smul.addr %s240, 48
      %s245 = sadd.s32 %s243, %s244
      %s246 = smul.addr %s245, 4
      %s247 = scalar_lea.vmem %s1, %s246
      %p248 = pneg %p78
      %p249 = pneg %p75
      %s250 = smul.u32 8, %s20
      %p251 = scmp.lt.s32.totalorder %s19, 1
      %s252 = scalar_select %p251, %s19, 1
      %p253 = scmp.lt.s32.totalorder %s250, 15
      %s254 = scalar_select %p253, %s250, 15
      %s255 = smul.addr %s254, 3
      %s256 = smul.addr %s252, 48
      %s257 = sadd.s32 %s255, %s256
      %s258 = smul.addr %s257, 4
      %s259 = scalar_lea.vmem %s2, %s258
      %p260 = pneg %p106
      %p261 = pneg %p103
      %p262 = pneg %p127
      %p263 = pneg %p124
      %p264 = pneg %p155
      %p265 = pneg %p152
      %s266 = smul.u32 8, %s20
      %p267 = scmp.lt.s32.totalorder %s19, 1
      %s268 = scalar_select %p267, %s19, 1
      %p269 = scmp.lt.s32.totalorder %s266, 15
      %s270 = scalar_select %p269, %s266, 15
      %s271 = smul.addr %s270, 2
      %s272 = smul.addr %s268, 32
      %s273 = sadd.s32 %s271, %s272
      %s274 = smul.addr %s273, 8
      %s275 = scalar_lea.vmem %s4, %s274
      %s276 = smul.u32 8, %s20
      %p277 = scmp.lt.s32.totalorder %s19, 1
      %s278 = scalar_select %p277, %s19, 1
      %p279 = scmp.lt.s32.totalorder %s276, 15
      %s280 = scalar_select %p279, %s276, 15
      %s281 = smul.addr %s280, 3
      %s282 = smul.addr %s278, 48
      %s283 = sadd.s32 %s281, %s282
      %s284 = smul.addr %s283, 4
      %s285 = scalar_lea.vmem %s0, %s284
      %s286 = smul.u32 8, %s20
      %s287 = smul.u32 8, %s20
      %p288 = scmp.lt.s32.totalorder %s19, 1
      %s289 = scalar_select %p288, %s19, 1
      %p290 = scmp.lt.s32.totalorder %s287, 15
      %s291 = scalar_select %p290, %s287, 15
      %s292 = smul.addr %s291, 3
      %s293 = smul.addr %s289, 48
      %s294 = sadd.s32 %s292, %s293
      %s295 = smul.addr %s294, 4
      %s296 = scalar_lea.vmem %s1, %s295
      %s297 = smul.u32 8, %s20
      %s298 = smul.u32 8, %s20
      %p299 = scmp.lt.s32.totalorder %s19, 1
      %s300 = scalar_select %p299, %s19, 1
      %p301 = scmp.lt.s32.totalorder %s298, 15
      %s302 = scalar_select %p301, %s298, 15
      %s303 = smul.addr %s302, 3
      %s304 = smul.addr %s300, 48
      %s305 = sadd.s32 %s303, %s304
      %s306 = smul.addr %s305, 4
      %s307 = scalar_lea.vmem %s2, %s306
      %s308 = smul.u32 8, %s20
      %s309 = smul.u32 8, %s20
      %p310 = scmp.lt.s32.totalorder %s19, 1
      %s311 = scalar_select %p310, %s19, 1
      %p312 = scmp.lt.s32.totalorder %s309, 15
      %s313 = scalar_select %p312, %s309, 15
      %s314 = smul.addr %s313, 2
      %s315 = smul.addr %s311, 32
      %s316 = sadd.s32 %s314, %s315
      %s317 = smul.addr %s316, 8
      %s318 = scalar_lea.vmem %s4, %s317
      %s319 = smul.u32 8, %s20
      %v321 = vld [vmem:[%s285] sm:$0xf]
      %v322 = vld [vmem:[%s285 + $0x4] sm:$0xf]
      %v323 = vld [vmem:[%s285 + $0x8] sm:$0x1]
      %v324 = vld [vmem:[%s285 + $0xc] sm:$0xf]
      %v325 = vld [vmem:[%s285 + $0x10] sm:$0xf]
      %v326 = vld [vmem:[%s285 + $0x14] sm:$0x1]
      %v327 = vld [vmem:[%s285 + $0x18] sm:$0xf]
      %v328 = vld [vmem:[%s285 + $0x1c] sm:$0xf]
      %v329 = vld [vmem:[%s285 + $0x20] sm:$0x1]
      %v330 = vld [vmem:[%s285 + $0x24] sm:$0xf]
      %v331 = vld [vmem:[%s285 + $0x28] sm:$0xf]
      %v332 = vld [vmem:[%s285 + $0x2c] sm:$0x1]
      %v333 = vld [vmem:[%s285 + $0x30] sm:$0xf]
      %v334 = vld [vmem:[%s285 + $0x34] sm:$0xf]
      %v335 = vld [vmem:[%s285 + $0x38] sm:$0x1]
      %v336 = vld [vmem:[%s285 + $0x3c] sm:$0xf]
      %v337 = vld [vmem:[%s285 + $0x40] sm:$0xf]
      %v338 = vld [vmem:[%s285 + $0x44] sm:$0x1]
      %v339 = vld [vmem:[%s285 + $0x48] sm:$0xf]
      %v340 = vld [vmem:[%s285 + $0x4c] sm:$0xf]
      %v341 = vld [vmem:[%s285 + $0x50] sm:$0x1]
      %v342 = vld [vmem:[%s285 + $0x54] sm:$0xf]
      %v343 = vld [vmem:[%s285 + $0x58] sm:$0xf]
      %v344 = vld [vmem:[%s285 + $0x5c] sm:$0x1]
      %v345 = vld [vmem:[%s296] sm:$0xf]
      %v346 = vld [vmem:[%s296 + $0x4] sm:$0xf]
      %v347 = vld [vmem:[%s296 + $0x8] sm:$0x1]
      %v348 = vld [vmem:[%s296 + $0xc] sm:$0xf]
      %v349 = vld [vmem:[%s296 + $0x10] sm:$0xf]
      %v350 = vld [vmem:[%s296 + $0x14] sm:$0x1]
      %v351 = vld [vmem:[%s296 + $0x18] sm:$0xf]
      %v352 = vld [vmem:[%s296 + $0x1c] sm:$0xf]
      %v353 = vld [vmem:[%s296 + $0x20] sm:$0x1]
      %v354 = vld [vmem:[%s296 + $0x24] sm:$0xf]
      %v355 = vld [vmem:[%s296 + $0x28] sm:$0xf]
      %v356 = vld [vmem:[%s296 + $0x2c] sm:$0x1]
      %v357 = vld [vmem:[%s296 + $0x30] sm:$0xf]
      %v358 = vld [vmem:[%s296 + $0x34] sm:$0xf]
      %v359 = vld [vmem:[%s296 + $0x38] sm:$0x1]
      %v360 = vld [vmem:[%s296 + $0x3c] sm:$0xf]
      %v361 = vld [vmem:[%s296 + $0x40] sm:$0xf]
      %v362 = vld [vmem:[%s296 + $0x44] sm:$0x1]
      %v363 = vld [vmem:[%s296 + $0x48] sm:$0xf]
      %v364 = vld [vmem:[%s296 + $0x4c] sm:$0xf]
      %v365 = vld [vmem:[%s296 + $0x50] sm:$0x1]
      %v366 = vld [vmem:[%s296 + $0x54] sm:$0xf]
      %v367 = vld [vmem:[%s296 + $0x58] sm:$0xf]
      %v368 = vld [vmem:[%s296 + $0x5c] sm:$0x1]
      %v369 = vld [vmem:[%s307] sm:$0xf]
      %v370 = vld [vmem:[%s307 + $0x4] sm:$0xf]
      %v371 = vld [vmem:[%s307 + $0x8] sm:$0x1]
      %v372 = vld [vmem:[%s307 + $0xc] sm:$0xf]
      %v373 = vld [vmem:[%s307 + $0x10] sm:$0xf]
      %v374 = vld [vmem:[%s307 + $0x14] sm:$0x1]
      %v375 = vld [vmem:[%s307 + $0x18] sm:$0xf]
      %v376 = vld [vmem:[%s307 + $0x1c] sm:$0xf]
      %v377 = vld [vmem:[%s307 + $0x20] sm:$0x1]
      %v378 = vld [vmem:[%s307 + $0x24] sm:$0xf]
      %v379 = vld [vmem:[%s307 + $0x28] sm:$0xf]
      %v380 = vld [vmem:[%s307 + $0x2c] sm:$0x1]
      %v381 = vld [vmem:[%s307 + $0x30] sm:$0xf]
      %v382 = vld [vmem:[%s307 + $0x34] sm:$0xf]
      %v383 = vld [vmem:[%s307 + $0x38] sm:$0x1]
      %v384 = vld [vmem:[%s307 + $0x3c] sm:$0xf]
      %v385 = vld [vmem:[%s307 + $0x40] sm:$0xf]
      %v386 = vld [vmem:[%s307 + $0x44] sm:$0x1]
      %v387 = vld [vmem:[%s307 + $0x48] sm:$0xf]
      %v388 = vld [vmem:[%s307 + $0x4c] sm:$0xf]
      %v389 = vld [vmem:[%s307 + $0x50] sm:$0x1]
      %v390 = vld [vmem:[%s307 + $0x54] sm:$0xf]
      %v391 = vld [vmem:[%s307 + $0x58] sm:$0xf]
      %v392 = vld [vmem:[%s307 + $0x5c] sm:$0x1]
      %v409 = vunpack.c.l.b16 %v321
      %v410 = vunpack.c.l.b16 %v322
      %v411 = vunpack.c.l.b16 %v324
      %v412 = vunpack.c.l.b16 %v325
      %v413 = vunpack.c.l.b16 %v327
      %v414 = vunpack.c.l.b16 %v328
      %v415 = vunpack.c.l.b16 %v330
      %v416 = vunpack.c.l.b16 %v331
      %v417 = vunpack.c.l.b16 %v333
      %v418 = vunpack.c.l.b16 %v334
      %v419 = vunpack.c.l.b16 %v336
      %v420 = vunpack.c.l.b16 %v337
      %v421 = vunpack.c.l.b16 %v339
      %v422 = vunpack.c.l.b16 %v340
      %v423 = vunpack.c.l.b16 %v342
      %v424 = vunpack.c.l.b16 %v343
      %v425 = vpack.c.b16 %v410, %v409
      %v426 = vpack.c.b16 %v412, %v411
      %v427 = vpack.c.b16 %v414, %v413
      %v428 = vpack.c.b16 %v416, %v415
      %v429 = vpack.c.b16 %v418, %v417
      %v430 = vpack.c.b16 %v420, %v419
      %v431 = vpack.c.b16 %v422, %v421
      %v432 = vpack.c.b16 %v424, %v423
      %v441 = vunpack.c.l.b16 %v323
      %v442 = vunpack.c.l.b16 %v326
      %v443 = vunpack.c.l.b16 %v329
      %v444 = vunpack.c.l.b16 %v332
      %v445 = vunpack.c.l.b16 %v335
      %v446 = vunpack.c.l.b16 %v338
      %v447 = vunpack.c.l.b16 %v341
      %v448 = vunpack.c.l.b16 %v344
      %v449 = vpack.c.b16 %v441, %v441
      %v450 = vpack.c.b16 %v442, %v442
      %v451 = vpack.c.b16 %v443, %v443
      %v452 = vpack.c.b16 %v444, %v444
      %v453 = vpack.c.b16 %v445, %v445
      %v454 = vpack.c.b16 %v446, %v446
      %v455 = vpack.c.b16 %v447, %v447
      %v456 = vpack.c.b16 %v448, %v448
      %vm457 = vsmask.f32 7424
      %v459 = vshrl.u32 %v425, 16
      %v461 = vshll.u32 %v425, 16
      %v463 = vrot.slane %v461, 1
      %v464 = vor.u32 %v459, %v463
      %v466 = vshll.u32 %v449, 16
      %v468 = vrot.slane %v466, 1
      %v469 = vsel %vm457, %v464, %v468
      %v471 = vshrl.u32 %v426, 16
      %v473 = vshll.u32 %v426, 16
      %v475 = vrot.slane %v473, 1
      %v476 = vor.u32 %v471, %v475
      %v478 = vshll.u32 %v450, 16
      %v480 = vrot.slane %v478, 1
      %v481 = vsel %vm457, %v476, %v480
      %v483 = vshrl.u32 %v427, 16
      %v485 = vshll.u32 %v427, 16
      %v487 = vrot.slane %v485, 1
      %v488 = vor.u32 %v483, %v487
      %v490 = vshll.u32 %v451, 16
      %v492 = vrot.slane %v490, 1
      %v493 = vsel %vm457, %v488, %v492
      %v495 = vshrl.u32 %v428, 16
      %v497 = vshll.u32 %v428, 16
      %v499 = vrot.slane %v497, 1
      %v500 = vor.u32 %v495, %v499
      %v502 = vshll.u32 %v452, 16
      %v504 = vrot.slane %v502, 1
      %v505 = vsel %vm457, %v500, %v504
      %v507 = vshrl.u32 %v429, 16
      %v509 = vshll.u32 %v429, 16
      %v511 = vrot.slane %v509, 1
      %v512 = vor.u32 %v507, %v511
      %v514 = vshll.u32 %v453, 16
      %v516 = vrot.slane %v514, 1
      %v517 = vsel %vm457, %v512, %v516
      %v519 = vshrl.u32 %v430, 16
      %v521 = vshll.u32 %v430, 16
      %v523 = vrot.slane %v521, 1
      %v524 = vor.u32 %v519, %v523
      %v526 = vshll.u32 %v454, 16
      %v528 = vrot.slane %v526, 1
      %v529 = vsel %vm457, %v524, %v528
      %v531 = vshrl.u32 %v431, 16
      %v533 = vshll.u32 %v431, 16
      %v535 = vrot.slane %v533, 1
      %v536 = vor.u32 %v531, %v535
      %v538 = vshll.u32 %v455, 16
      %v540 = vrot.slane %v538, 1
      %v541 = vsel %vm457, %v536, %v540
      %v543 = vshrl.u32 %v432, 16
      %v545 = vshll.u32 %v432, 16
      %v547 = vrot.slane %v545, 1
      %v548 = vor.u32 %v543, %v547
      %v550 = vshll.u32 %v456, 16
      %v552 = vrot.slane %v550, 1
      %v553 = vsel %vm457, %v548, %v552
      %554 = vrot.lane.b32.xlu0 %v469, 4
      %v555 = vpop.permute.xlu0 %554
      %556 = vrot.lane.b32.xlu0 %v481, 4
      %v557 = vpop.permute.xlu0 %556
      %558 = vrot.lane.b32.xlu0 %v493, 4
      %v559 = vpop.permute.xlu0 %558
      %560 = vrot.lane.b32.xlu0 %v505, 4
      %v561 = vpop.permute.xlu0 %560
      %562 = vrot.lane.b32.xlu0 %v517, 4
      %v563 = vpop.permute.xlu0 %562
      %564 = vrot.lane.b32.xlu0 %v529, 4
      %v565 = vpop.permute.xlu0 %564
      %566 = vrot.lane.b32.xlu0 %v541, 4
      %v567 = vpop.permute.xlu0 %566
      %568 = vrot.lane.b32.xlu0 %v553, 4
      %v569 = vpop.permute.xlu0 %568
      %vm570 = vcmask 1046528
      %v571 = vrot.slane %v425, 1
      %v572 = vrot.slane %v449, 1
      %v573 = vsel %vm570, %v571, %v572
      %v574 = vrot.slane %v426, 1
      %v575 = vrot.slane %v450, 1
      %v576 = vsel %vm570, %v574, %v575
      %v577 = vrot.slane %v427, 1
      %v578 = vrot.slane %v451, 1
      %v579 = vsel %vm570, %v577, %v578
      %v580 = vrot.slane %v428, 1
      %v581 = vrot.slane %v452, 1
      %v582 = vsel %vm570, %v580, %v581
      %v583 = vrot.slane %v429, 1
      %v584 = vrot.slane %v453, 1
      %v585 = vsel %vm570, %v583, %v584
      %v586 = vrot.slane %v430, 1
      %v587 = vrot.slane %v454, 1
      %v588 = vsel %vm570, %v586, %v587
      %v589 = vrot.slane %v431, 1
      %v590 = vrot.slane %v455, 1
      %v591 = vsel %vm570, %v589, %v590
      %v592 = vrot.slane %v432, 1
      %v593 = vrot.slane %v456, 1
      %v594 = vsel %vm570, %v592, %v593
      %595 = vrot.lane.b32.xlu0 %v573, 8
      %v596 = vpop.permute.xlu0 %595
      %597 = vrot.lane.b32.xlu0 %v576, 8
      %v598 = vpop.permute.xlu0 %597
      %599 = vrot.lane.b32.xlu0 %v579, 8
      %v600 = vpop.permute.xlu0 %599
      %601 = vrot.lane.b32.xlu0 %v582, 8
      %v602 = vpop.permute.xlu0 %601
      %603 = vrot.lane.b32.xlu0 %v585, 8
      %v604 = vpop.permute.xlu0 %603
      %605 = vrot.lane.b32.xlu0 %v588, 8
      %v606 = vpop.permute.xlu0 %605
      %607 = vrot.lane.b32.xlu0 %v591, 8
      %v608 = vpop.permute.xlu0 %607
      %609 = vrot.lane.b32.xlu0 %v594, 8
      %v610 = vpop.permute.xlu0 %609
      %v627 = vunpack.c.l.b16 %v345
      %v628 = vunpack.c.l.b16 %v346
      %v629 = vunpack.c.l.b16 %v348
      %v630 = vunpack.c.l.b16 %v349
      %v631 = vunpack.c.l.b16 %v351
      %v632 = vunpack.c.l.b16 %v352
      %v633 = vunpack.c.l.b16 %v354
      %v634 = vunpack.c.l.b16 %v355
      %v635 = vunpack.c.l.b16 %v357
      %v636 = vunpack.c.l.b16 %v358
      %v637 = vunpack.c.l.b16 %v360
      %v638 = vunpack.c.l.b16 %v361
      %v639 = vunpack.c.l.b16 %v363
      %v640 = vunpack.c.l.b16 %v364
      %v641 = vunpack.c.l.b16 %v366
      %v642 = vunpack.c.l.b16 %v367
      %v643 = vpack.c.b16 %v628, %v627
      %v644 = vpack.c.b16 %v630, %v629
      %v645 = vpack.c.b16 %v632, %v631
      %v646 = vpack.c.b16 %v634, %v633
      %v647 = vpack.c.b16 %v636, %v635
      %v648 = vpack.c.b16 %v638, %v637
      %v649 = vpack.c.b16 %v640, %v639
      %v650 = vpack.c.b16 %v642, %v641
      %651 = vrot.lane.b32.xlu0 %v643, 12
      %v652 = vpop.permute.xlu0 %651
      %653 = vrot.lane.b32.xlu0 %v644, 12
      %v654 = vpop.permute.xlu0 %653
      %655 = vrot.lane.b32.xlu0 %v645, 12
      %v656 = vpop.permute.xlu0 %655
      %657 = vrot.lane.b32.xlu0 %v646, 12
      %v658 = vpop.permute.xlu0 %657
      %659 = vrot.lane.b32.xlu0 %v647, 12
      %v660 = vpop.permute.xlu0 %659
      %661 = vrot.lane.b32.xlu0 %v648, 12
      %v662 = vpop.permute.xlu0 %661
      %663 = vrot.lane.b32.xlu0 %v649, 12
      %v664 = vpop.permute.xlu0 %663
      %665 = vrot.lane.b32.xlu0 %v650, 12
      %v666 = vpop.permute.xlu0 %665
      %v675 = vunpack.c.l.b16 %v347
      %v676 = vunpack.c.l.b16 %v350
      %v677 = vunpack.c.l.b16 %v353
      %v678 = vunpack.c.l.b16 %v356
      %v679 = vunpack.c.l.b16 %v359
      %v680 = vunpack.c.l.b16 %v362
      %v681 = vunpack.c.l.b16 %v365
      %v682 = vunpack.c.l.b16 %v368
      %v683 = vpack.c.b16 %v675, %v675
      %v684 = vpack.c.b16 %v676, %v676
      %v685 = vpack.c.b16 %v677, %v677
      %v686 = vpack.c.b16 %v678, %v678
      %v687 = vpack.c.b16 %v679, %v679
      %v688 = vpack.c.b16 %v680, %v680
      %v689 = vpack.c.b16 %v681, %v681
      %v690 = vpack.c.b16 %v682, %v682
      %v692 = vshrl.u32 %v643, 16
      %v694 = vshll.u32 %v643, 16
      %v696 = vrot.slane %v694, 1
      %v697 = vor.u32 %v692, %v696
      %v699 = vshll.u32 %v683, 16
      %v701 = vrot.slane %v699, 1
      %v702 = vsel %vm457, %v697, %v701
      %v704 = vshrl.u32 %v644, 16
      %v706 = vshll.u32 %v644, 16
      %v708 = vrot.slane %v706, 1
      %v709 = vor.u32 %v704, %v708
      %v711 = vshll.u32 %v684, 16
      %v713 = vrot.slane %v711, 1
      %v714 = vsel %vm457, %v709, %v713
      %v716 = vshrl.u32 %v645, 16
      %v718 = vshll.u32 %v645, 16
      %v720 = vrot.slane %v718, 1
      %v721 = vor.u32 %v716, %v720
      %v723 = vshll.u32 %v685, 16
      %v725 = vrot.slane %v723, 1
      %v726 = vsel %vm457, %v721, %v725
      %v728 = vshrl.u32 %v646, 16
      %v730 = vshll.u32 %v646, 16
      %v732 = vrot.slane %v730, 1
      %v733 = vor.u32 %v728, %v732
      %v735 = vshll.u32 %v686, 16
      %v737 = vrot.slane %v735, 1
      %v738 = vsel %vm457, %v733, %v737
      %v740 = vshrl.u32 %v647, 16
      %v742 = vshll.u32 %v647, 16
      %v744 = vrot.slane %v742, 1
      %v745 = vor.u32 %v740, %v744
      %v747 = vshll.u32 %v687, 16
      %v749 = vrot.slane %v747, 1
      %v750 = vsel %vm457, %v745, %v749
      %v752 = vshrl.u32 %v648, 16
      %v754 = vshll.u32 %v648, 16
      %v756 = vrot.slane %v754, 1
      %v757 = vor.u32 %v752, %v756
      %v759 = vshll.u32 %v688, 16
      %v761 = vrot.slane %v759, 1
      %v762 = vsel %vm457, %v757, %v761
      %v764 = vshrl.u32 %v649, 16
      %v766 = vshll.u32 %v649, 16
      %v768 = vrot.slane %v766, 1
      %v769 = vor.u32 %v764, %v768
      %v771 = vshll.u32 %v689, 16
      %v773 = vrot.slane %v771, 1
      %v774 = vsel %vm457, %v769, %v773
      %v776 = vshrl.u32 %v650, 16
      %v778 = vshll.u32 %v650, 16
      %v780 = vrot.slane %v778, 1
      %v781 = vor.u32 %v776, %v780
      %v783 = vshll.u32 %v690, 16
      %v785 = vrot.slane %v783, 1
      %v786 = vsel %vm457, %v781, %v785
      %787 = vrot.lane.b32.xlu0 %v702, 16
      %v788 = vpop.permute.xlu0 %787
      %789 = vrot.lane.b32.xlu0 %v714, 16
      %v790 = vpop.permute.xlu0 %789
      %791 = vrot.lane.b32.xlu0 %v726, 16
      %v792 = vpop.permute.xlu0 %791
      %793 = vrot.lane.b32.xlu0 %v738, 16
      %v794 = vpop.permute.xlu0 %793
      %795 = vrot.lane.b32.xlu0 %v750, 16
      %v796 = vpop.permute.xlu0 %795
      %797 = vrot.lane.b32.xlu0 %v762, 16
      %v798 = vpop.permute.xlu0 %797
      %799 = vrot.lane.b32.xlu0 %v774, 16
      %v800 = vpop.permute.xlu0 %799
      %801 = vrot.lane.b32.xlu0 %v786, 16
      %v802 = vpop.permute.xlu0 %801
      %v803 = vrot.slane %v643, 1
      %v804 = vrot.slane %v683, 1
      %v805 = vsel %vm570, %v803, %v804
      %v806 = vrot.slane %v644, 1
      %v807 = vrot.slane %v684, 1
      %v808 = vsel %vm570, %v806, %v807
      %v809 = vrot.slane %v645, 1
      %v810 = vrot.slane %v685, 1
      %v811 = vsel %vm570, %v809, %v810
      %v812 = vrot.slane %v646, 1
      %v813 = vrot.slane %v686, 1
      %v814 = vsel %vm570, %v812, %v813
      %v815 = vrot.slane %v647, 1
      %v816 = vrot.slane %v687, 1
      %v817 = vsel %vm570, %v815, %v816
      %v818 = vrot.slane %v648, 1
      %v819 = vrot.slane %v688, 1
      %v820 = vsel %vm570, %v818, %v819
      %v821 = vrot.slane %v649, 1
      %v822 = vrot.slane %v689, 1
      %v823 = vsel %vm570, %v821, %v822
      %v824 = vrot.slane %v650, 1
      %v825 = vrot.slane %v690, 1
      %v826 = vsel %vm570, %v824, %v825
      %827 = vrot.lane.b32.xlu0 %v805, 20
      %v828 = vpop.permute.xlu0 %827
      %829 = vrot.lane.b32.xlu0 %v808, 20
      %v830 = vpop.permute.xlu0 %829
      %831 = vrot.lane.b32.xlu0 %v811, 20
      %v832 = vpop.permute.xlu0 %831
      %833 = vrot.lane.b32.xlu0 %v814, 20
      %v834 = vpop.permute.xlu0 %833
      %835 = vrot.lane.b32.xlu0 %v817, 20
      %v836 = vpop.permute.xlu0 %835
      %837 = vrot.lane.b32.xlu0 %v820, 20
      %v838 = vpop.permute.xlu0 %837
      %839 = vrot.lane.b32.xlu0 %v823, 20
      %v840 = vpop.permute.xlu0 %839
      %841 = vrot.lane.b32.xlu0 %v826, 20
      %v842 = vpop.permute.xlu0 %841
      %v859 = vunpack.c.l.b16 %v369
      %v860 = vunpack.c.l.b16 %v370
      %v861 = vunpack.c.l.b16 %v372
      %v862 = vunpack.c.l.b16 %v373
      %v863 = vunpack.c.l.b16 %v375
      %v864 = vunpack.c.l.b16 %v376
      %v865 = vunpack.c.l.b16 %v378
      %v866 = vunpack.c.l.b16 %v379
      %v867 = vunpack.c.l.b16 %v381
      %v868 = vunpack.c.l.b16 %v382
      %v869 = vunpack.c.l.b16 %v384
      %v870 = vunpack.c.l.b16 %v385
      %v871 = vunpack.c.l.b16 %v387
      %v872 = vunpack.c.l.b16 %v388
      %v873 = vunpack.c.l.b16 %v390
      %v874 = vunpack.c.l.b16 %v391
      %v875 = vpack.c.b16 %v860, %v859
      %v876 = vpack.c.b16 %v862, %v861
      %v877 = vpack.c.b16 %v864, %v863
      %v878 = vpack.c.b16 %v866, %v865
      %v879 = vpack.c.b16 %v868, %v867
      %v880 = vpack.c.b16 %v870, %v869
      %v881 = vpack.c.b16 %v872, %v871
      %v882 = vpack.c.b16 %v874, %v873
      %883 = vrot.lane.b32.xlu0 %v875, 24
      %v884 = vpop.permute.xlu0 %883
      %885 = vrot.lane.b32.xlu0 %v876, 24
      %v886 = vpop.permute.xlu0 %885
      %887 = vrot.lane.b32.xlu0 %v877, 24
      %v888 = vpop.permute.xlu0 %887
      %889 = vrot.lane.b32.xlu0 %v878, 24
      %v890 = vpop.permute.xlu0 %889
      %891 = vrot.lane.b32.xlu0 %v879, 24
      %v892 = vpop.permute.xlu0 %891
      %893 = vrot.lane.b32.xlu0 %v880, 24
      %v894 = vpop.permute.xlu0 %893
      %895 = vrot.lane.b32.xlu0 %v881, 24
      %v896 = vpop.permute.xlu0 %895
      %897 = vrot.lane.b32.xlu0 %v882, 24
      %v898 = vpop.permute.xlu0 %897
      %v907 = vunpack.c.l.b16 %v371
      %v908 = vunpack.c.l.b16 %v374
      %v909 = vunpack.c.l.b16 %v377
      %v910 = vunpack.c.l.b16 %v380
      %v911 = vunpack.c.l.b16 %v383
      %v912 = vunpack.c.l.b16 %v386
      %v913 = vunpack.c.l.b16 %v389
      %v914 = vunpack.c.l.b16 %v392
      %v915 = vpack.c.b16 %v907, %v907
      %v916 = vpack.c.b16 %v908, %v908
      %v917 = vpack.c.b16 %v909, %v909
      %v918 = vpack.c.b16 %v910, %v910
      %v919 = vpack.c.b16 %v911, %v911
      %v920 = vpack.c.b16 %v912, %v912
      %v921 = vpack.c.b16 %v913, %v913
      %v922 = vpack.c.b16 %v914, %v914
      %v924 = vshrl.u32 %v875, 16
      %v926 = vshll.u32 %v875, 16
      %v928 = vrot.slane %v926, 1
      %v929 = vor.u32 %v924, %v928
      %v931 = vshll.u32 %v915, 16
      %v933 = vrot.slane %v931, 1
      %v934 = vsel %vm457, %v929, %v933
      %v936 = vshrl.u32 %v876, 16
      %v938 = vshll.u32 %v876, 16
      %v940 = vrot.slane %v938, 1
      %v941 = vor.u32 %v936, %v940
      %v943 = vshll.u32 %v916, 16
      %v945 = vrot.slane %v943, 1
      %v946 = vsel %vm457, %v941, %v945
      %v948 = vshrl.u32 %v877, 16
      %v950 = vshll.u32 %v877, 16
      %v952 = vrot.slane %v950, 1
      %v953 = vor.u32 %v948, %v952
      %v955 = vshll.u32 %v917, 16
      %v957 = vrot.slane %v955, 1
      %v958 = vsel %vm457, %v953, %v957
      %v960 = vshrl.u32 %v878, 16
      %v962 = vshll.u32 %v878, 16
      %v964 = vrot.slane %v962, 1
      %v965 = vor.u32 %v960, %v964
      %v967 = vshll.u32 %v918, 16
      %v969 = vrot.slane %v967, 1
      %v970 = vsel %vm457, %v965, %v969
      %v972 = vshrl.u32 %v879, 16
      %v974 = vshll.u32 %v879, 16
      %v976 = vrot.slane %v974, 1
      %v977 = vor.u32 %v972, %v976
      %v979 = vshll.u32 %v919, 16
      %v981 = vrot.slane %v979, 1
      %v982 = vsel %vm457, %v977, %v981
      %v984 = vshrl.u32 %v880, 16
      %v986 = vshll.u32 %v880, 16
      %v988 = vrot.slane %v986, 1
      %v989 = vor.u32 %v984, %v988
      %v991 = vshll.u32 %v920, 16
      %v993 = vrot.slane %v991, 1
      %v994 = vsel %vm457, %v989, %v993
      %v996 = vshrl.u32 %v881, 16
      %v998 = vshll.u32 %v881, 16
      %v1000 = vrot.slane %v998, 1
      %v1001 = vor.u32 %v996, %v1000
      %v1003 = vshll.u32 %v921, 16
      %v1005 = vrot.slane %v1003, 1
      %v1006 = vsel %vm457, %v1001, %v1005
      %v1008 = vshrl.u32 %v882, 16
      %v1010 = vshll.u32 %v882, 16
      %v1012 = vrot.slane %v1010, 1
      %v1013 = vor.u32 %v1008, %v1012
      %v1015 = vshll.u32 %v922, 16
      %v1017 = vrot.slane %v1015, 1
      %v1018 = vsel %vm457, %v1013, %v1017
      %1019 = vrot.lane.b32.xlu0 %v934, 28
      %v1020 = vpop.permute.xlu0 %1019
      %1021 = vrot.lane.b32.xlu0 %v946, 28
      %v1022 = vpop.permute.xlu0 %1021
      %1023 = vrot.lane.b32.xlu0 %v958, 28
      %v1024 = vpop.permute.xlu0 %1023
      %1025 = vrot.lane.b32.xlu0 %v970, 28
      %v1026 = vpop.permute.xlu0 %1025
      %1027 = vrot.lane.b32.xlu0 %v982, 28
      %v1028 = vpop.permute.xlu0 %1027
      %1029 = vrot.lane.b32.xlu0 %v994, 28
      %v1030 = vpop.permute.xlu0 %1029
      %1031 = vrot.lane.b32.xlu0 %v1006, 28
      %v1032 = vpop.permute.xlu0 %1031
      %1033 = vrot.lane.b32.xlu0 %v1018, 28
      %v1034 = vpop.permute.xlu0 %1033
      %v1035 = vrot.slane %v875, 1
      %v1036 = vrot.slane %v915, 1
      %v1037 = vsel %vm570, %v1035, %v1036
      %v1038 = vrot.slane %v876, 1
      %v1039 = vrot.slane %v916, 1
      %v1040 = vsel %vm570, %v1038, %v1039
      %v1041 = vrot.slane %v877, 1
      %v1042 = vrot.slane %v917, 1
      %v1043 = vsel %vm570, %v1041, %v1042
      %v1044 = vrot.slane %v878, 1
      %v1045 = vrot.slane %v918, 1
      %v1046 = vsel %vm570, %v1044, %v1045
      %v1047 = vrot.slane %v879, 1
      %v1048 = vrot.slane %v919, 1
      %v1049 = vsel %vm570, %v1047, %v1048
      %v1050 = vrot.slane %v880, 1
      %v1051 = vrot.slane %v920, 1
      %v1052 = vsel %vm570, %v1050, %v1051
      %v1053 = vrot.slane %v881, 1
      %v1054 = vrot.slane %v921, 1
      %v1055 = vsel %vm570, %v1053, %v1054
      %v1056 = vrot.slane %v882, 1
      %v1057 = vrot.slane %v922, 1
      %v1058 = vsel %vm570, %v1056, %v1057
      %1059 = vrot.lane.b32.xlu0 %v1037, 32
      %v1060 = vpop.permute.xlu0 %1059
      %1061 = vrot.lane.b32.xlu0 %v1040, 32
      %v1062 = vpop.permute.xlu0 %1061
      %1063 = vrot.lane.b32.xlu0 %v1043, 32
      %v1064 = vpop.permute.xlu0 %1063
      %1065 = vrot.lane.b32.xlu0 %v1046, 32
      %v1066 = vpop.permute.xlu0 %1065
      %1067 = vrot.lane.b32.xlu0 %v1049, 32
      %v1068 = vpop.permute.xlu0 %1067
      %1069 = vrot.lane.b32.xlu0 %v1052, 32
      %v1070 = vpop.permute.xlu0 %1069
      %1071 = vrot.lane.b32.xlu0 %v1055, 32
      %v1072 = vpop.permute.xlu0 %1071
      %1073 = vrot.lane.b32.xlu0 %v1058, 32
      %v1074 = vpop.permute.xlu0 %1073
      %vm1075 = vcmask 31744
      %v1077 = vsel %vm1075, %v425, %v555
      %v1079 = vsel %vm1075, %v426, %v557
      %v1081 = vsel %vm1075, %v427, %v559
      %v1083 = vsel %vm1075, %v428, %v561
      %v1085 = vsel %vm1075, %v429, %v563
      %v1087 = vsel %vm1075, %v430, %v565
      %v1089 = vsel %vm1075, %v431, %v567
      %v1091 = vsel %vm1075, %v432, %v569
      %vm1092 = vcmask 64512
      %v1094 = vsel %vm1092, %v1077, %v596
      %v1096 = vsel %vm1092, %v1079, %v598
      %v1098 = vsel %vm1092, %v1081, %v600
      %v1100 = vsel %vm1092, %v1083, %v602
      %v1102 = vsel %vm1092, %v1085, %v604
      %v1104 = vsel %vm1092, %v1087, %v606
      %v1106 = vsel %vm1092, %v1089, %v608
      %v1108 = vsel %vm1092, %v1091, %v610
      %vm1109 = vcmask 97280
      %v1111 = vsel %vm1109, %v1094, %v652
      %v1113 = vsel %vm1109, %v1096, %v654
      %v1115 = vsel %vm1109, %v1098, %v656
      %v1117 = vsel %vm1109, %v1100, %v658
      %v1119 = vsel %vm1109, %v1102, %v660
      %v1121 = vsel %vm1109, %v1104, %v662
      %v1123 = vsel %vm1109, %v1106, %v664
      %v1125 = vsel %vm1109, %v1108, %v666
      %vm1126 = vcmask 130048
      %v1128 = vsel %vm1126, %v1111, %v788
      %v1130 = vsel %vm1126, %v1113, %v790
      %v1132 = vsel %vm1126, %v1115, %v792
      %v1134 = vsel %vm1126, %v1117, %v794
      %v1136 = vsel %vm1126, %v1119, %v796
      %v1138 = vsel %vm1126, %v1121, %v798
      %v1140 = vsel %vm1126, %v1123, %v800
      %v1142 = vsel %vm1126, %v1125, %v802
      %vm1143 = vcmask 162816
      %v1145 = vsel %vm1143, %v1128, %v828
      %v1147 = vsel %vm1143, %v1130, %v830
      %v1149 = vsel %vm1143, %v1132, %v832
      %v1151 = vsel %vm1143, %v1134, %v834
      %v1153 = vsel %vm1143, %v1136, %v836
      %v1155 = vsel %vm1143, %v1138, %v838
      %v1157 = vsel %vm1143, %v1140, %v840
      %v1159 = vsel %vm1143, %v1142, %v842
      %vm1160 = vcmask 195584
      %v1162 = vsel %vm1160, %v1145, %v884
      %v1164 = vsel %vm1160, %v1147, %v886
      %v1166 = vsel %vm1160, %v1149, %v888
      %v1168 = vsel %vm1160, %v1151, %v890
      %v1170 = vsel %vm1160, %v1153, %v892
      %v1172 = vsel %vm1160, %v1155, %v894
      %v1174 = vsel %vm1160, %v1157, %v896
      %v1176 = vsel %vm1160, %v1159, %v898
      %vm1177 = vcmask 228352
      %v1179 = vsel %vm1177, %v1162, %v1020
      %v1181 = vsel %vm1177, %v1164, %v1022
      %v1183 = vsel %vm1177, %v1166, %v1024
      %v1185 = vsel %vm1177, %v1168, %v1026
      %v1187 = vsel %vm1177, %v1170, %v1028
      %v1189 = vsel %vm1177, %v1172, %v1030
      %v1191 = vsel %vm1177, %v1174, %v1032
      %v1193 = vsel %vm1177, %v1176, %v1034
      %vm1194 = vcmask 261120
      %v1196 = vsel %vm1194, %v1179, %v1060
      %v1198 = vsel %vm1194, %v1181, %v1062
      %v1200 = vsel %vm1194, %v1183, %v1064
      %v1202 = vsel %vm1194, %v1185, %v1066
      %v1204 = vsel %vm1194, %v1187, %v1068
      %v1206 = vsel %vm1194, %v1189, %v1070
      %v1208 = vsel %vm1194, %v1191, %v1072
      %v1210 = vsel %vm1194, %v1193, %v1074
      %v1211 = vld [vmem:[%s3] sm:$0xf]
      %v1212 = vld [vmem:[%s3 + $0x4] sm:$0xf]
      %v1213 = vld [vmem:[%s3 + $0x8] sm:$0xf]
      %v1214 = vld [vmem:[%s3 + $0xc] sm:$0xf]
      %v1215 = vld [vmem:[%s3 + $0x10] sm:$0x3]
      %v1221 = vunpack.c.l.b16 %v1211
      %v1222 = vunpack.c.l.b16 %v1212
      %v1223 = vunpack.c.l.b16 %v1213
      %v1224 = vunpack.c.l.b16 %v1214
      %v1225 = vunpack.c.l.b16 %v1215
      %v1226 = vpack.c.b16 %v1222, %v1221
      %v1227 = vpack.c.b16 %v1224, %v1223
      %v1228 = vpack.c.b16 %v1225, %v1225
      %vm1231 = vcmask 293888
      %v1232 = vsel %vm1231, %v1196, 0
      %v1234 = vsel %vm1231, %v1198, 0
      %v1236 = vsel %vm1231, %v1200, 0
      %v1238 = vsel %vm1231, %v1202, 0
      %v1240 = vsel %vm1231, %v1204, 0
      %v1242 = vsel %vm1231, %v1206, 0
      %v1244 = vsel %vm1231, %v1208, 0
      %v1246 = vsel %vm1231, %v1210, 0
      %vm1248 = vcmask 1041408
      %v1250 = vsel %vm1248, %v1228, 0
      %1252 = vmatpush.bf16.msra.mxu0 0
      %1253 = vmatpush.bf16.msra.mxu0 0
      %1254 = vmatpush.bf16.msra.mxu0 0
      %1255 = vmatpush.bf16.msra.mxu0 0
      %1256 = vmatpush.bf16.msra.mxu0 0
      %1257 = vmatpush.bf16.msra.mxu0 %v1250
      %1258 = vmatpush.bf16.msra.mxu0 %v1227
      %1259 = vmatpush.bf16.msra.mxu0 %v1226
      %1260 = vmatmul.bf16.gmra.mxu0 %v1232
      %v1261 = vpop.f32.mrf.mxu0
      %v1262 = vadd.f32 0.0, %v1261
      %v1263 = vpop.f32.mrf.mxu0
      %v1264 = vadd.f32 0.0, %v1263
      %1265 = vmatmul.bf16.gmra.mxu0 %v1234
      %v1266 = vpop.f32.mrf.mxu0
      %v1267 = vadd.f32 0.0, %v1266
      %v1268 = vpop.f32.mrf.mxu0
      %v1269 = vadd.f32 0.0, %v1268
      %1270 = vmatmul.bf16.gmra.mxu0 %v1236
      %v1271 = vpop.f32.mrf.mxu0
      %v1272 = vadd.f32 0.0, %v1271
      %v1273 = vpop.f32.mrf.mxu0
      %v1274 = vadd.f32 0.0, %v1273
      %1275 = vmatmul.bf16.gmra.mxu0 %v1238
      %v1276 = vpop.f32.mrf.mxu0
      %v1277 = vadd.f32 0.0, %v1276
      %v1278 = vpop.f32.mrf.mxu0
      %v1279 = vadd.f32 0.0, %v1278
      %1280 = vmatmul.bf16.gmra.mxu0 %v1240
      %v1281 = vpop.f32.mrf.mxu0
      %v1282 = vadd.f32 0.0, %v1281
      %v1283 = vpop.f32.mrf.mxu0
      %v1284 = vadd.f32 0.0, %v1283
      %1285 = vmatmul.bf16.gmra.mxu0 %v1242
      %v1286 = vpop.f32.mrf.mxu0
      %v1287 = vadd.f32 0.0, %v1286
      %v1288 = vpop.f32.mrf.mxu0
      %v1289 = vadd.f32 0.0, %v1288
      %1290 = vmatmul.bf16.gmra.mxu0 %v1244
      %v1291 = vpop.f32.mrf.mxu0
      %v1292 = vadd.f32 0.0, %v1291
      %v1293 = vpop.f32.mrf.mxu0
      %v1294 = vadd.f32 0.0, %v1293
      %1295 = vmatmul.bf16.gmra.mxu0 %v1246
      %v1296 = vpop.f32.mrf.mxu0
      %v1297 = vadd.f32 0.0, %v1296
      %v1298 = vpop.f32.mrf.mxu0
      %v1299 = vadd.f32 0.0, %v1298
      %1300 = vdwg.mxu0
      %vm1301 = vcmask 523264
      %1302 = vst.msk [vmem:[%s318] sm:$0xff] %vm1301, %v1262
      %1303 = vst.msk [vmem:[%s318 + $0x8] sm:$0xff] %vm1301, %v1264
      %1304 = vst.msk [vmem:[%s318 + $0x10] sm:$0xff] %vm1301, %v1267
      %1305 = vst.msk [vmem:[%s318 + $0x18] sm:$0xff] %vm1301, %v1269
      %1306 = vst.msk [vmem:[%s318 + $0x20] sm:$0xff] %vm1301, %v1272
      %1307 = vst.msk [vmem:[%s318 + $0x28] sm:$0xff] %vm1301, %v1274
      %1308 = vst.msk [vmem:[%s318 + $0x30] sm:$0xff] %vm1301, %v1277
      %1309 = vst.msk [vmem:[%s318 + $0x38] sm:$0xff] %vm1301, %v1279
      %1310 = vst.msk [vmem:[%s318 + $0x40] sm:$0xff] %vm1301, %v1282
      %1311 = vst.msk [vmem:[%s318 + $0x48] sm:$0xff] %vm1301, %v1284
      %1312 = vst.msk [vmem:[%s318 + $0x50] sm:$0xff] %vm1301, %v1287
      %1313 = vst.msk [vmem:[%s318 + $0x58] sm:$0xff] %vm1301, %v1289
      %1314 = vst.msk [vmem:[%s318 + $0x60] sm:$0xff] %vm1301, %v1292
      %1315 = vst.msk [vmem:[%s318 + $0x68] sm:$0xff] %vm1301, %v1294
      %1316 = vst.msk [vmem:[%s318 + $0x70] sm:$0xff] %vm1301, %v1297
      %1317 = vst.msk [vmem:[%s318 + $0x78] sm:$0xff] %vm1301, %v1299
      %s1318 = smul.u32 8, %s20
      %p1319 = scmp.lt.s32.totalorder %s19, 1
      %s1320 = scalar_select %p1319, %s19, 1
      %p1321 = scmp.lt.s32.totalorder %s1318, 15
      %s1322 = scalar_select %p1321, %s1318, 15
      %s1323 = smul.addr %s1322, 2
      %s1324 = smul.addr %s1320, 32
      %s1325 = sadd.s32 %s1323, %s1324
      %s1326 = smul.addr %s1325, 8
      %s1327 = scalar_lea.vmem %s4, %s1326
      // Predicated region
      $region37: #{unet_encoder_forward.6} parent=35 // pred_check
        %p1328 = pneg %p152
      $region38: #{unet_encoder_forward.6} parent=35 // pred_check_branch
        %1330 = sbr.rel (%p1328) target = $region40
      $region39: #{unet_encoder_forward.6} parent=35 // pred_region
        %s1331 = smul.u32 8, %s20
      $region40: #{unet_encoder_forward.6} parent=35 // pred_fallthru
        _
    $region36: #{unet_encoder_forward.6} parent=5 // pred_fallthru
      _
    %p1332 = scmp.le.s32.totalorder 2, %s10
    // Predicated region
    $region41: #{unet_encoder_forward.6} parent=5 // pred_check
      %p1333 = pneg %p1332
    $region42: #{unet_encoder_forward.6} parent=5 // pred_check_branch
      %1335 = sbr.rel (%p1333) target = $region44
    $region43: #{unet_encoder_forward.6} parent=5 // pred_region
      %s1336 = ssub.s32 %s10, 2
      // Predicated region
      $region45: #{unet_encoder_forward.6} parent=43 // pred_check
        %p1337 = pneg %p158
      $region46: #{unet_encoder_forward.6} parent=43 // pred_check_branch
        %1339 = sbr.rel (%p1337) target = $region48
      $region47: #{unet_encoder_forward.6} parent=43 // pred_region
        %s1340 = smul.u32 8, %s22
        %p1341 = scmp.lt.s32.totalorder %s21, 1
        %s1342 = scalar_select %p1341, %s21, 1
        %p1343 = scmp.lt.s32.totalorder %s1340, 15
        %s1344 = scalar_select %p1343, %s1340, 15
        %s1345 = smul.addr %s1344, 2
        %s1346 = smul.addr %s1342, 32
        %s1347 = sadd.s32 %s1345, %s1346
        %s1348 = smul.addr %s1347, 8
        %s1349 = scalar_lea.vmem %s4, %s1348
      $region48: #{unet_encoder_forward.6} parent=43 // pred_fallthru
        _
    $region44: #{unet_encoder_forward.6} parent=5 // pred_fallthru
      _
  $region6: #{unet_encoder_forward.6} parent=0 // loop_footer
    %s14 = sadd.s32 1, %s10
  $region7: #{unet_encoder_forward.6} parent=0 // loop_footer_branch
    %9 = sbr.rel target = $region3
  $region8: #{unet_encoder_forward.6} parent=0 // loop_exit
    _

// kernel: unet_encoder_forward.11
$region0: #{unet_encoder_forward.11}
  #allocation0 [shape = 'u32[]', space=smem, size = 0x4, offset = 0x4, fixed_abs, tag = 'smem constant byte address 0x4 - core index']
  #allocation1 [shape = 'u32[72,128]{1,0:T(1,128)}', space=vmem, size = 0x9000, scoped, tag = 'internal scratch']
  %s0 = inlined_call_operand.vmem [shape: f32[512,64], index: 0, kind: input, shape index: {}]
  %s1 = inlined_call_operand.vmem [shape: f32[1,64], index: 1, kind: input, shape index: {}]
  %s2 = inlined_call_operand.vmem [shape: f32[1,64], index: 2, kind: input, shape index: {}]
  %s3 = inlined_call_operand.vmem [shape: f32[512,64], index: 3, kind: output, shape index: {}]
  %s4 = sld [smem:[#allocation0]]
  $region45: #{unet_encoder_forward.11} parent=0
    _
  %s6 = ssub.s32 1, %s4
  %s7 = scalar_select 0, %s6, %s4
  loop: start=0, step=1, limit=4
  $region2: #{unet_encoder_forward.11} parent=0 // loop_pre_header
    _
  $region3: #{unet_encoder_forward.11} parent=0 // loop_header
    %s9 = sphi 0, %s13
    %p10 = scmp.ge.s32.totalorder %s9, 4
    %s19 = sphi 0, %s21
    %s22 = sphi 0, %s19
    %s23 = sphi 0, %s22
    %s39 = sphi 0, %s23
    %s43 = sphi 0, %s43
    %s45 = sphi 0, %s43
    %s46 = sphi 0, %s45
    %s60 = sphi 0, %s46
    %s64 = sphi 0, %s64
    %s66 = sphi 0, %s64
    %s67 = sphi 0, %s66
    %s81 = sphi 0, %s67
    %s87 = sphi 0, %s89
    %s90 = sphi 0, %s87
    %s91 = sphi 0, %s90
    %s107 = sphi 0, %s91
  $region4: #{unet_encoder_forward.11} parent=0 // loop_header_branch
    %12 = sbr.rel (%p10) target = $region8
  $region5: #{unet_encoder_forward.11} parent=0 // loop_body
    %s14 = ssub.s32 %s9, 1
    %s15 = ssub.s32 %s9, 2
    %s16 = sadd.s32 %s9, 1
    %s17 = ssub.s32 %s9, %s16
    %p18 = scmp.eq.s32.totalorder %s17, 0
    %s20 = sadd.s32 %s19, 1
    %s21 = scalar_select %p18, %s19, %s20
    %p24 = pneg %p18
    %p25 = scmp.eq.s32.totalorder %s9, 1
    %p26 = por %p24, %p25
    %p27 = scmp.ne.s32.totalorder %s19, %s22
    %p28 = scmp.eq.s32.totalorder %s9, 0
    %p29 = por %p27, %p28
    %p30 = scmp.ne.s32.totalorder %s19, %s22
    %p31 = scmp.eq.s32.totalorder %s14, 1
    %p32 = por %p30, %p31
    %p33 = scmp.ne.s32.totalorder %s22, %s23
    %p34 = scmp.eq.s32.totalorder %s14, 0
    %p35 = por %p33, %p34
    %p36 = scmp.ne.s32.totalorder %s22, %s23
    %p37 = scmp.eq.s32.totalorder %s15, 1
    %p38 = por %p36, %p37
    %p40 = scmp.ne.s32.totalorder %s23, %s39
    %p41 = scmp.eq.s32.totalorder %s15, 0
    %p42 = por %p40, %p41
    %s44 = sadd.s32 %s43, 1
    %p47 = scmp.eq.s32.totalorder %s9, 1
    %p48 = scmp.ne.s32.totalorder %s43, %s45
    %p49 = scmp.eq.s32.totalorder %s9, 0
    %p50 = por %p48, %p49
    %p51 = scmp.ne.s32.totalorder %s43, %s45
    %p52 = scmp.eq.s32.totalorder %s14, 1
    %p53 = por %p51, %p52
    %p54 = scmp.ne.s32.totalorder %s45, %s46
    %p55 = scmp.eq.s32.totalorder %s14, 0
    %p56 = por %p54, %p55
    %p57 = scmp.ne.s32.totalorder %s45, %s46
    %p58 = scmp.eq.s32.totalorder %s15, 1
    %p59 = por %p57, %p58
    %p61 = scmp.ne.s32.totalorder %s46, %s60
    %p62 = scmp.eq.s32.totalorder %s15, 0
    %p63 = por %p61, %p62
    %s65 = sadd.s32 %s64, 1
    %p68 = scmp.eq.s32.totalorder %s9, 1
    %p69 = scmp.ne.s32.totalorder %s64, %s66
    %p70 = scmp.eq.s32.totalorder %s9, 0
    %p71 = por %p69, %p70
    %p72 = scmp.ne.s32.totalorder %s64, %s66
    %p73 = scmp.eq.s32.totalorder %s14, 1
    %p74 = por %p72, %p73
    %p75 = scmp.ne.s32.totalorder %s66, %s67
    %p76 = scmp.eq.s32.totalorder %s14, 0
    %p77 = por %p75, %p76
    %p78 = scmp.ne.s32.totalorder %s66, %s67
    %p79 = scmp.eq.s32.totalorder %s15, 1
    %p80 = por %p78, %p79
    %p82 = scmp.ne.s32.totalorder %s67, %s81
    %p83 = scmp.eq.s32.totalorder %s15, 0
    %p84 = por %p82, %p83
    %s85 = ssub.s32 %s9, %s16
    %p86 = scmp.eq.s32.totalorder %s85, 0
    %s88 = sadd.s32 %s87, 1
    %s89 = scalar_select %p86, %s87, %s88
    %p92 = pneg %p86
    %p93 = scmp.eq.s32.totalorder %s9, 1
    %p94 = por %p92, %p93
    %p95 = scmp.ne.s32.totalorder %s87, %s90
    %p96 = scmp.eq.s32.totalorder %s9, 0
    %p97 = por %p95, %p96
    %p98 = scmp.ne.s32.totalorder %s87, %s90
    %p99 = scmp.eq.s32.totalorder %s14, 1
    %p100 = por %p98, %p99
    %p101 = scmp.ne.s32.totalorder %s90, %s91
    %p102 = scmp.eq.s32.totalorder %s14, 0
    %p103 = por %p101, %p102
    %p104 = scmp.ne.s32.totalorder %s90, %s91
    %p105 = scmp.eq.s32.totalorder %s15, 1
    %p106 = por %p104, %p105
    %p108 = scmp.ne.s32.totalorder %s91, %s107
    %p109 = scmp.eq.s32.totalorder %s15, 0
    %p110 = por %p108, %p109
    %p111 = scmp.le.s32.totalorder 1, %s9
    %p112 = scmp.lt.s32.totalorder %s9, 3
    %p113 = pnand %p111, %p112
    %p114 = pneg %p113
    // Predicated region
    $region9: #{unet_encoder_forward.11} parent=5 // pred_check
      _
    $region10: #{unet_encoder_forward.11} parent=5 // pred_check_branch
      %116 = sbr.rel (%p113) target = $region12
    $region11: #{unet_encoder_forward.11} parent=5 // pred_region
      %s117 = ssub.s32 %s9, 1
      // Predicated region
      $region13: #{unet_encoder_forward.11} parent=11 // pred_check
        %p118 = pneg %p56
      $region14: #{unet_encoder_forward.11} parent=11 // pred_check_branch
        %120 = sbr.rel (%p118) target = $region16
      $region15: #{unet_encoder_forward.11} parent=11 // pred_region
        _
      $region16: #{unet_encoder_forward.11} parent=11 // pred_fallthru
        _
      // Predicated region
      $region17: #{unet_encoder_forward.11} parent=11 // pred_check
        %p121 = pneg %p77
      $region18: #{unet_encoder_forward.11} parent=11 // pred_check_branch
        %123 = sbr.rel (%p121) target = $region20
      $region19: #{unet_encoder_forward.11} parent=11 // pred_region
        _
      $region20: #{unet_encoder_forward.11} parent=11 // pred_fallthru
        _
    $region12: #{unet_encoder_forward.11} parent=5 // pred_fallthru
      _
    %p124 = scmp.lt.s32.totalorder %s9, 2
    // Predicated region
    $region21: #{unet_encoder_forward.11} parent=5 // pred_check
      %p125 = pneg %p124
    $region22: #{unet_encoder_forward.11} parent=5 // pred_check_branch
      %127 = sbr.rel (%p125) target = $region24
    $region23: #{unet_encoder_forward.11} parent=5 // pred_region
      // Predicated region
      $region25: #{unet_encoder_forward.11} parent=23 // pred_check
        %p128 = pneg %p29
      $region26: #{unet_encoder_forward.11} parent=23 // pred_check_branch
        %130 = sbr.rel (%p128) target = $region28
      $region27: #{unet_encoder_forward.11} parent=23 // pred_region
        %s131 = smul.u32 32, %s9
        %p132 = scmp.lt.s32.totalorder %s131, 63
        %s133 = scalar_select %p132, %s131, 63
        %s134 = smul.addr %s133, 8
        %s135 = scalar_lea.vmem %s0, %s134
        %s136 = smul.u32 32, %s9
      $region28: #{unet_encoder_forward.11} parent=23 // pred_fallthru
        _
    $region24: #{unet_encoder_forward.11} parent=5 // pred_fallthru
      _
    %p137 = scmp.le.s32.totalorder 1, %s9
    %p138 = scmp.lt.s32.totalorder %s9, 3
    %p139 = pnand %p137, %p138
    %p140 = pneg %p139
    // Predicated region
    $region29: #{unet_encoder_forward.11} parent=5 // pred_check
      _
    $region30: #{unet_encoder_forward.11} parent=5 // pred_check_branch
      %142 = sbr.rel (%p139) target = $region32
    $region31: #{unet_encoder_forward.11} parent=5 // pred_region
      %s143 = ssub.s32 %s9, 1
      %s144 = smul.u32 32, %s14
      %p145 = scmp.lt.s32.totalorder %s144, 63
      %s146 = scalar_select %p145, %s144, 63
      %s147 = smul.addr %s146, 8
      %s148 = scalar_lea.vmem %s0, %s147
      %p149 = pneg %p35
      %p150 = pneg %p32
      %p151 = pneg %p56
      %p152 = pneg %p53
      %p153 = pneg %p77
      %p154 = pneg %p74
      %p155 = pneg %p103
      %p156 = pneg %p100
      %s157 = smul.u32 32, %s14
      %p158 = scmp.lt.s32.totalorder %s157, 63
      %s159 = scalar_select %p158, %s157, 63
      %s160 = smul.addr %s159, 8
      %s161 = scalar_lea.vmem %s3, %s160
      %s162 = smul.u32 32, %s14
      %p163 = scmp.lt.s32.totalorder %s162, 63
      %s164 = scalar_select %p163, %s162, 63
      %s165 = smul.addr %s164, 8
      %s166 = scalar_lea.vmem %s0, %s165
      %s167 = smul.u32 32, %s14
      %s168 = smul.u32 32, %s14
      %p169 = scmp.lt.s32.totalorder %s168, 63
      %s170 = scalar_select %p169, %s168, 63
      %s171 = smul.addr %s170, 8
      %s172 = scalar_lea.vmem %s3, %s171
      %s173 = smul.u32 32, %s14
      %v174 = vld [vmem:[%s166] sm:$0xff]
      %v175 = vld [vmem:[%s166 + $0x8] sm:$0xff]
      %v176 = vld [vmem:[%s166 + $0x10] sm:$0xff]
      %v177 = vld [vmem:[%s166 + $0x18] sm:$0xff]
      %v178 = vld [vmem:[%s166 + $0x20] sm:$0xff]
      %v179 = vld [vmem:[%s166 + $0x28] sm:$0xff]
      %v180 = vld [vmem:[%s166 + $0x30] sm:$0xff]
      %v181 = vld [vmem:[%s166 + $0x38] sm:$0xff]
      %v182 = vld [vmem:[%s166 + $0x40] sm:$0xff]
      %v183 = vld [vmem:[%s166 + $0x48] sm:$0xff]
      %v184 = vld [vmem:[%s166 + $0x50] sm:$0xff]
      %v185 = vld [vmem:[%s166 + $0x58] sm:$0xff]
      %v186 = vld [vmem:[%s166 + $0x60] sm:$0xff]
      %v187 = vld [vmem:[%s166 + $0x68] sm:$0xff]
      %v188 = vld [vmem:[%s166 + $0x70] sm:$0xff]
      %v189 = vld [vmem:[%s166 + $0x78] sm:$0xff]
      %v190 = vld [vmem:[%s166 + $0x80] sm:$0xff]
      %v191 = vld [vmem:[%s166 + $0x88] sm:$0xff]
      %v192 = vld [vmem:[%s166 + $0x90] sm:$0xff]
      %v193 = vld [vmem:[%s166 + $0x98] sm:$0xff]
      %v194 = vld [vmem:[%s166 + $0xa0] sm:$0xff]
      %v195 = vld [vmem:[%s166 + $0xa8] sm:$0xff]
      %v196 = vld [vmem:[%s166 + $0xb0] sm:$0xff]
      %v197 = vld [vmem:[%s166 + $0xb8] sm:$0xff]
      %v198 = vld [vmem:[%s166 + $0xc0] sm:$0xff]
      %v199 = vld [vmem:[%s166 + $0xc8] sm:$0xff]
      %v200 = vld [vmem:[%s166 + $0xd0] sm:$0xff]
      %v201 = vld [vmem:[%s166 + $0xd8] sm:$0xff]
      %v202 = vld [vmem:[%s166 + $0xe0] sm:$0xff]
      %v203 = vld [vmem:[%s166 + $0xe8] sm:$0xff]
      %v204 = vld [vmem:[%s166 + $0xf0] sm:$0xff]
      %v205 = vld [vmem:[%s166 + $0xf8] sm:$0xff]
      %v206 = vld [vmem:[%s1] sm:$0x1]
      %v208 = vperm.slane %v206, 0
      %v210 = vmul.f32 %v174, %v208
      %v211 = vmul.f32 %v175, %v208
      %v212 = vmul.f32 %v176, %v208
      %v213 = vmul.f32 %v177, %v208
      %v214 = vmul.f32 %v178, %v208
      %v215 = vmul.f32 %v179, %v208
      %v216 = vmul.f32 %v180, %v208
      %v217 = vmul.f32 %v181, %v208
      %v218 = vmul.f32 %v182, %v208
      %v219 = vmul.f32 %v183, %v208
      %v220 = vmul.f32 %v184, %v208
      %v221 = vmul.f32 %v185, %v208
      %v222 = vmul.f32 %v186, %v208
      %v223 = vmul.f32 %v187, %v208
      %v224 = vmul.f32 %v188, %v208
      %v225 = vmul.f32 %v189, %v208
      %v226 = vmul.f32 %v190, %v208
      %v227 = vmul.f32 %v191, %v208
      %v228 = vmul.f32 %v192, %v208
      %v229 = vmul.f32 %v193, %v208
      %v230 = vmul.f32 %v194, %v208
      %v231 = vmul.f32 %v195, %v208
      %v232 = vmul.f32 %v196, %v208
      %v233 = vmul.f32 %v197, %v208
      %v234 = vmul.f32 %v198, %v208
      %v235 = vmul.f32 %v199, %v208
      %v236 = vmul.f32 %v200, %v208
      %v237 = vmul.f32 %v201, %v208
      %v238 = vmul.f32 %v202, %v208
      %v239 = vmul.f32 %v203, %v208
      %v240 = vmul.f32 %v204, %v208
      %v241 = vmul.f32 %v205, %v208
      %v242 = vld [vmem:[%s2] sm:$0x1]
      %v244 = vperm.slane %v242, 0
      %v246 = vadd.f32 %v210, %v244
      %v247 = vadd.f32 %v211, %v244
      %v248 = vadd.f32 %v212, %v244
      %v249 = vadd.f32 %v213, %v244
      %v250 = vadd.f32 %v214, %v244
      %v251 = vadd.f32 %v215, %v244
      %v252 = vadd.f32 %v216, %v244
      %v253 = vadd.f32 %v217, %v244
      %v254 = vadd.f32 %v218, %v244
      %v255 = vadd.f32 %v219, %v244
      %v256 = vadd.f32 %v220, %v244
      %v257 = vadd.f32 %v221, %v244
      %v258 = vadd.f32 %v222, %v244
      %v259 = vadd.f32 %v223, %v244
      %v260 = vadd.f32 %v224, %v244
      %v261 = vadd.f32 %v225, %v244
      %v262 = vadd.f32 %v226, %v244
      %v263 = vadd.f32 %v227, %v244
      %v264 = vadd.f32 %v228, %v244
      %v265 = vadd.f32 %v229, %v244
      %v266 = vadd.f32 %v230, %v244
      %v267 = vadd.f32 %v231, %v244
      %v268 = vadd.f32 %v232, %v244
      %v269 = vadd.f32 %v233, %v244
      %v270 = vadd.f32 %v234, %v244
      %v271 = vadd.f32 %v235, %v244
      %v272 = vadd.f32 %v236, %v244
      %v273 = vadd.f32 %v237, %v244
      %v274 = vadd.f32 %v238, %v244
      %v275 = vadd.f32 %v239, %v244
      %v276 = vadd.f32 %v240, %v244
      %v277 = vadd.f32 %v241, %v244
      %v278 = vmax.f32 %v246, 0.0
      %v279 = vmax.f32 %v247, 0.0
      %v280 = vmax.f32 %v248, 0.0
      %v281 = vmax.f32 %v249, 0.0
      %v282 = vmax.f32 %v250, 0.0
      %v283 = vmax.f32 %v251, 0.0
      %v284 = vmax.f32 %v252, 0.0
      %v285 = vmax.f32 %v253, 0.0
      %v286 = vmax.f32 %v254, 0.0
      %v287 = vmax.f32 %v255, 0.0
      %v288 = vmax.f32 %v256, 0.0
      %v289 = vmax.f32 %v257, 0.0
      %v290 = vmax.f32 %v258, 0.0
      %v291 = vmax.f32 %v259, 0.0
      %v292 = vmax.f32 %v260, 0.0
      %v293 = vmax.f32 %v261, 0.0
      %v294 = vmax.f32 %v262, 0.0
      %v295 = vmax.f32 %v263, 0.0
      %v296 = vmax.f32 %v264, 0.0
      %v297 = vmax.f32 %v265, 0.0
      %v298 = vmax.f32 %v266, 0.0
      %v299 = vmax.f32 %v267, 0.0
      %v300 = vmax.f32 %v268, 0.0
      %v301 = vmax.f32 %v269, 0.0
      %v302 = vmax.f32 %v270, 0.0
      %v303 = vmax.f32 %v271, 0.0
      %v304 = vmax.f32 %v272, 0.0
      %v305 = vmax.f32 %v273, 0.0
      %v306 = vmax.f32 %v274, 0.0
      %v307 = vmax.f32 %v275, 0.0
      %v308 = vmax.f32 %v276, 0.0
      %v309 = vmax.f32 %v277, 0.0
      %vm310 = vcmask 523264
      %311 = vst.msk [vmem:[%s172] sm:$0xff] %vm310, %v278
      %312 = vst.msk [vmem:[%s172 + $0x8] sm:$0xff] %vm310, %v279
      %313 = vst.msk [vmem:[%s172 + $0x10] sm:$0xff] %vm310, %v280
      %314 = vst.msk [vmem:[%s172 + $0x18] sm:$0xff] %vm310, %v281
      %315 = vst.msk [vmem:[%s172 + $0x20] sm:$0xff] %vm310, %v282
      %316 = vst.msk [vmem:[%s172 + $0x28] sm:$0xff] %vm310, %v283
      %317 = vst.msk [vmem:[%s172 + $0x30] sm:$0xff] %vm310, %v284
      %318 = vst.msk [vmem:[%s172 + $0x38] sm:$0xff] %vm310, %v285
      %319 = vst.msk [vmem:[%s172 + $0x40] sm:$0xff] %vm310, %v286
      %320 = vst.msk [vmem:[%s172 + $0x48] sm:$0xff] %vm310, %v287
      %321 = vst.msk [vmem:[%s172 + $0x50] sm:$0xff] %vm310, %v288
      %322 = vst.msk [vmem:[%s172 + $0x58] sm:$0xff] %vm310, %v289
      %323 = vst.msk [vmem:[%s172 + $0x60] sm:$0xff] %vm310, %v290
      %324 = vst.msk [vmem:[%s172 + $0x68] sm:$0xff] %vm310, %v291
      %325 = vst.msk [vmem:[%s172 + $0x70] sm:$0xff] %vm310, %v292
      %326 = vst.msk [vmem:[%s172 + $0x78] sm:$0xff] %vm310, %v293
      %327 = vst.msk [vmem:[%s172 + $0x80] sm:$0xff] %vm310, %v294
      %328 = vst.msk [vmem:[%s172 + $0x88] sm:$0xff] %vm310, %v295
      %329 = vst.msk [vmem:[%s172 + $0x90] sm:$0xff] %vm310, %v296
      %330 = vst.msk [vmem:[%s172 + $0x98] sm:$0xff] %vm310, %v297
      %331 = vst.msk [vmem:[%s172 + $0xa0] sm:$0xff] %vm310, %v298
      %332 = vst.msk [vmem:[%s172 + $0xa8] sm:$0xff] %vm310, %v299
      %333 = vst.msk [vmem:[%s172 + $0xb0] sm:$0xff] %vm310, %v300
      %334 = vst.msk [vmem:[%s172 + $0xb8] sm:$0xff] %vm310, %v301
      %335 = vst.msk [vmem:[%s172 + $0xc0] sm:$0xff] %vm310, %v302
      %336 = vst.msk [vmem:[%s172 + $0xc8] sm:$0xff] %vm310, %v303
      %337 = vst.msk [vmem:[%s172 + $0xd0] sm:$0xff] %vm310, %v304
      %338 = vst.msk [vmem:[%s172 + $0xd8] sm:$0xff] %vm310, %v305
      %339 = vst.msk [vmem:[%s172 + $0xe0] sm:$0xff] %vm310, %v306
      %340 = vst.msk [vmem:[%s172 + $0xe8] sm:$0xff] %vm310, %v307
      %341 = vst.msk [vmem:[%s172 + $0xf0] sm:$0xff] %vm310, %v308
      %342 = vst.msk [vmem:[%s172 + $0xf8] sm:$0xff] %vm310, %v309
      %s343 = smul.u32 32, %s14
      %p344 = scmp.lt.s32.totalorder %s343, 63
      %s345 = scalar_select %p344, %s343, 63
      %s346 = smul.addr %s345, 8
      %s347 = scalar_lea.vmem %s3, %s346
      // Predicated region
      $region33: #{unet_encoder_forward.11} parent=31 // pred_check
        %p348 = pneg %p100
      $region34: #{unet_encoder_forward.11} parent=31 // pred_check_branch
        %350 = sbr.rel (%p348) target = $region36
      $region35: #{unet_encoder_forward.11} parent=31 // pred_region
        %s351 = smul.u32 32, %s14
      $region36: #{unet_encoder_forward.11} parent=31 // pred_fallthru
        _
    $region32: #{unet_encoder_forward.11} parent=5 // pred_fallthru
      _
    %p352 = scmp.le.s32.totalorder 2, %s9
    // Predicated region
    $region37: #{unet_encoder_forward.11} parent=5 // pred_check
      %p353 = pneg %p352
    $region38: #{unet_encoder_forward.11} parent=5 // pred_check_branch
      %355 = sbr.rel (%p353) target = $region40
    $region39: #{unet_encoder_forward.11} parent=5 // pred_region
      %s356 = ssub.s32 %s9, 2
      // Predicated region
      $region41: #{unet_encoder_forward.11} parent=39 // pred_check
        %p357 = pneg %p106
      $region42: #{unet_encoder_forward.11} parent=39 // pred_check_branch
        %359 = sbr.rel (%p357) target = $region44
      $region43: #{unet_encoder_forward.11} parent=39 // pred_region
        %s360 = smul.u32 32, %s15
        %p361 = scmp.lt.s32.totalorder %s360, 63
        %s362 = scalar_select %p361, %s360, 63
        %s363 = smul.addr %s362, 8
        %s364 = scalar_lea.vmem %s3, %s363
      $region44: #{unet_encoder_forward.11} parent=39 // pred_fallthru
        _
    $region40: #{unet_encoder_forward.11} parent=5 // pred_fallthru
      _
  $region6: #{unet_encoder_forward.11} parent=0 // loop_footer
    %s13 = sadd.s32 1, %s9
  $region7: #{unet_encoder_forward.11} parent=0 // loop_footer_branch
    %8 = sbr.rel target = $region3
  $region8: #{unet_encoder_forward.11} parent=0 // loop_exit
    _

// kernel: unet_encoder_forward.9
$region0: #{unet_encoder_forward.9}
  #allocation0 [shape = 'u32[]', space=smem, size = 0x4, offset = 0x4, fixed_abs, tag = 'smem constant byte address 0x4 - core index']
  #allocation1 [shape = 'u32[72,128]{1,0:T(1,128)}', space=vmem, size = 0x9000, scoped, tag = 'internal scratch']
  %s0 = inlined_call_operand.vmem [shape: bf16[2,16,18,64], index: 0, kind: input, shape index: {}]
  %s1 = inlined_call_operand.vmem [shape: bf16[2,16,18,64], index: 1, kind: input, shape index: {}]
  %s2 = inlined_call_operand.vmem [shape: bf16[2,16,18,64], index: 2, kind: input, shape index: {}]
  %s3 = inlined_call_operand.vmem [shape: bf16[576,64], index: 3, kind: input, shape index: {}]
  %s4 = inlined_call_operand.vmem [shape: f32[2,16,16,64], index: 4, kind: output, shape index: {}]
  %s5 = sld [smem:[#allocation0]]
  $region49: #{unet_encoder_forward.9} parent=0
    _
  %s7 = ssub.s32 1, %s5
  %s8 = scalar_select 0, %s7, %s5
  loop: start=0, step=1, limit=6
  $region2: #{unet_encoder_forward.9} parent=0 // loop_pre_header
    _
  $region3: #{unet_encoder_forward.9} parent=0 // loop_header
    %s10 = sphi 0, %s14
    %p11 = scmp.ge.s32.totalorder %s10, 6
    %s17 = sphi 0, %s29
    %s18 = sphi 0, %s25
    %s19 = sphi 0, %s17
    %s20 = sphi 0, %s18
    %s21 = sphi 0, %s19
    %s22 = sphi 0, %s20
    %s34 = sphi 0, %s36
    %s37 = sphi 0, %s34
    %s38 = sphi 0, %s37
    %s54 = sphi 0, %s38
    %s62 = sphi 0, %s64
    %s65 = sphi 0, %s62
    %s66 = sphi 0, %s65
    %s82 = sphi 0, %s66
    %s90 = sphi 0, %s92
    %s93 = sphi 0, %s90
    %s94 = sphi 0, %s93
    %s110 = sphi 0, %s94
    %s114 = sphi 0, %s114
    %s116 = sphi 0, %s114
    %s117 = sphi 0, %s116
    %s131 = sphi 0, %s117
    %s139 = sphi 0, %s141
    %s142 = sphi 0, %s139
    %s143 = sphi 0, %s142
    %s159 = sphi 0, %s143
  $region4: #{unet_encoder_forward.9} parent=0 // loop_header_branch
    %13 = sbr.rel (%p11) target = $region8
  $region5: #{unet_encoder_forward.9} parent=0 // loop_body
    %s15 = ssub.s32 %s10, 1
    %s16 = ssub.s32 %s10, 2
    %s23 = sadd.s32 1, %s18
    %p24 = scmp.ge.s32.totalorder %s23, 2
    %s25 = scalar_select %p24, 0, %s23
    %s26 = sadd.s32 1, %s17
    %s27 = scalar_select %p24, %s26, %s17
    %p28 = scmp.ge.s32.totalorder %s27, 2
    %s29 = scalar_select %p28, 0, %s27
    %s30 = ssub.s32 %s17, %s29
    %s31 = ssub.s32 %s18, %s25
    %s32 = sor.u32 %s30, %s31
    %p33 = scmp.eq.s32.totalorder %s32, 0
    %s35 = sadd.s32 %s34, 1
    %s36 = scalar_select %p33, %s34, %s35
    %p39 = pneg %p33
    %p40 = scmp.eq.s32.totalorder %s10, 3
    %p41 = por %p39, %p40
    %p42 = scmp.ne.s32.totalorder %s34, %s37
    %p43 = scmp.eq.s32.totalorder %s10, 0
    %p44 = por %p42, %p43
    %p45 = scmp.ne.s32.totalorder %s34, %s37
    %p46 = scmp.eq.s32.totalorder %s15, 3
    %p47 = por %p45, %p46
    %p48 = scmp.ne.s32.totalorder %s37, %s38
    %p49 = scmp.eq.s32.totalorder %s15, 0
    %p50 = por %p48, %p49
    %p51 = scmp.ne.s32.totalorder %s37, %s38
    %p52 = scmp.eq.s32.totalorder %s16, 3
    %p53 = por %p51, %p52
    %p55 = scmp.ne.s32.totalorder %s38, %s54
    %p56 = scmp.eq.s32.totalorder %s16, 0
    %p57 = por %p55, %p56
    %s58 = ssub.s32 %s17, %s29
    %s59 = ssub.s32 %s18, %s25
    %s60 = sor.u32 %s58, %s59
    %p61 = scmp.eq.s32.totalorder %s60, 0
    %s63 = sadd.s32 %s62, 1
    %s64 = scalar_select %p61, %s62, %s63
    %p67 = pneg %p61
    %p68 = scmp.eq.s32.totalorder %s10, 3
    %p69 = por %p67, %p68
    %p70 = scmp.ne.s32.totalorder %s62, %s65
    %p71 = scmp.eq.s32.totalorder %s10, 0
    %p72 = por %p70, %p71
    %p73 = scmp.ne.s32.totalorder %s62, %s65
    %p74 = scmp.eq.s32.totalorder %s15, 3
    %p75 = por %p73, %p74
    %p76 = scmp.ne.s32.totalorder %s65, %s66
    %p77 = scmp.eq.s32.totalorder %s15, 0
    %p78 = por %p76, %p77
    %p79 = scmp.ne.s32.totalorder %s65, %s66
    %p80 = scmp.eq.s32.totalorder %s16, 3
    %p81 = por %p79, %p80
    %p83 = scmp.ne.s32.totalorder %s66, %s82
    %p84 = scmp.eq.s32.totalorder %s16, 0
    %p85 = por %p83, %p84
    %s86 = ssub.s32 %s17, %s29
    %s87 = ssub.s32 %s18, %s25
    %s88 = sor.u32 %s86, %s87
    %p89 = scmp.eq.s32.totalorder %s88, 0
    %s91 = sadd.s32 %s90, 1
    %s92 = scalar_select %p89, %s90, %s91
    %p95 = pneg %p89
    %p96 = scmp.eq.s32.totalorder %s10, 3
    %p97 = por %p95, %p96
    %p98 = scmp.ne.s32.totalorder %s90, %s93
    %p99 = scmp.eq.s32.totalorder %s10, 0
    %p100 = por %p98, %p99
    %p101 = scmp.ne.s32.totalorder %s90, %s93
    %p102 = scmp.eq.s32.totalorder %s15, 3
    %p103 = por %p101, %p102
    %p104 = scmp.ne.s32.totalorder %s93, %s94
    %p105 = scmp.eq.s32.totalorder %s15, 0
    %p106 = por %p104, %p105
    %p107 = scmp.ne.s32.totalorder %s93, %s94
    %p108 = scmp.eq.s32.totalorder %s16, 3
    %p109 = por %p107, %p108
    %p111 = scmp.ne.s32.totalorder %s94, %s110
    %p112 = scmp.eq.s32.totalorder %s16, 0
    %p113 = por %p111, %p112
    %s115 = sadd.s32 %s114, 1
    %p118 = scmp.eq.s32.totalorder %s10, 3
    %p119 = scmp.ne.s32.totalorder %s114, %s116
    %p120 = scmp.eq.s32.totalorder %s10, 0
    %p121 = por %p119, %p120
    %p122 = scmp.ne.s32.totalorder %s114, %s116
    %p123 = scmp.eq.s32.totalorder %s15, 3
    %p124 = por %p122, %p123
    %p125 = scmp.ne.s32.totalorder %s116, %s117
    %p126 = scmp.eq.s32.totalorder %s15, 0
    %p127 = por %p125, %p126
    %p128 = scmp.ne.s32.totalorder %s116, %s117
    %p129 = scmp.eq.s32.totalorder %s16, 3
    %p130 = por %p128, %p129
    %p132 = scmp.ne.s32.totalorder %s117, %s131
    %p133 = scmp.eq.s32.totalorder %s16, 0
    %p134 = por %p132, %p133
    %s135 = ssub.s32 %s17, %s29
    %s136 = ssub.s32 %s18, %s25
    %s137 = sor.u32 %s135, %s136
    %p138 = scmp.eq.s32.totalorder %s137, 0
    %s140 = sadd.s32 %s139, 1
    %s141 = scalar_select %p138, %s139, %s140
    %p144 = pneg %p138
    %p145 = scmp.eq.s32.totalorder %s10, 3
    %p146 = por %p144, %p145
    %p147 = scmp.ne.s32.totalorder %s139, %s142
    %p148 = scmp.eq.s32.totalorder %s10, 0
    %p149 = por %p147, %p148
    %p150 = scmp.ne.s32.totalorder %s139, %s142
    %p151 = scmp.eq.s32.totalorder %s15, 3
    %p152 = por %p150, %p151
    %p153 = scmp.ne.s32.totalorder %s142, %s143
    %p154 = scmp.eq.s32.totalorder %s15, 0
    %p155 = por %p153, %p154
    %p156 = scmp.ne.s32.totalorder %s142, %s143
    %p157 = scmp.eq.s32.totalorder %s16, 3
    %p158 = por %p156, %p157
    %p160 = scmp.ne.s32.totalorder %s143, %s159
    %p161 = scmp.eq.s32.totalorder %s16, 0
    %p162 = por %p160, %p161
    %p163 = scmp.le.s32.totalorder 1, %s10
    %p164 = scmp.lt.s32.totalorder %s10, 5
    %p165 = pnand %p163, %p164
    %p166 = pneg %p165
    // Predicated region
    $region9: #{unet_encoder_forward.9} parent=5 // pred_check
      _
    $region10: #{unet_encoder_forward.9} parent=5 // pred_check_branch
      %168 = sbr.rel (%p165) target = $region12
    $region11: #{unet_encoder_forward.9} parent=5 // pred_region
      %s169 = ssub.s32 %s10, 1
      // Predicated region
      $region13: #{unet_encoder_forward.9} parent=11 // pred_check
        %p170 = pneg %p127
      $region14: #{unet_encoder_forward.9} parent=11 // pred_check_branch
        %172 = sbr.rel (%p170) target = $region16
      $region15: #{unet_encoder_forward.9} parent=11 // pred_region
        _
      $region16: #{unet_encoder_forward.9} parent=11 // pred_fallthru
        _
    $region12: #{unet_encoder_forward.9} parent=5 // pred_fallthru
      _
    %p173 = scmp.lt.s32.totalorder %s10, 4
    // Predicated region
    $region17: #{unet_encoder_forward.9} parent=5 // pred_check
      %p174 = pneg %p173
    $region18: #{unet_encoder_forward.9} parent=5 // pred_check_branch
      %176 = sbr.rel (%p174) target = $region20
    $region19: #{unet_encoder_forward.9} parent=5 // pred_region
      // Predicated region
      $region21: #{unet_encoder_forward.9} parent=19 // pred_check
        %p177 = pneg %p44
      $region22: #{unet_encoder_forward.9} parent=19 // pred_check_branch
        %179 = sbr.rel (%p177) target = $region24
      $region23: #{unet_encoder_forward.9} parent=19 // pred_region
        %s180 = smul.u32 8, %s18
        %p181 = scmp.lt.s32.totalorder %s17, 1
        %s182 = scalar_select %p181, %s17, 1
        %p183 = scmp.lt.s32.totalorder %s180, 15
        %s184 = scalar_select %p183, %s180, 15
        %s185 = smul.addr %s184, 3
        %s186 = smul.addr %s182, 48
        %s187 = sadd.s32 %s185, %s186
        %s188 = smul.addr %s187, 4
        %s189 = scalar_lea.vmem %s0, %s188
        %s190 = smul.u32 8, %s18
      $region24: #{unet_encoder_forward.9} parent=19 // pred_fallthru
        _
      // Predicated region
      $region25: #{unet_encoder_forward.9} parent=19 // pred_check
        %p191 = pneg %p72
      $region26: #{unet_encoder_forward.9} parent=19 // pred_check_branch
        %193 = sbr.rel (%p191) target = $region28
      $region27: #{unet_encoder_forward.9} parent=19 // pred_region
        %s194 = smul.u32 8, %s18
        %p195 = scmp.lt.s32.totalorder %s17, 1
        %s196 = scalar_select %p195, %s17, 1
        %p197 = scmp.lt.s32.totalorder %s194, 15
        %s198 = scalar_select %p197, %s194, 15
        %s199 = smul.addr %s198, 3
        %s200 = smul.addr %s196, 48
        %s201 = sadd.s32 %s199, %s200
        %s202 = smul.addr %s201, 4
        %s203 = scalar_lea.vmem %s1, %s202
        %s204 = smul.u32 8, %s18
      $region28: #{unet_encoder_forward.9} parent=19 // pred_fallthru
        _
      // Predicated region
      $region29: #{unet_encoder_forward.9} parent=19 // pred_check
        %p205 = pneg %p100
      $region30: #{unet_encoder_forward.9} parent=19 // pred_check_branch
        %207 = sbr.rel (%p205) target = $region32
      $region31: #{unet_encoder_forward.9} parent=19 // pred_region
        %s208 = smul.u32 8, %s18
        %p209 = scmp.lt.s32.totalorder %s17, 1
        %s210 = scalar_select %p209, %s17, 1
        %p211 = scmp.lt.s32.totalorder %s208, 15
        %s212 = scalar_select %p211, %s208, 15
        %s213 = smul.addr %s212, 3
        %s214 = smul.addr %s210, 48
        %s215 = sadd.s32 %s213, %s214
        %s216 = smul.addr %s215, 4
        %s217 = scalar_lea.vmem %s2, %s216
        %s218 = smul.u32 8, %s18
      $region32: #{unet_encoder_forward.9} parent=19 // pred_fallthru
        _
    $region20: #{unet_encoder_forward.9} parent=5 // pred_fallthru
      _
    %p219 = scmp.le.s32.totalorder 1, %s10
    %p220 = scmp.lt.s32.totalorder %s10, 5
    %p221 = pnand %p219, %p220
    %p222 = pneg %p221
    // Predicated region
    $region33: #{unet_encoder_forward.9} parent=5 // pred_check
      _
    $region34: #{unet_encoder_forward.9} parent=5 // pred_check_branch
      %224 = sbr.rel (%p221) target = $region36
    $region35: #{unet_encoder_forward.9} parent=5 // pred_region
      %s225 = ssub.s32 %s10, 1
      %s226 = smul.u32 8, %s20
      %p227 = scmp.lt.s32.totalorder %s19, 1
      %s228 = scalar_select %p227, %s19, 1
      %p229 = scmp.lt.s32.totalorder %s226, 15
      %s230 = scalar_select %p229, %s226, 15
      %s231 = smul.addr %s230, 3
      %s232 = smul.addr %s228, 48
      %s233 = sadd.s32 %s231, %s232
      %s234 = smul.addr %s233, 4
      %s235 = scalar_lea.vmem %s0, %s234
      %p236 = pneg %p50
      %p237 = pneg %p47
      %s238 = smul.u32 8, %s20
      %p239 = scmp.lt.s32.totalorder %s19, 1
      %s240 = scalar_select %p239, %s19, 1
      %p241 = scmp.lt.s32.totalorder %s238, 15
      %s242 = scalar_select %p241, %s238, 15
      %s243 = smul.addr %s242, 3
      %s244 = smul.addr %s240, 48
      %s245 = sadd.s32 %s243, %s244
      %s246 = smul.addr %s245, 4
      %s247 = scalar_lea.vmem %s1, %s246
      %p248 = pneg %p78
      %p249 = pneg %p75
      %s250 = smul.u32 8, %s20
      %p251 = scmp.lt.s32.totalorder %s19, 1
      %s252 = scalar_select %p251, %s19, 1
      %p253 = scmp.lt.s32.totalorder %s250, 15
      %s254 = scalar_select %p253, %s250, 15
      %s255 = smul.addr %s254, 3
      %s256 = smul.addr %s252, 48
      %s257 = sadd.s32 %s255, %s256
      %s258 = smul.addr %s257, 4
      %s259 = scalar_lea.vmem %s2, %s258
      %p260 = pneg %p106
      %p261 = pneg %p103
      %p262 = pneg %p127
      %p263 = pneg %p124
      %p264 = pneg %p155
      %p265 = pneg %p152
      %s266 = smul.u32 8, %s20
      %p267 = scmp.lt.s32.totalorder %s19, 1
      %s268 = scalar_select %p267, %s19, 1
      %p269 = scmp.lt.s32.totalorder %s266, 15
      %s270 = scalar_select %p269, %s266, 15
      %s271 = smul.addr %s270, 2
      %s272 = smul.addr %s268, 32
      %s273 = sadd.s32 %s271, %s272
      %s274 = smul.addr %s273, 8
      %s275 = scalar_lea.vmem %s4, %s274
      %s276 = smul.u32 8, %s20
      %p277 = scmp.lt.s32.totalorder %s19, 1
      %s278 = scalar_select %p277, %s19, 1
      %p279 = scmp.lt.s32.totalorder %s276, 15
      %s280 = scalar_select %p279, %s276, 15
      %s281 = smul.addr %s280, 3
      %s282 = smul.addr %s278, 48
      %s283 = sadd.s32 %s281, %s282
      %s284 = smul.addr %s283, 4
      %s285 = scalar_lea.vmem %s0, %s284
      %s286 = smul.u32 8, %s20
      %s287 = smul.u32 8, %s20
      %p288 = scmp.lt.s32.totalorder %s19, 1
      %s289 = scalar_select %p288, %s19, 1
      %p290 = scmp.lt.s32.totalorder %s287, 15
      %s291 = scalar_select %p290, %s287, 15
      %s292 = smul.addr %s291, 3
      %s293 = smul.addr %s289, 48
      %s294 = sadd.s32 %s292, %s293
      %s295 = smul.addr %s294, 4
      %s296 = scalar_lea.vmem %s1, %s295
      %s297 = smul.u32 8, %s20
      %s298 = smul.u32 8, %s20
      %p299 = scmp.lt.s32.totalorder %s19, 1
      %s300 = scalar_select %p299, %s19, 1
      %p301 = scmp.lt.s32.totalorder %s298, 15
      %s302 = scalar_select %p301, %s298, 15
      %s303 = smul.addr %s302, 3
      %s304 = smul.addr %s300, 48
      %s305 = sadd.s32 %s303, %s304
      %s306 = smul.addr %s305, 4
      %s307 = scalar_lea.vmem %s2, %s306
      %s308 = smul.u32 8, %s20
      %s309 = smul.u32 8, %s20
      %p310 = scmp.lt.s32.totalorder %s19, 1
      %s311 = scalar_select %p310, %s19, 1
      %p312 = scmp.lt.s32.totalorder %s309, 15
      %s313 = scalar_select %p312, %s309, 15
      %s314 = smul.addr %s313, 2
      %s315 = smul.addr %s311, 32
      %s316 = sadd.s32 %s314, %s315
      %s317 = smul.addr %s316, 8
      %s318 = scalar_lea.vmem %s4, %s317
      %s319 = smul.u32 8, %s20
      %v321 = vld [vmem:[%s285] sm:$0xf]
      %v322 = vld [vmem:[%s285 + $0x4] sm:$0xf]
      %v323 = vld [vmem:[%s285 + $0x8] sm:$0x1]
      %v324 = vld [vmem:[%s285 + $0xc] sm:$0xf]
      %v325 = vld [vmem:[%s285 + $0x10] sm:$0xf]
      %v326 = vld [vmem:[%s285 + $0x14] sm:$0x1]
      %v327 = vld [vmem:[%s285 + $0x18] sm:$0xf]
      %v328 = vld [vmem:[%s285 + $0x1c] sm:$0xf]
      %v329 = vld [vmem:[%s285 + $0x20] sm:$0x1]
      %v330 = vld [vmem:[%s285 + $0x24] sm:$0xf]
      %v331 = vld [vmem:[%s285 + $0x28] sm:$0xf]
      %v332 = vld [vmem:[%s285 + $0x2c] sm:$0x1]
      %v333 = vld [vmem:[%s285 + $0x30] sm:$0xf]
      %v334 = vld [vmem:[%s285 + $0x34] sm:$0xf]
      %v335 = vld [vmem:[%s285 + $0x38] sm:$0x1]
      %v336 = vld [vmem:[%s285 + $0x3c] sm:$0xf]
      %v337 = vld [vmem:[%s285 + $0x40] sm:$0xf]
      %v338 = vld [vmem:[%s285 + $0x44] sm:$0x1]
      %v339 = vld [vmem:[%s285 + $0x48] sm:$0xf]
      %v340 = vld [vmem:[%s285 + $0x4c] sm:$0xf]
      %v341 = vld [vmem:[%s285 + $0x50] sm:$0x1]
      %v342 = vld [vmem:[%s285 + $0x54] sm:$0xf]
      %v343 = vld [vmem:[%s285 + $0x58] sm:$0xf]
      %v344 = vld [vmem:[%s285 + $0x5c] sm:$0x1]
      %v345 = vld [vmem:[%s296] sm:$0xf]
      %v346 = vld [vmem:[%s296 + $0x4] sm:$0xf]
      %v347 = vld [vmem:[%s296 + $0x8] sm:$0x1]
      %v348 = vld [vmem:[%s296 + $0xc] sm:$0xf]
      %v349 = vld [vmem:[%s296 + $0x10] sm:$0xf]
      %v350 = vld [vmem:[%s296 + $0x14] sm:$0x1]
      %v351 = vld [vmem:[%s296 + $0x18] sm:$0xf]
      %v352 = vld [vmem:[%s296 + $0x1c] sm:$0xf]
      %v353 = vld [vmem:[%s296 + $0x20] sm:$0x1]
      %v354 = vld [vmem:[%s296 + $0x24] sm:$0xf]
      %v355 = vld [vmem:[%s296 + $0x28] sm:$0xf]
      %v356 = vld [vmem:[%s296 + $0x2c] sm:$0x1]
      %v357 = vld [vmem:[%s296 + $0x30] sm:$0xf]
      %v358 = vld [vmem:[%s296 + $0x34] sm:$0xf]
      %v359 = vld [vmem:[%s296 + $0x38] sm:$0x1]
      %v360 = vld [vmem:[%s296 + $0x3c] sm:$0xf]
      %v361 = vld [vmem:[%s296 + $0x40] sm:$0xf]
      %v362 = vld [vmem:[%s296 + $0x44] sm:$0x1]
      %v363 = vld [vmem:[%s296 + $0x48] sm:$0xf]
      %v364 = vld [vmem:[%s296 + $0x4c] sm:$0xf]
      %v365 = vld [vmem:[%s296 + $0x50] sm:$0x1]
      %v366 = vld [vmem:[%s296 + $0x54] sm:$0xf]
      %v367 = vld [vmem:[%s296 + $0x58] sm:$0xf]
      %v368 = vld [vmem:[%s296 + $0x5c] sm:$0x1]
      %v369 = vld [vmem:[%s307] sm:$0xf]
      %v370 = vld [vmem:[%s307 + $0x4] sm:$0xf]
      %v371 = vld [vmem:[%s307 + $0x8] sm:$0x1]
      %v372 = vld [vmem:[%s307 + $0xc] sm:$0xf]
      %v373 = vld [vmem:[%s307 + $0x10] sm:$0xf]
      %v374 = vld [vmem:[%s307 + $0x14] sm:$0x1]
      %v375 = vld [vmem:[%s307 + $0x18] sm:$0xf]
      %v376 = vld [vmem:[%s307 + $0x1c] sm:$0xf]
      %v377 = vld [vmem:[%s307 + $0x20] sm:$0x1]
      %v378 = vld [vmem:[%s307 + $0x24] sm:$0xf]
      %v379 = vld [vmem:[%s307 + $0x28] sm:$0xf]
      %v380 = vld [vmem:[%s307 + $0x2c] sm:$0x1]
      %v381 = vld [vmem:[%s307 + $0x30] sm:$0xf]
      %v382 = vld [vmem:[%s307 + $0x34] sm:$0xf]
      %v383 = vld [vmem:[%s307 + $0x38] sm:$0x1]
      %v384 = vld [vmem:[%s307 + $0x3c] sm:$0xf]
      %v385 = vld [vmem:[%s307 + $0x40] sm:$0xf]
      %v386 = vld [vmem:[%s307 + $0x44] sm:$0x1]
      %v387 = vld [vmem:[%s307 + $0x48] sm:$0xf]
      %v388 = vld [vmem:[%s307 + $0x4c] sm:$0xf]
      %v389 = vld [vmem:[%s307 + $0x50] sm:$0x1]
      %v390 = vld [vmem:[%s307 + $0x54] sm:$0xf]
      %v391 = vld [vmem:[%s307 + $0x58] sm:$0xf]
      %v392 = vld [vmem:[%s307 + $0x5c] sm:$0x1]
      %v409 = vunpack.c.l.b16 %v321
      %v410 = vunpack.c.l.b16 %v322
      %v411 = vunpack.c.l.b16 %v324
      %v412 = vunpack.c.l.b16 %v325
      %v413 = vunpack.c.l.b16 %v327
      %v414 = vunpack.c.l.b16 %v328
      %v415 = vunpack.c.l.b16 %v330
      %v416 = vunpack.c.l.b16 %v331
      %v417 = vunpack.c.l.b16 %v333
      %v418 = vunpack.c.l.b16 %v334
      %v419 = vunpack.c.l.b16 %v336
      %v420 = vunpack.c.l.b16 %v337
      %v421 = vunpack.c.l.b16 %v339
      %v422 = vunpack.c.l.b16 %v340
      %v423 = vunpack.c.l.b16 %v342
      %v424 = vunpack.c.l.b16 %v343
      %v425 = vpack.c.b16 %v410, %v409
      %v426 = vpack.c.b16 %v412, %v411
      %v427 = vpack.c.b16 %v414, %v413
      %v428 = vpack.c.b16 %v416, %v415
      %v429 = vpack.c.b16 %v418, %v417
      %v430 = vpack.c.b16 %v420, %v419
      %v431 = vpack.c.b16 %v422, %v421
      %v432 = vpack.c.b16 %v424, %v423
      %v441 = vunpack.c.l.b16 %v323
      %v442 = vunpack.c.l.b16 %v326
      %v443 = vunpack.c.l.b16 %v329
      %v444 = vunpack.c.l.b16 %v332
      %v445 = vunpack.c.l.b16 %v335
      %v446 = vunpack.c.l.b16 %v338
      %v447 = vunpack.c.l.b16 %v341
      %v448 = vunpack.c.l.b16 %v344
      %v449 = vpack.c.b16 %v441, %v441
      %v450 = vpack.c.b16 %v442, %v442
      %v451 = vpack.c.b16 %v443, %v443
      %v452 = vpack.c.b16 %v444, %v444
      %v453 = vpack.c.b16 %v445, %v445
      %v454 = vpack.c.b16 %v446, %v446
      %v455 = vpack.c.b16 %v447, %v447
      %v456 = vpack.c.b16 %v448, %v448
      %vm457 = vsmask.f32 7424
      %v459 = vshrl.u32 %v425, 16
      %v461 = vshll.u32 %v425, 16
      %v463 = vrot.slane %v461, 1
      %v464 = vor.u32 %v459, %v463
      %v466 = vshll.u32 %v449, 16
      %v468 = vrot.slane %v466, 1
      %v469 = vsel %vm457, %v464, %v468
      %v471 = vshrl.u32 %v426, 16
      %v473 = vshll.u32 %v426, 16
      %v475 = vrot.slane %v473, 1
      %v476 = vor.u32 %v471, %v475
      %v478 = vshll.u32 %v450, 16
      %v480 = vrot.slane %v478, 1
      %v481 = vsel %vm457, %v476, %v480
      %v483 = vshrl.u32 %v427, 16
      %v485 = vshll.u32 %v427, 16
      %v487 = vrot.slane %v485, 1
      %v488 = vor.u32 %v483, %v487
      %v490 = vshll.u32 %v451, 16
      %v492 = vrot.slane %v490, 1
      %v493 = vsel %vm457, %v488, %v492
      %v495 = vshrl.u32 %v428, 16
      %v497 = vshll.u32 %v428, 16
      %v499 = vrot.slane %v497, 1
      %v500 = vor.u32 %v495, %v499
      %v502 = vshll.u32 %v452, 16
      %v504 = vrot.slane %v502, 1
      %v505 = vsel %vm457, %v500, %v504
      %v507 = vshrl.u32 %v429, 16
      %v509 = vshll.u32 %v429, 16
      %v511 = vrot.slane %v509, 1
      %v512 = vor.u32 %v507, %v511
      %v514 = vshll.u32 %v453, 16
      %v516 = vrot.slane %v514, 1
      %v517 = vsel %vm457, %v512, %v516
      %v519 = vshrl.u32 %v430, 16
      %v521 = vshll.u32 %v430, 16
      %v523 = vrot.slane %v521, 1
      %v524 = vor.u32 %v519, %v523
      %v526 = vshll.u32 %v454, 16
      %v528 = vrot.slane %v526, 1
      %v529 = vsel %vm457, %v524, %v528
      %v531 = vshrl.u32 %v431, 16
      %v533 = vshll.u32 %v431, 16
      %v535 = vrot.slane %v533, 1
      %v536 = vor.u32 %v531, %v535
      %v538 = vshll.u32 %v455, 16
      %v540 = vrot.slane %v538, 1
      %v541 = vsel %vm457, %v536, %v540
      %v543 = vshrl.u32 %v432, 16
      %v545 = vshll.u32 %v432, 16
      %v547 = vrot.slane %v545, 1
      %v548 = vor.u32 %v543, %v547
      %v550 = vshll.u32 %v456, 16
      %v552 = vrot.slane %v550, 1
      %v553 = vsel %vm457, %v548, %v552
      %554 = vrot.lane.b32.xlu0 %v469, 64
      %v555 = vpop.permute.xlu0 %554
      %556 = vrot.lane.b32.xlu0 %v481, 64
      %v557 = vpop.permute.xlu0 %556
      %558 = vrot.lane.b32.xlu0 %v493, 64
      %v559 = vpop.permute.xlu0 %558
      %560 = vrot.lane.b32.xlu0 %v505, 64
      %v561 = vpop.permute.xlu0 %560
      %562 = vrot.lane.b32.xlu0 %v517, 64
      %v563 = vpop.permute.xlu0 %562
      %564 = vrot.lane.b32.xlu0 %v529, 64
      %v565 = vpop.permute.xlu0 %564
      %566 = vrot.lane.b32.xlu0 %v541, 64
      %v567 = vpop.permute.xlu0 %566
      %568 = vrot.lane.b32.xlu0 %v553, 64
      %v569 = vpop.permute.xlu0 %568
      %vm570 = vcmask 1046528
      %v571 = vrot.slane %v425, 1
      %v572 = vrot.slane %v449, 1
      %v573 = vsel %vm570, %v571, %v572
      %v574 = vrot.slane %v426, 1
      %v575 = vrot.slane %v450, 1
      %v576 = vsel %vm570, %v574, %v575
      %v577 = vrot.slane %v427, 1
      %v578 = vrot.slane %v451, 1
      %v579 = vsel %vm570, %v577, %v578
      %v580 = vrot.slane %v428, 1
      %v581 = vrot.slane %v452, 1
      %v582 = vsel %vm570, %v580, %v581
      %v583 = vrot.slane %v429, 1
      %v584 = vrot.slane %v453, 1
      %v585 = vsel %vm570, %v583, %v584
      %v586 = vrot.slane %v430, 1
      %v587 = vrot.slane %v454, 1
      %v588 = vsel %vm570, %v586, %v587
      %v589 = vrot.slane %v431, 1
      %v590 = vrot.slane %v455, 1
      %v591 = vsel %vm570, %v589, %v590
      %v592 = vrot.slane %v432, 1
      %v593 = vrot.slane %v456, 1
      %v594 = vsel %vm570, %v592, %v593
      %v611 = vunpack.c.l.b16 %v345
      %v612 = vunpack.c.l.b16 %v346
      %v613 = vunpack.c.l.b16 %v348
      %v614 = vunpack.c.l.b16 %v349
      %v615 = vunpack.c.l.b16 %v351
      %v616 = vunpack.c.l.b16 %v352
      %v617 = vunpack.c.l.b16 %v354
      %v618 = vunpack.c.l.b16 %v355
      %v619 = vunpack.c.l.b16 %v357
      %v620 = vunpack.c.l.b16 %v358
      %v621 = vunpack.c.l.b16 %v360
      %v622 = vunpack.c.l.b16 %v361
      %v623 = vunpack.c.l.b16 %v363
      %v624 = vunpack.c.l.b16 %v364
      %v625 = vunpack.c.l.b16 %v366
      %v626 = vunpack.c.l.b16 %v367
      %v627 = vpack.c.b16 %v612, %v611
      %v628 = vpack.c.b16 %v614, %v613
      %v629 = vpack.c.b16 %v616, %v615
      %v630 = vpack.c.b16 %v618, %v617
      %v631 = vpack.c.b16 %v620, %v619
      %v632 = vpack.c.b16 %v622, %v621
      %v633 = vpack.c.b16 %v624, %v623
      %v634 = vpack.c.b16 %v626, %v625
      %635 = vrot.lane.b32.xlu0 %v627, 64
      %v636 = vpop.permute.xlu0 %635
      %637 = vrot.lane.b32.xlu0 %v628, 64
      %v638 = vpop.permute.xlu0 %637
      %639 = vrot.lane.b32.xlu0 %v629, 64
      %v640 = vpop.permute.xlu0 %639
      %641 = vrot.lane.b32.xlu0 %v630, 64
      %v642 = vpop.permute.xlu0 %641
      %643 = vrot.lane.b32.xlu0 %v631, 64
      %v644 = vpop.permute.xlu0 %643
      %645 = vrot.lane.b32.xlu0 %v632, 64
      %v646 = vpop.permute.xlu0 %645
      %647 = vrot.lane.b32.xlu0 %v633, 64
      %v648 = vpop.permute.xlu0 %647
      %649 = vrot.lane.b32.xlu0 %v634, 64
      %v650 = vpop.permute.xlu0 %649
      %v659 = vunpack.c.l.b16 %v347
      %v660 = vunpack.c.l.b16 %v350
      %v661 = vunpack.c.l.b16 %v353
      %v662 = vunpack.c.l.b16 %v356
      %v663 = vunpack.c.l.b16 %v359
      %v664 = vunpack.c.l.b16 %v362
      %v665 = vunpack.c.l.b16 %v365
      %v666 = vunpack.c.l.b16 %v368
      %v667 = vpack.c.b16 %v659, %v659
      %v668 = vpack.c.b16 %v660, %v660
      %v669 = vpack.c.b16 %v661, %v661
      %v670 = vpack.c.b16 %v662, %v662
      %v671 = vpack.c.b16 %v663, %v663
      %v672 = vpack.c.b16 %v664, %v664
      %v673 = vpack.c.b16 %v665, %v665
      %v674 = vpack.c.b16 %v666, %v666
      %v676 = vshrl.u32 %v627, 16
      %v678 = vshll.u32 %v627, 16
      %v680 = vrot.slane %v678, 1
      %v681 = vor.u32 %v676, %v680
      %v683 = vshll.u32 %v667, 16
      %v685 = vrot.slane %v683, 1
      %v686 = vsel %vm457, %v681, %v685
      %v688 = vshrl.u32 %v628, 16
      %v690 = vshll.u32 %v628, 16
      %v692 = vrot.slane %v690, 1
      %v693 = vor.u32 %v688, %v692
      %v695 = vshll.u32 %v668, 16
      %v697 = vrot.slane %v695, 1
      %v698 = vsel %vm457, %v693, %v697
      %v700 = vshrl.u32 %v629, 16
      %v702 = vshll.u32 %v629, 16
      %v704 = vrot.slane %v702, 1
      %v705 = vor.u32 %v700, %v704
      %v707 = vshll.u32 %v669, 16
      %v709 = vrot.slane %v707, 1
      %v710 = vsel %vm457, %v705, %v709
      %v712 = vshrl.u32 %v630, 16
      %v714 = vshll.u32 %v630, 16
      %v716 = vrot.slane %v714, 1
      %v717 = vor.u32 %v712, %v716
      %v719 = vshll.u32 %v670, 16
      %v721 = vrot.slane %v719, 1
      %v722 = vsel %vm457, %v717, %v721
      %v724 = vshrl.u32 %v631, 16
      %v726 = vshll.u32 %v631, 16
      %v728 = vrot.slane %v726, 1
      %v729 = vor.u32 %v724, %v728
      %v731 = vshll.u32 %v671, 16
      %v733 = vrot.slane %v731, 1
      %v734 = vsel %vm457, %v729, %v733
      %v736 = vshrl.u32 %v632, 16
      %v738 = vshll.u32 %v632, 16
      %v740 = vrot.slane %v738, 1
      %v741 = vor.u32 %v736, %v740
      %v743 = vshll.u32 %v672, 16
      %v745 = vrot.slane %v743, 1
      %v746 = vsel %vm457, %v741, %v745
      %v748 = vshrl.u32 %v633, 16
      %v750 = vshll.u32 %v633, 16
      %v752 = vrot.slane %v750, 1
      %v753 = vor.u32 %v748, %v752
      %v755 = vshll.u32 %v673, 16
      %v757 = vrot.slane %v755, 1
      %v758 = vsel %vm457, %v753, %v757
      %v760 = vshrl.u32 %v634, 16
      %v762 = vshll.u32 %v634, 16
      %v764 = vrot.slane %v762, 1
      %v765 = vor.u32 %v760, %v764
      %v767 = vshll.u32 %v674, 16
      %v769 = vrot.slane %v767, 1
      %v770 = vsel %vm457, %v765, %v769
      %v771 = vrot.slane %v627, 1
      %v772 = vrot.slane %v667, 1
      %v773 = vsel %vm570, %v771, %v772
      %v774 = vrot.slane %v628, 1
      %v775 = vrot.slane %v668, 1
      %v776 = vsel %vm570, %v774, %v775
      %v777 = vrot.slane %v629, 1
      %v778 = vrot.slane %v669, 1
      %v779 = vsel %vm570, %v777, %v778
      %v780 = vrot.slane %v630, 1
      %v781 = vrot.slane %v670, 1
      %v782 = vsel %vm570, %v780, %v781
      %v783 = vrot.slane %v631, 1
      %v784 = vrot.slane %v671, 1
      %v785 = vsel %vm570, %v783, %v784
      %v786 = vrot.slane %v632, 1
      %v787 = vrot.slane %v672, 1
      %v788 = vsel %vm570, %v786, %v787
      %v789 = vrot.slane %v633, 1
      %v790 = vrot.slane %v673, 1
      %v791 = vsel %vm570, %v789, %v790
      %v792 = vrot.slane %v634, 1
      %v793 = vrot.slane %v674, 1
      %v794 = vsel %vm570, %v792, %v793
      %795 = vrot.lane.b32.xlu0 %v773, 64
      %v796 = vpop.permute.xlu0 %795
      %797 = vrot.lane.b32.xlu0 %v776, 64
      %v798 = vpop.permute.xlu0 %797
      %799 = vrot.lane.b32.xlu0 %v779, 64
      %v800 = vpop.permute.xlu0 %799
      %801 = vrot.lane.b32.xlu0 %v782, 64
      %v802 = vpop.permute.xlu0 %801
      %803 = vrot.lane.b32.xlu0 %v785, 64
      %v804 = vpop.permute.xlu0 %803
      %805 = vrot.lane.b32.xlu0 %v788, 64
      %v806 = vpop.permute.xlu0 %805
      %807 = vrot.lane.b32.xlu0 %v791, 64
      %v808 = vpop.permute.xlu0 %807
      %809 = vrot.lane.b32.xlu0 %v794, 64
      %v810 = vpop.permute.xlu0 %809
      %v827 = vunpack.c.l.b16 %v369
      %v828 = vunpack.c.l.b16 %v370
      %v829 = vunpack.c.l.b16 %v372
      %v830 = vunpack.c.l.b16 %v373
      %v831 = vunpack.c.l.b16 %v375
      %v832 = vunpack.c.l.b16 %v376
      %v833 = vunpack.c.l.b16 %v378
      %v834 = vunpack.c.l.b16 %v379
      %v835 = vunpack.c.l.b16 %v381
      %v836 = vunpack.c.l.b16 %v382
      %v837 = vunpack.c.l.b16 %v384
      %v838 = vunpack.c.l.b16 %v385
      %v839 = vunpack.c.l.b16 %v387
      %v840 = vunpack.c.l.b16 %v388
      %v841 = vunpack.c.l.b16 %v390
      %v842 = vunpack.c.l.b16 %v391
      %v843 = vpack.c.b16 %v828, %v827
      %v844 = vpack.c.b16 %v830, %v829
      %v845 = vpack.c.b16 %v832, %v831
      %v846 = vpack.c.b16 %v834, %v833
      %v847 = vpack.c.b16 %v836, %v835
      %v848 = vpack.c.b16 %v838, %v837
      %v849 = vpack.c.b16 %v840, %v839
      %v850 = vpack.c.b16 %v842, %v841
      %v859 = vunpack.c.l.b16 %v371
      %v860 = vunpack.c.l.b16 %v374
      %v861 = vunpack.c.l.b16 %v377
      %v862 = vunpack.c.l.b16 %v380
      %v863 = vunpack.c.l.b16 %v383
      %v864 = vunpack.c.l.b16 %v386
      %v865 = vunpack.c.l.b16 %v389
      %v866 = vunpack.c.l.b16 %v392
      %v867 = vpack.c.b16 %v859, %v859
      %v868 = vpack.c.b16 %v860, %v860
      %v869 = vpack.c.b16 %v861, %v861
      %v870 = vpack.c.b16 %v862, %v862
      %v871 = vpack.c.b16 %v863, %v863
      %v872 = vpack.c.b16 %v864, %v864
      %v873 = vpack.c.b16 %v865, %v865
      %v874 = vpack.c.b16 %v866, %v866
      %v876 = vshrl.u32 %v843, 16
      %v878 = vshll.u32 %v843, 16
      %v880 = vrot.slane %v878, 1
      %v881 = vor.u32 %v876, %v880
      %v883 = vshll.u32 %v867, 16
      %v885 = vrot.slane %v883, 1
      %v886 = vsel %vm457, %v881, %v885
      %v888 = vshrl.u32 %v844, 16
      %v890 = vshll.u32 %v844, 16
      %v892 = vrot.slane %v890, 1
      %v893 = vor.u32 %v888, %v892
      %v895 = vshll.u32 %v868, 16
      %v897 = vrot.slane %v895, 1
      %v898 = vsel %vm457, %v893, %v897
      %v900 = vshrl.u32 %v845, 16
      %v902 = vshll.u32 %v845, 16
      %v904 = vrot.slane %v902, 1
      %v905 = vor.u32 %v900, %v904
      %v907 = vshll.u32 %v869, 16
      %v909 = vrot.slane %v907, 1
      %v910 = vsel %vm457, %v905, %v909
      %v912 = vshrl.u32 %v846, 16
      %v914 = vshll.u32 %v846, 16
      %v916 = vrot.slane %v914, 1
      %v917 = vor.u32 %v912, %v916
      %v919 = vshll.u32 %v870, 16
      %v921 = vrot.slane %v919, 1
      %v922 = vsel %vm457, %v917, %v921
      %v924 = vshrl.u32 %v847, 16
      %v926 = vshll.u32 %v847, 16
      %v928 = vrot.slane %v926, 1
      %v929 = vor.u32 %v924, %v928
      %v931 = vshll.u32 %v871, 16
      %v933 = vrot.slane %v931, 1
      %v934 = vsel %vm457, %v929, %v933
      %v936 = vshrl.u32 %v848, 16
      %v938 = vshll.u32 %v848, 16
      %v940 = vrot.slane %v938, 1
      %v941 = vor.u32 %v936, %v940
      %v943 = vshll.u32 %v872, 16
      %v945 = vrot.slane %v943, 1
      %v946 = vsel %vm457, %v941, %v945
      %v948 = vshrl.u32 %v849, 16
      %v950 = vshll.u32 %v849, 16
      %v952 = vrot.slane %v950, 1
      %v953 = vor.u32 %v948, %v952
      %v955 = vshll.u32 %v873, 16
      %v957 = vrot.slane %v955, 1
      %v958 = vsel %vm457, %v953, %v957
      %v960 = vshrl.u32 %v850, 16
      %v962 = vshll.u32 %v850, 16
      %v964 = vrot.slane %v962, 1
      %v965 = vor.u32 %v960, %v964
      %v967 = vshll.u32 %v874, 16
      %v969 = vrot.slane %v967, 1
      %v970 = vsel %vm457, %v965, %v969
      %971 = vrot.lane.b32.xlu0 %v886, 64
      %v972 = vpop.permute.xlu0 %971
      %973 = vrot.lane.b32.xlu0 %v898, 64
      %v974 = vpop.permute.xlu0 %973
      %975 = vrot.lane.b32.xlu0 %v910, 64
      %v976 = vpop.permute.xlu0 %975
      %977 = vrot.lane.b32.xlu0 %v922, 64
      %v978 = vpop.permute.xlu0 %977
      %979 = vrot.lane.b32.xlu0 %v934, 64
      %v980 = vpop.permute.xlu0 %979
      %981 = vrot.lane.b32.xlu0 %v946, 64
      %v982 = vpop.permute.xlu0 %981
      %983 = vrot.lane.b32.xlu0 %v958, 64
      %v984 = vpop.permute.xlu0 %983
      %985 = vrot.lane.b32.xlu0 %v970, 64
      %v986 = vpop.permute.xlu0 %985
      %v987 = vrot.slane %v843, 1
      %v988 = vrot.slane %v867, 1
      %v989 = vsel %vm570, %v987, %v988
      %v990 = vrot.slane %v844, 1
      %v991 = vrot.slane %v868, 1
      %v992 = vsel %vm570, %v990, %v991
      %v993 = vrot.slane %v845, 1
      %v994 = vrot.slane %v869, 1
      %v995 = vsel %vm570, %v993, %v994
      %v996 = vrot.slane %v846, 1
      %v997 = vrot.slane %v870, 1
      %v998 = vsel %vm570, %v996, %v997
      %v999 = vrot.slane %v847, 1
      %v1000 = vrot.slane %v871, 1
      %v1001 = vsel %vm570, %v999, %v1000
      %v1002 = vrot.slane %v848, 1
      %v1003 = vrot.slane %v872, 1
      %v1004 = vsel %vm570, %v1002, %v1003
      %v1005 = vrot.slane %v849, 1
      %v1006 = vrot.slane %v873, 1
      %v1007 = vsel %vm570, %v1005, %v1006
      %v1008 = vrot.slane %v850, 1
      %v1009 = vrot.slane %v874, 1
      %v1010 = vsel %vm570, %v1008, %v1009
      %vm1011 = vcmask 523264
      %v1013 = vsel %vm1011, %v425, %v555
      %v1016 = vsel %vm1011, %v426, %v557
      %v1019 = vsel %vm1011, %v427, %v559
      %v1022 = vsel %vm1011, %v428, %v561
      %v1025 = vsel %vm1011, %v429, %v563
      %v1028 = vsel %vm1011, %v430, %v565
      %v1031 = vsel %vm1011, %v431, %v567
      %v1034 = vsel %vm1011, %v432, %v569
      %v1038 = vsel %vm1011, %v573, %v636
      %v1042 = vsel %vm1011, %v576, %v638
      %v1046 = vsel %vm1011, %v579, %v640
      %v1050 = vsel %vm1011, %v582, %v642
      %v1054 = vsel %vm1011, %v585, %v644
      %v1058 = vsel %vm1011, %v588, %v646
      %v1062 = vsel %vm1011, %v591, %v648
      %v1066 = vsel %vm1011, %v594, %v650
      %v1070 = vsel %vm1011, %v686, %v796
      %v1074 = vsel %vm1011, %v698, %v798
      %v1078 = vsel %vm1011, %v710, %v800
      %v1082 = vsel %vm1011, %v722, %v802
      %v1086 = vsel %vm1011, %v734, %v804
      %v1090 = vsel %vm1011, %v746, %v806
      %v1094 = vsel %vm1011, %v758, %v808
      %v1098 = vsel %vm1011, %v770, %v810
      %v1101 = vsel %vm1011, %v843, %v972
      %v1104 = vsel %vm1011, %v844, %v974
      %v1107 = vsel %vm1011, %v845, %v976
      %v1110 = vsel %vm1011, %v846, %v978
      %v1113 = vsel %vm1011, %v847, %v980
      %v1116 = vsel %vm1011, %v848, %v982
      %v1119 = vsel %vm1011, %v849, %v984
      %v1122 = vsel %vm1011, %v850, %v986
      %v1124 = vld [vmem:[%s3] sm:$0xf]
      %v1125 = vld [vmem:[%s3 + $0x4] sm:$0xf]
      %v1126 = vld [vmem:[%s3 + $0x8] sm:$0xf]
      %v1127 = vld [vmem:[%s3 + $0xc] sm:$0xf]
      %v1128 = vld [vmem:[%s3 + $0x10] sm:$0xf]
      %v1129 = vld [vmem:[%s3 + $0x14] sm:$0xf]
      %v1130 = vld [vmem:[%s3 + $0x18] sm:$0xf]
      %v1131 = vld [vmem:[%s3 + $0x1c] sm:$0xf]
      %v1132 = vld [vmem:[%s3 + $0x20] sm:$0xf]
      %v1133 = vld [vmem:[%s3 + $0x24] sm:$0xf]
      %v1134 = vld [vmem:[%s3 + $0x28] sm:$0xf]
      %v1135 = vld [vmem:[%s3 + $0x2c] sm:$0xf]
      %v1136 = vld [vmem:[%s3 + $0x30] sm:$0xf]
      %v1137 = vld [vmem:[%s3 + $0x34] sm:$0xf]
      %v1138 = vld [vmem:[%s3 + $0x38] sm:$0xf]
      %v1139 = vld [vmem:[%s3 + $0x3c] sm:$0xf]
      %v1140 = vld [vmem:[%s3 + $0x40] sm:$0xf]
      %v1141 = vld [vmem:[%s3 + $0x44] sm:$0xf]
      %v1142 = vld [vmem:[%s3 + $0x48] sm:$0xf]
      %v1143 = vld [vmem:[%s3 + $0x4c] sm:$0xf]
      %v1144 = vld [vmem:[%s3 + $0x50] sm:$0xf]
      %v1145 = vld [vmem:[%s3 + $0x54] sm:$0xf]
      %v1146 = vld [vmem:[%s3 + $0x58] sm:$0xf]
      %v1147 = vld [vmem:[%s3 + $0x5c] sm:$0xf]
      %v1148 = vld [vmem:[%s3 + $0x60] sm:$0xf]
      %v1149 = vld [vmem:[%s3 + $0x64] sm:$0xf]
      %v1150 = vld [vmem:[%s3 + $0x68] sm:$0xf]
      %v1151 = vld [vmem:[%s3 + $0x6c] sm:$0xf]
      %v1152 = vld [vmem:[%s3 + $0x70] sm:$0xf]
      %v1153 = vld [vmem:[%s3 + $0x74] sm:$0xf]
      %v1154 = vld [vmem:[%s3 + $0x78] sm:$0xf]
      %v1155 = vld [vmem:[%s3 + $0x7c] sm:$0xf]
      %v1156 = vld [vmem:[%s3 + $0x80] sm:$0xf]
      %v1157 = vld [vmem:[%s3 + $0x84] sm:$0xf]
      %v1158 = vld [vmem:[%s3 + $0x88] sm:$0xf]
      %v1159 = vld [vmem:[%s3 + $0x8c] sm:$0xf]
      %v1160 = vld [vmem:[%s3 + $0x90] sm:$0xf]
      %v1161 = vld [vmem:[%s3 + $0x94] sm:$0xf]
      %v1162 = vld [vmem:[%s3 + $0x98] sm:$0xf]
      %v1163 = vld [vmem:[%s3 + $0x9c] sm:$0xf]
      %v1164 = vld [vmem:[%s3 + $0xa0] sm:$0xf]
      %v1165 = vld [vmem:[%s3 + $0xa4] sm:$0xf]
      %v1166 = vld [vmem:[%s3 + $0xa8] sm:$0xf]
      %v1167 = vld [vmem:[%s3 + $0xac] sm:$0xf]
      %v1168 = vld [vmem:[%s3 + $0xb0] sm:$0xf]
      %v1169 = vld [vmem:[%s3 + $0xb4] sm:$0xf]
      %v1170 = vld [vmem:[%s3 + $0xb8] sm:$0xf]
      %v1171 = vld [vmem:[%s3 + $0xbc] sm:$0xf]
      %v1172 = vld [vmem:[%s3 + $0xc0] sm:$0xf]
      %v1173 = vld [vmem:[%s3 + $0xc4] sm:$0xf]
      %v1174 = vld [vmem:[%s3 + $0xc8] sm:$0xf]
      %v1175 = vld [vmem:[%s3 + $0xcc] sm:$0xf]
      %v1176 = vld [vmem:[%s3 + $0xd0] sm:$0xf]
      %v1177 = vld [vmem:[%s3 + $0xd4] sm:$0xf]
      %v1178 = vld [vmem:[%s3 + $0xd8] sm:$0xf]
      %v1179 = vld [vmem:[%s3 + $0xdc] sm:$0xf]
      %v1180 = vld [vmem:[%s3 + $0xe0] sm:$0xf]
      %v1181 = vld [vmem:[%s3 + $0xe4] sm:$0xf]
      %v1182 = vld [vmem:[%s3 + $0xe8] sm:$0xf]
      %v1183 = vld [vmem:[%s3 + $0xec] sm:$0xf]
      %v1184 = vld [vmem:[%s3 + $0xf0] sm:$0xf]
      %v1185 = vld [vmem:[%s3 + $0xf4] sm:$0xf]
      %v1186 = vld [vmem:[%s3 + $0xf8] sm:$0xf]
      %v1187 = vld [vmem:[%s3 + $0xfc] sm:$0xf]
      %v1188 = vld [vmem:[%s3 + $0x100] sm:$0xf]
      %v1189 = vld [vmem:[%s3 + $0x104] sm:$0xf]
      %v1190 = vld [vmem:[%s3 + $0x108] sm:$0xf]
      %v1191 = vld [vmem:[%s3 + $0x10c] sm:$0xf]
      %v1192 = vld [vmem:[%s3 + $0x110] sm:$0xf]
      %v1193 = vld [vmem:[%s3 + $0x114] sm:$0xf]
      %v1194 = vld [vmem:[%s3 + $0x118] sm:$0xf]
      %v1195 = vld [vmem:[%s3 + $0x11c] sm:$0xf]
      %v1268 = vunpack.c.l.b16 %v1124
      %v1269 = vunpack.c.l.b16 %v1125
      %v1270 = vunpack.c.l.b16 %v1126
      %v1271 = vunpack.c.l.b16 %v1127
      %v1272 = vunpack.c.l.b16 %v1128
      %v1273 = vunpack.c.l.b16 %v1129
      %v1274 = vunpack.c.l.b16 %v1130
      %v1275 = vunpack.c.l.b16 %v1131
      %v1276 = vunpack.c.l.b16 %v1132
      %v1277 = vunpack.c.l.b16 %v1133
      %v1278 = vunpack.c.l.b16 %v1134
      %v1279 = vunpack.c.l.b16 %v1135
      %v1280 = vunpack.c.l.b16 %v1136
      %v1281 = vunpack.c.l.b16 %v1137
      %v1282 = vunpack.c.l.b16 %v1138
      %v1283 = vunpack.c.l.b16 %v1139
      %v1284 = vunpack.c.l.b16 %v1140
      %v1285 = vunpack.c.l.b16 %v1141
      %v1286 = vunpack.c.l.b16 %v1142
      %v1287 = vunpack.c.l.b16 %v1143
      %v1288 = vunpack.c.l.b16 %v1144
      %v1289 = vunpack.c.l.b16 %v1145
      %v1290 = vunpack.c.l.b16 %v1146
      %v1291 = vunpack.c.l.b16 %v1147
      %v1292 = vunpack.c.l.b16 %v1148
      %v1293 = vunpack.c.l.b16 %v1149
      %v1294 = vunpack.c.l.b16 %v1150
      %v1295 = vunpack.c.l.b16 %v1151
      %v1296 = vunpack.c.l.b16 %v1152
      %v1297 = vunpack.c.l.b16 %v1153
      %v1298 = vunpack.c.l.b16 %v1154
      %v1299 = vunpack.c.l.b16 %v1155
      %v1300 = vunpack.c.l.b16 %v1156
      %v1301 = vunpack.c.l.b16 %v1157
      %v1302 = vunpack.c.l.b16 %v1158
      %v1303 = vunpack.c.l.b16 %v1159
      %v1304 = vunpack.c.l.b16 %v1160
      %v1305 = vunpack.c.l.b16 %v1161
      %v1306 = vunpack.c.l.b16 %v1162
      %v1307 = vunpack.c.l.b16 %v1163
      %v1308 = vunpack.c.l.b16 %v1164
      %v1309 = vunpack.c.l.b16 %v1165
      %v1310 = vunpack.c.l.b16 %v1166
      %v1311 = vunpack.c.l.b16 %v1167
      %v1312 = vunpack.c.l.b16 %v1168
      %v1313 = vunpack.c.l.b16 %v1169
      %v1314 = vunpack.c.l.b16 %v1170
      %v1315 = vunpack.c.l.b16 %v1171
      %v1316 = vunpack.c.l.b16 %v1172
      %v1317 = vunpack.c.l.b16 %v1173
      %v1318 = vunpack.c.l.b16 %v1174
      %v1319 = vunpack.c.l.b16 %v1175
      %v1320 = vunpack.c.l.b16 %v1176
      %v1321 = vunpack.c.l.b16 %v1177
      %v1322 = vunpack.c.l.b16 %v1178
      %v1323 = vunpack.c.l.b16 %v1179
      %v1324 = vunpack.c.l.b16 %v1180
      %v1325 = vunpack.c.l.b16 %v1181
      %v1326 = vunpack.c.l.b16 %v1182
      %v1327 = vunpack.c.l.b16 %v1183
      %v1328 = vunpack.c.l.b16 %v1184
      %v1329 = vunpack.c.l.b16 %v1185
      %v1330 = vunpack.c.l.b16 %v1186
      %v1331 = vunpack.c.l.b16 %v1187
      %v1332 = vunpack.c.l.b16 %v1188
      %v1333 = vunpack.c.l.b16 %v1189
      %v1334 = vunpack.c.l.b16 %v1190
      %v1335 = vunpack.c.l.b16 %v1191
      %v1336 = vunpack.c.l.b16 %v1192
      %v1337 = vunpack.c.l.b16 %v1193
      %v1338 = vunpack.c.l.b16 %v1194
      %v1339 = vunpack.c.l.b16 %v1195
      %v1340 = vpack.c.b16 %v1269, %v1268
      %v1341 = vpack.c.b16 %v1271, %v1270
      %v1342 = vpack.c.b16 %v1273, %v1272
      %v1343 = vpack.c.b16 %v1275, %v1274
      %v1344 = vpack.c.b16 %v1277, %v1276
      %v1345 = vpack.c.b16 %v1279, %v1278
      %v1346 = vpack.c.b16 %v1281, %v1280
      %v1347 = vpack.c.b16 %v1283, %v1282
      %v1348 = vpack.c.b16 %v1285, %v1284
      %v1349 = vpack.c.b16 %v1287, %v1286
      %v1350 = vpack.c.b16 %v1289, %v1288
      %v1351 = vpack.c.b16 %v1291, %v1290
      %v1352 = vpack.c.b16 %v1293, %v1292
      %v1353 = vpack.c.b16 %v1295, %v1294
      %v1354 = vpack.c.b16 %v1297, %v1296
      %v1355 = vpack.c.b16 %v1299, %v1298
      %v1356 = vpack.c.b16 %v1301, %v1300
      %v1357 = vpack.c.b16 %v1303, %v1302
      %v1358 = vpack.c.b16 %v1305, %v1304
      %v1359 = vpack.c.b16 %v1307, %v1306
      %v1360 = vpack.c.b16 %v1309, %v1308
      %v1361 = vpack.c.b16 %v1311, %v1310
      %v1362 = vpack.c.b16 %v1313, %v1312
      %v1363 = vpack.c.b16 %v1315, %v1314
      %v1364 = vpack.c.b16 %v1317, %v1316
      %v1365 = vpack.c.b16 %v1319, %v1318
      %v1366 = vpack.c.b16 %v1321, %v1320
      %v1367 = vpack.c.b16 %v1323, %v1322
      %v1368 = vpack.c.b16 %v1325, %v1324
      %v1369 = vpack.c.b16 %v1327, %v1326
      %v1370 = vpack.c.b16 %v1329, %v1328
      %v1371 = vpack.c.b16 %v1331, %v1330
      %v1372 = vpack.c.b16 %v1333, %v1332
      %v1373 = vpack.c.b16 %v1335, %v1334
      %v1374 = vpack.c.b16 %v1337, %v1336
      %v1375 = vpack.c.b16 %v1339, %v1338
      %v1413 = vsel %vm1011, %v989, 0
      %v1416 = vsel %vm1011, %v992, 0
      %v1419 = vsel %vm1011, %v995, 0
      %v1422 = vsel %vm1011, %v998, 0
      %v1425 = vsel %vm1011, %v1001, 0
      %v1428 = vsel %vm1011, %v1004, 0
      %v1431 = vsel %vm1011, %v1007, 0
      %v1434 = vsel %vm1011, %v1010, 0
      %1436 = vmatpush.bf16.msra.mxu0 %v1347
      %1437 = vmatpush.bf16.msra.mxu0 %v1346
      %1438 = vmatpush.bf16.msra.mxu0 %v1345
      %1439 = vmatpush.bf16.msra.mxu0 %v1344
      %1440 = vmatpush.bf16.msra.mxu0 %v1343
      %1441 = vmatpush.bf16.msra.mxu0 %v1342
      %1442 = vmatpush.bf16.msra.mxu0 %v1341
      %1443 = vmatpush.bf16.msra.mxu0 %v1340
      %1444 = vmatmul.bf16.gmra.mxu0 %v1013
      %v1445 = vpop.f32.mrf.mxu0
      %v1446 = vadd.f32 0.0, %v1445
      %v1447 = vpop.f32.mrf.mxu0
      %v1448 = vadd.f32 0.0, %v1447
      %1449 = vmatmul.bf16.gmra.mxu0 %v1016
      %v1450 = vpop.f32.mrf.mxu0
      %v1451 = vadd.f32 0.0, %v1450
      %v1452 = vpop.f32.mrf.mxu0
      %v1453 = vadd.f32 0.0, %v1452
      %1454 = vmatmul.bf16.gmra.mxu0 %v1019
      %v1455 = vpop.f32.mrf.mxu0
      %v1456 = vadd.f32 0.0, %v1455
      %v1457 = vpop.f32.mrf.mxu0
      %v1458 = vadd.f32 0.0, %v1457
      %1459 = vmatmul.bf16.gmra.mxu0 %v1022
      %v1460 = vpop.f32.mrf.mxu0
      %v1461 = vadd.f32 0.0, %v1460
      %v1462 = vpop.f32.mrf.mxu0
      %v1463 = vadd.f32 0.0, %v1462
      %1464 = vmatmul.bf16.gmra.mxu0 %v1025
      %v1465 = vpop.f32.mrf.mxu0
      %v1466 = vadd.f32 0.0, %v1465
      %v1467 = vpop.f32.mrf.mxu0
      %v1468 = vadd.f32 0.0, %v1467
      %1469 = vmatmul.bf16.gmra.mxu0 %v1028
      %v1470 = vpop.f32.mrf.mxu0
      %v1471 = vadd.f32 0.0, %v1470
      %v1472 = vpop.f32.mrf.mxu0
      %v1473 = vadd.f32 0.0, %v1472
      %1474 = vmatmul.bf16.gmra.mxu0 %v1031
      %v1475 = vpop.f32.mrf.mxu0
      %v1476 = vadd.f32 0.0, %v1475
      %v1477 = vpop.f32.mrf.mxu0
      %v1478 = vadd.f32 0.0, %v1477
      %1479 = vmatmul.bf16.gmra.mxu0 %v1034
      %v1480 = vpop.f32.mrf.mxu0
      %v1481 = vadd.f32 0.0, %v1480
      %v1482 = vpop.f32.mrf.mxu0
      %v1483 = vadd.f32 0.0, %v1482
      %1484 = vdwg.mxu0
      %1485 = vmatpush.bf16.msra.mxu0 %v1355
      %1486 = vmatpush.bf16.msra.mxu0 %v1354
      %1487 = vmatpush.bf16.msra.mxu0 %v1353
      %1488 = vmatpush.bf16.msra.mxu0 %v1352
      %1489 = vmatpush.bf16.msra.mxu0 %v1351
      %1490 = vmatpush.bf16.msra.mxu0 %v1350
      %1491 = vmatpush.bf16.msra.mxu0 %v1349
      %1492 = vmatpush.bf16.msra.mxu0 %v1348
      %1493 = vmatmul.bf16.gmra.mxu0 %v1038
      %v1494 = vpop.f32.mrf.mxu0
      %v1495 = vadd.f32 %v1446, %v1494
      %v1496 = vpop.f32.mrf.mxu0
      %v1497 = vadd.f32 %v1448, %v1496
      %1498 = vmatmul.bf16.gmra.mxu0 %v1042
      %v1499 = vpop.f32.mrf.mxu0
      %v1500 = vadd.f32 %v1451, %v1499
      %v1501 = vpop.f32.mrf.mxu0
      %v1502 = vadd.f32 %v1453, %v1501
      %1503 = vmatmul.bf16.gmra.mxu0 %v1046
      %v1504 = vpop.f32.mrf.mxu0
      %v1505 = vadd.f32 %v1456, %v1504
      %v1506 = vpop.f32.mrf.mxu0
      %v1507 = vadd.f32 %v1458, %v1506
      %1508 = vmatmul.bf16.gmra.mxu0 %v1050
      %v1509 = vpop.f32.mrf.mxu0
      %v1510 = vadd.f32 %v1461, %v1509
      %v1511 = vpop.f32.mrf.mxu0
      %v1512 = vadd.f32 %v1463, %v1511
      %1513 = vmatmul.bf16.gmra.mxu0 %v1054
      %v1514 = vpop.f32.mrf.mxu0
      %v1515 = vadd.f32 %v1466, %v1514
      %v1516 = vpop.f32.mrf.mxu0
      %v1517 = vadd.f32 %v1468, %v1516
      %1518 = vmatmul.bf16.gmra.mxu0 %v1058
      %v1519 = vpop.f32.mrf.mxu0
      %v1520 = vadd.f32 %v1471, %v1519
      %v1521 = vpop.f32.mrf.mxu0
      %v1522 = vadd.f32 %v1473, %v1521
      %1523 = vmatmul.bf16.gmra.mxu0 %v1062
      %v1524 = vpop.f32.mrf.mxu0
      %v1525 = vadd.f32 %v1476, %v1524
      %v1526 = vpop.f32.mrf.mxu0
      %v1527 = vadd.f32 %v1478, %v1526
      %1528 = vmatmul.bf16.gmra.mxu0 %v1066
      %v1529 = vpop.f32.mrf.mxu0
      %v1530 = vadd.f32 %v1481, %v1529
      %v1531 = vpop.f32.mrf.mxu0
      %v1532 = vadd.f32 %v1483, %v1531
      %1533 = vdwg.mxu0
      %1534 = vmatpush.bf16.msra.mxu0 %v1363
      %1535 = vmatpush.bf16.msra.mxu0 %v1362
      %1536 = vmatpush.bf16.msra.mxu0 %v1361
      %1537 = vmatpush.bf16.msra.mxu0 %v1360
      %1538 = vmatpush.bf16.msra.mxu0 %v1359
      %1539 = vmatpush.bf16.msra.mxu0 %v1358
      %1540 = vmatpush.bf16.msra.mxu0 %v1357
      %1541 = vmatpush.bf16.msra.mxu0 %v1356
      %1542 = vmatmul.bf16.gmra.mxu0 %v1070
      %v1543 = vpop.f32.mrf.mxu0
      %v1544 = vadd.f32 %v1495, %v1543
      %v1545 = vpop.f32.mrf.mxu0
      %v1546 = vadd.f32 %v1497, %v1545
      %1547 = vmatmul.bf16.gmra.mxu0 %v1074
      %v1548 = vpop.f32.mrf.mxu0
      %v1549 = vadd.f32 %v1500, %v1548
      %v1550 = vpop.f32.mrf.mxu0
      %v1551 = vadd.f32 %v1502, %v1550
      %1552 = vmatmul.bf16.gmra.mxu0 %v1078
      %v1553 = vpop.f32.mrf.mxu0
      %v1554 = vadd.f32 %v1505, %v1553
      %v1555 = vpop.f32.mrf.mxu0
      %v1556 = vadd.f32 %v1507, %v1555
      %1557 = vmatmul.bf16.gmra.mxu0 %v1082
      %v1558 = vpop.f32.mrf.mxu0
      %v1559 = vadd.f32 %v1510, %v1558
      %v1560 = vpop.f32.mrf.mxu0
      %v1561 = vadd.f32 %v1512, %v1560
      %1562 = vmatmul.bf16.gmra.mxu0 %v1086
      %v1563 = vpop.f32.mrf.mxu0
      %v1564 = vadd.f32 %v1515, %v1563
      %v1565 = vpop.f32.mrf.mxu0
      %v1566 = vadd.f32 %v1517, %v1565
      %1567 = vmatmul.bf16.gmra.mxu0 %v1090
      %v1568 = vpop.f32.mrf.mxu0
      %v1569 = vadd.f32 %v1520, %v1568
      %v1570 = vpop.f32.mrf.mxu0
      %v1571 = vadd.f32 %v1522, %v1570
      %1572 = vmatmul.bf16.gmra.mxu0 %v1094
      %v1573 = vpop.f32.mrf.mxu0
      %v1574 = vadd.f32 %v1525, %v1573
      %v1575 = vpop.f32.mrf.mxu0
      %v1576 = vadd.f32 %v1527, %v1575
      %1577 = vmatmul.bf16.gmra.mxu0 %v1098
      %v1578 = vpop.f32.mrf.mxu0
      %v1579 = vadd.f32 %v1530, %v1578
      %v1580 = vpop.f32.mrf.mxu0
      %v1581 = vadd.f32 %v1532, %v1580
      %1582 = vdwg.mxu0
      %1583 = vmatpush.bf16.msra.mxu0 %v1371
      %1584 = vmatpush.bf16.msra.mxu0 %v1370
      %1585 = vmatpush.bf16.msra.mxu0 %v1369
      %1586 = vmatpush.bf16.msra.mxu0 %v1368
      %1587 = vmatpush.bf16.msra.mxu0 %v1367
      %1588 = vmatpush.bf16.msra.mxu0 %v1366
      %1589 = vmatpush.bf16.msra.mxu0 %v1365
      %1590 = vmatpush.bf16.msra.mxu0 %v1364
      %1591 = vmatmul.bf16.gmra.mxu0 %v1101
      %v1592 = vpop.f32.mrf.mxu0
      %v1593 = vadd.f32 %v1544, %v1592
      %v1594 = vpop.f32.mrf.mxu0
      %v1595 = vadd.f32 %v1546, %v1594
      %1596 = vmatmul.bf16.gmra.mxu0 %v1104
      %v1597 = vpop.f32.mrf.mxu0
      %v1598 = vadd.f32 %v1549, %v1597
      %v1599 = vpop.f32.mrf.mxu0
      %v1600 = vadd.f32 %v1551, %v1599
      %1601 = vmatmul.bf16.gmra.mxu0 %v1107
      %v1602 = vpop.f32.mrf.mxu0
      %v1603 = vadd.f32 %v1554, %v1602
      %v1604 = vpop.f32.mrf.mxu0
      %v1605 = vadd.f32 %v1556, %v1604
      %1606 = vmatmul.bf16.gmra.mxu0 %v1110
      %v1607 = vpop.f32.mrf.mxu0
      %v1608 = vadd.f32 %v1559, %v1607
      %v1609 = vpop.f32.mrf.mxu0
      %v1610 = vadd.f32 %v1561, %v1609
      %1611 = vmatmul.bf16.gmra.mxu0 %v1113
      %v1612 = vpop.f32.mrf.mxu0
      %v1613 = vadd.f32 %v1564, %v1612
      %v1614 = vpop.f32.mrf.mxu0
      %v1615 = vadd.f32 %v1566, %v1614
      %1616 = vmatmul.bf16.gmra.mxu0 %v1116
      %v1617 = vpop.f32.mrf.mxu0
      %v1618 = vadd.f32 %v1569, %v1617
      %v1619 = vpop.f32.mrf.mxu0
      %v1620 = vadd.f32 %v1571, %v1619
      %1621 = vmatmul.bf16.gmra.mxu0 %v1119
      %v1622 = vpop.f32.mrf.mxu0
      %v1623 = vadd.f32 %v1574, %v1622
      %v1624 = vpop.f32.mrf.mxu0
      %v1625 = vadd.f32 %v1576, %v1624
      %1626 = vmatmul.bf16.gmra.mxu0 %v1122
      %v1627 = vpop.f32.mrf.mxu0
      %v1628 = vadd.f32 %v1579, %v1627
      %v1629 = vpop.f32.mrf.mxu0
      %v1630 = vadd.f32 %v1581, %v1629
      %1631 = vdwg.mxu0
      %1632 = vmatpush.bf16.msra.mxu0 0
      %1633 = vmatpush.bf16.msra.mxu0 0
      %1634 = vmatpush.bf16.msra.mxu0 0
      %1635 = vmatpush.bf16.msra.mxu0 0
      %1636 = vmatpush.bf16.msra.mxu0 %v1375
      %1637 = vmatpush.bf16.msra.mxu0 %v1374
      %1638 = vmatpush.bf16.msra.mxu0 %v1373
      %1639 = vmatpush.bf16.msra.mxu0 %v1372
      %1640 = vmatmul.bf16.gmra.mxu0 %v1413
      %v1641 = vpop.f32.mrf.mxu0
      %v1642 = vadd.f32 %v1593, %v1641
      %v1643 = vpop.f32.mrf.mxu0
      %v1644 = vadd.f32 %v1595, %v1643
      %1645 = vmatmul.bf16.gmra.mxu0 %v1416
      %v1646 = vpop.f32.mrf.mxu0
      %v1647 = vadd.f32 %v1598, %v1646
      %v1648 = vpop.f32.mrf.mxu0
      %v1649 = vadd.f32 %v1600, %v1648
      %1650 = vmatmul.bf16.gmra.mxu0 %v1419
      %v1651 = vpop.f32.mrf.mxu0
      %v1652 = vadd.f32 %v1603, %v1651
      %v1653 = vpop.f32.mrf.mxu0
      %v1654 = vadd.f32 %v1605, %v1653
      %1655 = vmatmul.bf16.gmra.mxu0 %v1422
      %v1656 = vpop.f32.mrf.mxu0
      %v1657 = vadd.f32 %v1608, %v1656
      %v1658 = vpop.f32.mrf.mxu0
      %v1659 = vadd.f32 %v1610, %v1658
      %1660 = vmatmul.bf16.gmra.mxu0 %v1425
      %v1661 = vpop.f32.mrf.mxu0
      %v1662 = vadd.f32 %v1613, %v1661
      %v1663 = vpop.f32.mrf.mxu0
      %v1664 = vadd.f32 %v1615, %v1663
      %1665 = vmatmul.bf16.gmra.mxu0 %v1428
      %v1666 = vpop.f32.mrf.mxu0
      %v1667 = vadd.f32 %v1618, %v1666
      %v1668 = vpop.f32.mrf.mxu0
      %v1669 = vadd.f32 %v1620, %v1668
      %1670 = vmatmul.bf16.gmra.mxu0 %v1431
      %v1671 = vpop.f32.mrf.mxu0
      %v1672 = vadd.f32 %v1623, %v1671
      %v1673 = vpop.f32.mrf.mxu0
      %v1674 = vadd.f32 %v1625, %v1673
      %1675 = vmatmul.bf16.gmra.mxu0 %v1434
      %v1676 = vpop.f32.mrf.mxu0
      %v1677 = vadd.f32 %v1628, %v1676
      %v1678 = vpop.f32.mrf.mxu0
      %v1679 = vadd.f32 %v1630, %v1678
      %1680 = vdwg.mxu0
      %1681 = vst.msk [vmem:[%s318] sm:$0xff] %vm1011, %v1642
      %1682 = vst.msk [vmem:[%s318 + $0x8] sm:$0xff] %vm1011, %v1644
      %1683 = vst.msk [vmem:[%s318 + $0x10] sm:$0xff] %vm1011, %v1647
      %1684 = vst.msk [vmem:[%s318 + $0x18] sm:$0xff] %vm1011, %v1649
      %1685 = vst.msk [vmem:[%s318 + $0x20] sm:$0xff] %vm1011, %v1652
      %1686 = vst.msk [vmem:[%s318 + $0x28] sm:$0xff] %vm1011, %v1654
      %1687 = vst.msk [vmem:[%s318 + $0x30] sm:$0xff] %vm1011, %v1657
      %1688 = vst.msk [vmem:[%s318 + $0x38] sm:$0xff] %vm1011, %v1659
      %1689 = vst.msk [vmem:[%s318 + $0x40] sm:$0xff] %vm1011, %v1662
      %1690 = vst.msk [vmem:[%s318 + $0x48] sm:$0xff] %vm1011, %v1664
      %1691 = vst.msk [vmem:[%s318 + $0x50] sm:$0xff] %vm1011, %v1667
      %1692 = vst.msk [vmem:[%s318 + $0x58] sm:$0xff] %vm1011, %v1669
      %1693 = vst.msk [vmem:[%s318 + $0x60] sm:$0xff] %vm1011, %v1672
      %1694 = vst.msk [vmem:[%s318 + $0x68] sm:$0xff] %vm1011, %v1674
      %1695 = vst.msk [vmem:[%s318 + $0x70] sm:$0xff] %vm1011, %v1677
      %1696 = vst.msk [vmem:[%s318 + $0x78] sm:$0xff] %vm1011, %v1679
      %s1697 = smul.u32 8, %s20
      %p1698 = scmp.lt.s32.totalorder %s19, 1
      %s1699 = scalar_select %p1698, %s19, 1
      %p1700 = scmp.lt.s32.totalorder %s1697, 15
      %s1701 = scalar_select %p1700, %s1697, 15
      %s1702 = smul.addr %s1701, 2
      %s1703 = smul.addr %s1699, 32
      %s1704 = sadd.s32 %s1702, %s1703
      %s1705 = smul.addr %s1704, 8
      %s1706 = scalar_lea.vmem %s4, %s1705
      // Predicated region
      $region37: #{unet_encoder_forward.9} parent=35 // pred_check
        %p1707 = pneg %p152
      $region38: #{unet_encoder_forward.9} parent=35 // pred_check_branch
        %1709 = sbr.rel (%p1707) target = $region40
      $region39: #{unet_encoder_forward.9} parent=35 // pred_region
        %s1710 = smul.u32 8, %s20
      $region40: #{unet_encoder_forward.9} parent=35 // pred_fallthru
        _
    $region36: #{unet_encoder_forward.9} parent=5 // pred_fallthru
      _
    %p1711 = scmp.le.s32.totalorder 2, %s10
    // Predicated region
    $region41: #{unet_encoder_forward.9} parent=5 // pred_check
      %p1712 = pneg %p1711
    $region42: #{unet_encoder_forward.9} parent=5 // pred_check_branch
      %1714 = sbr.rel (%p1712) target = $region44
    $region43: #{unet_encoder_forward.9} parent=5 // pred_region
      %s1715 = ssub.s32 %s10, 2
      // Predicated region
      $region45: #{unet_encoder_forward.9} parent=43 // pred_check
        %p1716 = pneg %p158
      $region46: #{unet_encoder_forward.9} parent=43 // pred_check_branch
        %1718 = sbr.rel (%p1716) target = $region48
      $region47: #{unet_encoder_forward.9} parent=43 // pred_region
        %s1719 = smul.u32 8, %s22
        %p1720 = scmp.lt.s32.totalorder %s21, 1
        %s1721 = scalar_select %p1720, %s21, 1
        %p1722 = scmp.lt.s32.totalorder %s1719, 15
        %s1723 = scalar_select %p1722, %s1719, 15
        %s1724 = smul.addr %s1723, 2
        %s1725 = smul.addr %s1721, 32
        %s1726 = sadd.s32 %s1724, %s1725
        %s1727 = smul.addr %s1726, 8
        %s1728 = scalar_lea.vmem %s4, %s1727
      $region48: #{unet_encoder_forward.9} parent=43 // pred_fallthru
        _
    $region44: #{unet_encoder_forward.9} parent=5 // pred_fallthru
      _
  $region6: #{unet_encoder_forward.9} parent=0 // loop_footer
    %s14 = sadd.s32 1, %s10
  $region7: #{unet_encoder_forward.9} parent=0 // loop_footer_branch
    %9 = sbr.rel target = $region3
  $region8: #{unet_encoder_forward.9} parent=0 // loop_exit
    _

</llo_original>
